<compile_context>
chip_gen: v7x
topology: tpu7x:2x2x1
jax: 0.10.0
libtpu: 0.0.40
codegen_flags: <defaults>
</compile_context>

<pallas_src>
import functools
import math

import jax
import jax.numpy as jnp
from jax.experimental import pallas as pl
from jax.experimental.pallas import tpu as pltpu


def _activation(x, relu_type):
    if relu_type == "ReLU":
        return jnp.maximum(x, 0.0)
    if relu_type == "LeakyReLU":
        return jnp.where(x > 0, x, 0.01 * x)
    if relu_type == "ELU":
        return jnp.where(x > 0, x, jnp.exp(x) - 1.0)
    # TODO(synk): other torch.nn activation types (PReLU, SELU, ...) not implemented.
    raise NotImplementedError(f"relu_type={relu_type}")


def _round_up(x, m):
    return (x + m - 1) // m * m


def _basic_block_kernel(x_ref, w1_ref, b1_ref, mask_ref, w2_ref, b2_ref,
                        o_ref, y1_ref, *, K, dil, Wp, L2p, Lop, relu_type):
    """Fused conv1 -> act -> conv2 -> act for one batch element.

    x_ref    : (CinP, Lxp)          flattened, spatially padded, front-shifted input
    w1_ref   : (K*K, CmidP, CinP)   conv1 taps
    b1_ref   : (CmidP, 1)
    mask_ref : (1, L2p)             1.0 on valid conv1-output positions, 0.0 elsewhere
    w2_ref   : (K*K, CoutP, CmidP)  conv2 taps
    b2_ref   : (CoutP, 1)
    o_ref    : (CoutP, Lop)         conv2 output on the padded-width flat grid
    y1_ref   : (CmidP, L2p)         VMEM scratch: padded conv1 output (conv2 input)
    """
    cmid_p = y1_ref.shape[0]
    cout_p = o_ref.shape[0]

    # ---- conv1: K*K shifted-slice matmuls on the flattened padded grid ----
    acc1 = jnp.zeros((cmid_p, L2p), jnp.float32)
    for kh in range(K):
        for kw in range(K):
            s = kh * dil * Wp + kw * dil
            acc1 = acc1 + jnp.dot(
                w1_ref[kh * K + kw].astype(jnp.float32),   # (CmidP, CinP)
                x_ref[:, s:s + L2p].astype(jnp.float32),   # (CinP, L2p)
                preferred_element_type=jnp.float32)
    y1 = _activation(acc1 + b1_ref[...].astype(jnp.float32), relu_type)
    # Zero the wrap/halo/lane-padding garbage: it then acts as conv2's zero padding.
    y1_ref[...] = y1 * mask_ref[...]

    # ---- conv2: same trick, reading the padded intermediate from VMEM ----
    acc2 = jnp.zeros((cout_p, Lop), jnp.float32)
    for kh in range(K):
        for kw in range(K):
            s = kh * dil * Wp + kw * dil
            acc2 = acc2 + jnp.dot(
                w2_ref[kh * K + kw].astype(jnp.float32),   # (CoutP, CmidP)
                y1_ref[:, s:s + Lop],                      # (CmidP, Lop)
                preferred_element_type=jnp.float32)
    y2 = _activation(acc2 + b2_ref[...].astype(jnp.float32), relu_type)
    o_ref[...] = y2.astype(o_ref.dtype)


def basic_block_forward(x, w1, b1, w2, b2, *, kernel_size, dilation=1,
                        relu_type="ReLU"):
    """Pallas TPU forward of BasicBlock (dims=2): conv1 -> act -> conv2 -> act.

    x : (N, Cin, H, W)  NCHW, like the PyTorch module
    w1: (Cout, Cin, K, K),  b1: (Cout,)
    w2: (Cout, Cout, K, K), b2: (Cout,)
    """
    # TODO(synk): dims=3 (Conv3d) branch of the `conv` helper is not implemented.
    N, Cin, H, W = x.shape
    Cout = w1.shape[0]
    K, d = kernel_size, dilation
    assert w1.shape == (Cout, Cin, K, K) and b1.shape == (Cout,)
    assert w2.shape == (Cout, Cout, K, K) and b2.shape == (Cout,)

    # Padding exactly as the PyTorch `conv` helper with stride=1.
    pad = (d * (K - 1) + 2 - 1) // 2
    # 'Same'-size convs (odd K, or even K with even dilation) keep both convs
    # on a single flattened padded grid.
    assert (d * (K - 1)) % 2 == 0, "kernel supports 'same'-size convs only"

    Hp, Wp = H + 2 * pad, W + 2 * pad
    q = pad * Wp + pad                       # flat offset of the padded interior
    smax = (K - 1) * d * (Wp + 1)            # largest tap shift
    assert smax == 2 * q

    Lo = H * Wp                              # valid flat length of conv2's output grid
    Lop = _round_up(Lo, 128)                 # lane-dense (unmasked-store) output width
    L2p = _round_up(smax + Lop, 128)         # lane-dense conv1-output / conv2-input width
    Lxp = _round_up(smax + L2p, 128)         # lane-dense conv1-input width
    assert smax + Lo == Hp * Wp + (K - 1) * d  # valid region fits inside L2p

    # Pad channel dims to the f32 sublane multiple for clean MXU / store layouts.
    CinP = _round_up(Cin, 8)
    CmidP = _round_up(Cout, 8)
    CoutP = _round_up(Cout, 8)

    # ---- wrapper-side layout plumbing (cheap XLA ops, no compute hoisting) ----
    f32 = jnp.float32
    xp = jnp.pad(x, ((0, 0), (0, CinP - Cin), (pad, pad), (pad, pad)))
    xf = xp.reshape(N, CinP, Hp * Wp)
    # Front-shift by q so conv1's output lands already in conv2's padded layout;
    # pad tail with zeros up to the lane-aligned width Lxp.
    xf = jnp.pad(xf, ((0, 0), (0, 0), (q, Lxp - q - Hp * Wp)))

    # Weights as (K*K, out, in) so the kernel grabs one (out, in) tap at a time.
    w1r = jnp.pad(jnp.transpose(w1, (2, 3, 0, 1)),
                  ((0, 0), (0, 0), (0, CmidP - Cout), (0, CinP - Cin)))
    w1r = w1r.reshape(K * K, CmidP, CinP).astype(f32)
    w2r = jnp.pad(jnp.transpose(w2, (2, 3, 0, 1)),
                  ((0, 0), (0, 0), (0, CoutP - Cout), (0, CmidP - Cout)))
    w2r = w2r.reshape(K * K, CoutP, CmidP).astype(f32)
    b1r = jnp.pad(b1, (0, CmidP - Cout)).reshape(CmidP, 1).astype(f32)
    b2r = jnp.pad(b2, (0, CoutP - Cout)).reshape(CoutP, 1).astype(f32)

    # Validity mask for conv1 outputs on the padded flat grid (halo / lane pad -> 0).
    idx = jnp.arange(L2p, dtype=jnp.int32)
    row, col = idx // Wp, idx % Wp
    mask = ((idx < Hp * Wp) & (row >= pad) & (row < pad + H)
            & (col >= pad) & (col < pad + W))
    mask = mask.astype(f32).reshape(1, L2p)

    kernel = functools.partial(_basic_block_kernel, K=K, dil=d, Wp=Wp,
                               L2p=L2p, Lop=Lop, relu_type=relu_type)

    # TODO(synk): for very large H*W, add a spatial grid axis with halo handling
    # (currently one whole padded image per batch element lives in VMEM).
    out_flat = pl.pallas_call(
        kernel,
        out_shape=jax.ShapeDtypeStruct((N, CoutP, Lop), x.dtype),
        grid_spec=pltpu.PrefetchScalarGridSpec(
            num_scalar_prefetch=0,
            grid=(N,),
            in_specs=[
                pl.BlockSpec((None, CinP, Lxp), lambda n: (n, 0, 0)),
                pl.BlockSpec((K * K, CmidP, CinP), lambda n: (0, 0, 0)),
                pl.BlockSpec((CmidP, 1), lambda n: (0, 0)),
                pl.BlockSpec((1, L2p), lambda n: (0, 0)),
                pl.BlockSpec((K * K, CoutP, CmidP), lambda n: (0, 0, 0)),
                pl.BlockSpec((CoutP, 1), lambda n: (0, 0)),
            ],
            out_specs=pl.BlockSpec((None, CoutP, Lop), lambda n: (n, 0, 0)),
            scratch_shapes=[pltpu.VMEM((CmidP, L2p), jnp.float32)],
        ),
        compiler_params=pltpu.CompilerParams(
            dimension_semantics=("parallel",)),
    )(xf, w1r, b1r, mask, w2r, b2r)

    # Drop channel / lane padding, restore NCHW, crop padded-width halo columns.
    out = out_flat[:, :Cout, :Lo].reshape(N, Cout, H, Wp)[:, :, :, :W]
    return out


def _reference(x, w1, b1, w2, b2, *, kernel_size, dilation=1, relu_type="ReLU"):
    """Pure-JAX reference mirroring the PyTorch BasicBlock.forward."""
    K, d = kernel_size, dilation
    pad = (d * (K - 1) + 2 - 1) // 2
    dn = jax.lax.conv_dimension_numbers(x.shape, w1.shape,
                                        ("NCHW", "OIHW", "NCHW"))

    def c(inp, w, b):
        y = jax.lax.conv_general_dilated(
            inp, w, window_strides=(1, 1), padding=[(pad, pad), (pad, pad)],
            rhs_dilation=(d, d), dimension_numbers=dn,
            precision=jax.lax.Precision.HIGHEST)
        return y + b.reshape(1, -1, 1, 1)

    y = _activation(c(x, w1, b1), relu_type)
    return _activation(c(y, w2, b2), relu_type)


if __name__ == "__main__":
    key = jax.random.PRNGKey(0)
    kx, kw1, kb1, kw2, kb2 = jax.random.split(key, 5)

    # BasicBlock(dims=2, inplanes=4, outplanes=8, kernel_size=3, stride=1,
    #            dilation=1, bias=True, relu_type="ReLU")
    N, Cin, Cout, H, W, K, d = 2, 4, 8, 16, 16, 3, 1

    x = jax.random.normal(kx, (N, Cin, H, W), dtype=jnp.float32)
    w1 = jax.random.normal(kw1, (Cout, Cin, K, K), jnp.float32) / math.sqrt(Cin * K * K)
    b1 = jax.random.normal(kb1, (Cout,), jnp.float32) * 0.1
    w2 = jax.random.normal(kw2, (Cout, Cout, K, K), jnp.float32) / math.sqrt(Cout * K * K)
    b2 = jax.random.normal(kb2, (Cout,), jnp.float32) * 0.1

    out = basic_block_forward(x, w1, b1, w2, b2, kernel_size=K, dilation=d,
                              relu_type="ReLU")
    out = jax.block_until_ready(out)

    ref = _reference(x, w1, b1, w2, b2, kernel_size=K, dilation=d,
                     relu_type="ReLU")
    assert out.shape == ref.shape == (N, Cout, H, W), (out.shape, ref.shape)
    err = float(jnp.max(jnp.abs(out - ref)))
    assert err < 1e-2, f"max abs error {err}"

    print("KERNEL_OK")
</pallas_src>

<mosaic_0001>
module attributes {stable_mosaic.version = 11 : i64} {
  func.func @_basic_block_kernel(%arg0: i32, %arg1: memref<1x8x640xf32, #tpu.memory_space<vmem>>, %arg2: memref<9x8x8xf32, #tpu.memory_space<vmem>>, %arg3: memref<8x1xf32, #tpu.memory_space<vmem>>, %arg4: memref<1x512xf32, #tpu.memory_space<vmem>>, %arg5: memref<9x8x8xf32, #tpu.memory_space<vmem>>, %arg6: memref<8x1xf32, #tpu.memory_space<vmem>>, %arg7: memref<1x8x384xf32, #tpu.memory_space<vmem>>, %arg8: memref<8x512xf32, #tpu.memory_space<vmem>>) attributes {dimension_semantics = [#tpu.dimension_semantics<parallel>], iteration_bounds = array<i64: 2>, scalar_prefetch = 0 : i64, scratch_operands = 1 : i64, tpu.core_type = #tpu.core_type<tc>, window_params = [{transform_indices = @transform_0, window_bounds = array<i64: 1, 8, 640>}, {pipeline_mode = #tpu.pipeline_mode<synchronous>, transform_indices = @transform_1, window_bounds = array<i64: 9, 8, 8>}, {pipeline_mode = #tpu.pipeline_mode<synchronous>, transform_indices = @transform_2, window_bounds = array<i64: 8, 1>}, {pipeline_mode = #tpu.pipeline_mode<synchronous>, transform_indices = @transform_3, window_bounds = array<i64: 1, 512>}, {pipeline_mode = #tpu.pipeline_mode<synchronous>, transform_indices = @transform_4, window_bounds = array<i64: 9, 8, 8>}, {pipeline_mode = #tpu.pipeline_mode<synchronous>, transform_indices = @transform_5, window_bounds = array<i64: 8, 1>}, {transform_indices = @transform_6, window_bounds = array<i64: 1, 8, 384>}]} {
    %cst = arith.constant 0.000000e+00 : f32
    %0 = vector.broadcast %cst : f32 to vector<8x512xf32>
    %c0 = arith.constant 0 : index
    %c0_0 = arith.constant 0 : index
    %c0_1 = arith.constant 0 : index
    %1 = vector.load %arg2[%c0, %c0_0, %c0_1] : memref<9x8x8xf32, #tpu.memory_space<vmem>>, vector<1x8x8xf32>
    %2 = vector.shape_cast %1 : vector<1x8x8xf32> to vector<8x8xf32>
    %c0_2 = arith.constant 0 : index
    %c0_3 = arith.constant 0 : index
    %c0_4 = arith.constant 0 : index
    %3 = vector.load %arg1[%c0_2, %c0_3, %c0_4] : memref<1x8x640xf32, #tpu.memory_space<vmem>>, vector<1x8x512xf32>
    %4 = vector.shape_cast %3 : vector<1x8x512xf32> to vector<8x512xf32>
    %cst_5 = arith.constant dense<0.000000e+00> : vector<8x512xf32>
    %5 = tpu.matmul %2, %4, %cst_5 {dimension_numbers = #tpu.dot_dimension_numbers<[1], [0], [0], [1], [0, 0, 1, 1], [], []>} : vector<8x8xf32>, vector<8x512xf32>, vector<8x512xf32> -> vector<8x512xf32>
    %6 = arith.addf %0, %5 : vector<8x512xf32>
    %c1 = arith.constant 1 : index
    %c0_6 = arith.constant 0 : index
    %c0_7 = arith.constant 0 : index
    %7 = vector.load %arg2[%c1, %c0_6, %c0_7] : memref<9x8x8xf32, #tpu.memory_space<vmem>>, vector<1x8x8xf32>
    %8 = vector.shape_cast %7 : vector<1x8x8xf32> to vector<8x8xf32>
    %c0_8 = arith.constant 0 : index
    %c0_9 = arith.constant 0 : index
    %c1_10 = arith.constant 1 : index
    %9 = vector.load %arg1[%c0_8, %c0_9, %c1_10] : memref<1x8x640xf32, #tpu.memory_space<vmem>>, vector<1x8x512xf32>
    %10 = vector.shape_cast %9 : vector<1x8x512xf32> to vector<8x512xf32>
    %cst_11 = arith.constant dense<0.000000e+00> : vector<8x512xf32>
    %11 = tpu.matmul %8, %10, %cst_11 {dimension_numbers = #tpu.dot_dimension_numbers<[1], [0], [0], [1], [0, 0, 1, 1], [], []>} : vector<8x8xf32>, vector<8x512xf32>, vector<8x512xf32> -> vector<8x512xf32>
    %12 = arith.addf %6, %11 : vector<8x512xf32>
    %c2 = arith.constant 2 : index
    %c0_12 = arith.constant 0 : index
    %c0_13 = arith.constant 0 : index
    %13 = vector.load %arg2[%c2, %c0_12, %c0_13] : memref<9x8x8xf32, #tpu.memory_space<vmem>>, vector<1x8x8xf32>
    %14 = vector.shape_cast %13 : vector<1x8x8xf32> to vector<8x8xf32>
    %c0_14 = arith.constant 0 : index
    %c0_15 = arith.constant 0 : index
    %c2_16 = arith.constant 2 : index
    %15 = vector.load %arg1[%c0_14, %c0_15, %c2_16] : memref<1x8x640xf32, #tpu.memory_space<vmem>>, vector<1x8x512xf32>
    %16 = vector.shape_cast %15 : vector<1x8x512xf32> to vector<8x512xf32>
    %cst_17 = arith.constant dense<0.000000e+00> : vector<8x512xf32>
    %17 = tpu.matmul %14, %16, %cst_17 {dimension_numbers = #tpu.dot_dimension_numbers<[1], [0], [0], [1], [0, 0, 1, 1], [], []>} : vector<8x8xf32>, vector<8x512xf32>, vector<8x512xf32> -> vector<8x512xf32>
    %18 = arith.addf %12, %17 : vector<8x512xf32>
    %c3 = arith.constant 3 : index
    %c0_18 = arith.constant 0 : index
    %c0_19 = arith.constant 0 : index
    %19 = vector.load %arg2[%c3, %c0_18, %c0_19] : memref<9x8x8xf32, #tpu.memory_space<vmem>>, vector<1x8x8xf32>
    %20 = vector.shape_cast %19 : vector<1x8x8xf32> to vector<8x8xf32>
    %c0_20 = arith.constant 0 : index
    %c0_21 = arith.constant 0 : index
    %c18 = arith.constant 18 : index
    %21 = vector.load %arg1[%c0_20, %c0_21, %c18] : memref<1x8x640xf32, #tpu.memory_space<vmem>>, vector<1x8x512xf32>
    %22 = vector.shape_cast %21 : vector<1x8x512xf32> to vector<8x512xf32>
    %cst_22 = arith.constant dense<0.000000e+00> : vector<8x512xf32>
    %23 = tpu.matmul %20, %22, %cst_22 {dimension_numbers = #tpu.dot_dimension_numbers<[1], [0], [0], [1], [0, 0, 1, 1], [], []>} : vector<8x8xf32>, vector<8x512xf32>, vector<8x512xf32> -> vector<8x512xf32>
    %24 = arith.addf %18, %23 : vector<8x512xf32>
    %c4 = arith.constant 4 : index
    %c0_23 = arith.constant 0 : index
    %c0_24 = arith.constant 0 : index
    %25 = vector.load %arg2[%c4, %c0_23, %c0_24] : memref<9x8x8xf32, #tpu.memory_space<vmem>>, vector<1x8x8xf32>
    %26 = vector.shape_cast %25 : vector<1x8x8xf32> to vector<8x8xf32>
    %c0_25 = arith.constant 0 : index
    %c0_26 = arith.constant 0 : index
    %c19 = arith.constant 19 : index
    %27 = vector.load %arg1[%c0_25, %c0_26, %c19] : memref<1x8x640xf32, #tpu.memory_space<vmem>>, vector<1x8x512xf32>
    %28 = vector.shape_cast %27 : vector<1x8x512xf32> to vector<8x512xf32>
    %cst_27 = arith.constant dense<0.000000e+00> : vector<8x512xf32>
    %29 = tpu.matmul %26, %28, %cst_27 {dimension_numbers = #tpu.dot_dimension_numbers<[1], [0], [0], [1], [0, 0, 1, 1], [], []>} : vector<8x8xf32>, vector<8x512xf32>, vector<8x512xf32> -> vector<8x512xf32>
    %30 = arith.addf %24, %29 : vector<8x512xf32>
    %c5 = arith.constant 5 : index
    %c0_28 = arith.constant 0 : index
    %c0_29 = arith.constant 0 : index
    %31 = vector.load %arg2[%c5, %c0_28, %c0_29] : memref<9x8x8xf32, #tpu.memory_space<vmem>>, vector<1x8x8xf32>
    %32 = vector.shape_cast %31 : vector<1x8x8xf32> to vector<8x8xf32>
    %c0_30 = arith.constant 0 : index
    %c0_31 = arith.constant 0 : index
    %c20 = arith.constant 20 : index
    %33 = vector.load %arg1[%c0_30, %c0_31, %c20] : memref<1x8x640xf32, #tpu.memory_space<vmem>>, vector<1x8x512xf32>
    %34 = vector.shape_cast %33 : vector<1x8x512xf32> to vector<8x512xf32>
    %cst_32 = arith.constant dense<0.000000e+00> : vector<8x512xf32>
    %35 = tpu.matmul %32, %34, %cst_32 {dimension_numbers = #tpu.dot_dimension_numbers<[1], [0], [0], [1], [0, 0, 1, 1], [], []>} : vector<8x8xf32>, vector<8x512xf32>, vector<8x512xf32> -> vector<8x512xf32>
    %36 = arith.addf %30, %35 : vector<8x512xf32>
    %c6 = arith.constant 6 : index
    %c0_33 = arith.constant 0 : index
    %c0_34 = arith.constant 0 : index
    %37 = vector.load %arg2[%c6, %c0_33, %c0_34] : memref<9x8x8xf32, #tpu.memory_space<vmem>>, vector<1x8x8xf32>
    %38 = vector.shape_cast %37 : vector<1x8x8xf32> to vector<8x8xf32>
    %c0_35 = arith.constant 0 : index
    %c0_36 = arith.constant 0 : index
    %c36 = arith.constant 36 : index
    %39 = vector.load %arg1[%c0_35, %c0_36, %c36] : memref<1x8x640xf32, #tpu.memory_space<vmem>>, vector<1x8x512xf32>
    %40 = vector.shape_cast %39 : vector<1x8x512xf32> to vector<8x512xf32>
    %cst_37 = arith.constant dense<0.000000e+00> : vector<8x512xf32>
    %41 = tpu.matmul %38, %40, %cst_37 {dimension_numbers = #tpu.dot_dimension_numbers<[1], [0], [0], [1], [0, 0, 1, 1], [], []>} : vector<8x8xf32>, vector<8x512xf32>, vector<8x512xf32> -> vector<8x512xf32>
    %42 = arith.addf %36, %41 : vector<8x512xf32>
    %c7 = arith.constant 7 : index
    %c0_38 = arith.constant 0 : index
    %c0_39 = arith.constant 0 : index
    %43 = vector.load %arg2[%c7, %c0_38, %c0_39] : memref<9x8x8xf32, #tpu.memory_space<vmem>>, vector<1x8x8xf32>
    %44 = vector.shape_cast %43 : vector<1x8x8xf32> to vector<8x8xf32>
    %c0_40 = arith.constant 0 : index
    %c0_41 = arith.constant 0 : index
    %c37 = arith.constant 37 : index
    %45 = vector.load %arg1[%c0_40, %c0_41, %c37] : memref<1x8x640xf32, #tpu.memory_space<vmem>>, vector<1x8x512xf32>
    %46 = vector.shape_cast %45 : vector<1x8x512xf32> to vector<8x512xf32>
    %cst_42 = arith.constant dense<0.000000e+00> : vector<8x512xf32>
    %47 = tpu.matmul %44, %46, %cst_42 {dimension_numbers = #tpu.dot_dimension_numbers<[1], [0], [0], [1], [0, 0, 1, 1], [], []>} : vector<8x8xf32>, vector<8x512xf32>, vector<8x512xf32> -> vector<8x512xf32>
    %48 = arith.addf %42, %47 : vector<8x512xf32>
    %c8 = arith.constant 8 : index
    %c0_43 = arith.constant 0 : index
    %c0_44 = arith.constant 0 : index
    %49 = vector.load %arg2[%c8, %c0_43, %c0_44] : memref<9x8x8xf32, #tpu.memory_space<vmem>>, vector<1x8x8xf32>
    %50 = vector.shape_cast %49 : vector<1x8x8xf32> to vector<8x8xf32>
    %c0_45 = arith.constant 0 : index
    %c0_46 = arith.constant 0 : index
    %c38 = arith.constant 38 : index
    %51 = vector.load %arg1[%c0_45, %c0_46, %c38] : memref<1x8x640xf32, #tpu.memory_space<vmem>>, vector<1x8x512xf32>
    %52 = vector.shape_cast %51 : vector<1x8x512xf32> to vector<8x512xf32>
    %cst_47 = arith.constant dense<0.000000e+00> : vector<8x512xf32>
    %53 = tpu.matmul %50, %52, %cst_47 {dimension_numbers = #tpu.dot_dimension_numbers<[1], [0], [0], [1], [0, 0, 1, 1], [], []>} : vector<8x8xf32>, vector<8x512xf32>, vector<8x512xf32> -> vector<8x512xf32>
    %54 = arith.addf %48, %53 : vector<8x512xf32>
    %c0_48 = arith.constant 0 : index
    %c0_49 = arith.constant 0 : index
    %55 = vector.load %arg3[%c0_48, %c0_49] : memref<8x1xf32, #tpu.memory_space<vmem>>, vector<8x1xf32>
    %56 = vector.broadcast %55 : vector<8x1xf32> to vector<8x512xf32>
    %57 = arith.addf %54, %56 : vector<8x512xf32>
    %cst_50 = arith.constant 0.000000e+00 : f32
    %58 = vector.broadcast %cst_50 : f32 to vector<8x512xf32>
    %59 = arith.maximumf %57, %58 : vector<8x512xf32>
    %c0_51 = arith.constant 0 : index
    %c0_52 = arith.constant 0 : index
    %60 = vector.load %arg4[%c0_51, %c0_52] : memref<1x512xf32, #tpu.memory_space<vmem>>, vector<1x512xf32>
    %61 = vector.broadcast %60 : vector<1x512xf32> to vector<8x512xf32>
    %62 = arith.mulf %59, %61 : vector<8x512xf32>
    %c0_53 = arith.constant 0 : index
    %c0_54 = arith.constant 0 : index
    %63 = vector.load %arg8[%c0_53, %c0_54] : memref<8x512xf32, #tpu.memory_space<vmem>>, vector<8x512xf32>
    tpu.vector_store %arg8[%c0_53, %c0_54], %62 {strides = array<i32>} : memref<8x512xf32, #tpu.memory_space<vmem>>, vector<8x512xf32>,
    %cst_55 = arith.constant 0.000000e+00 : f32
    %64 = vector.broadcast %cst_55 : f32 to vector<8x384xf32>
    %c0_56 = arith.constant 0 : index
    %c0_57 = arith.constant 0 : index
    %c0_58 = arith.constant 0 : index
    %65 = vector.load %arg5[%c0_56, %c0_57, %c0_58] : memref<9x8x8xf32, #tpu.memory_space<vmem>>, vector<1x8x8xf32>
    %66 = vector.shape_cast %65 : vector<1x8x8xf32> to vector<8x8xf32>
    %c0_59 = arith.constant 0 : index
    %c0_60 = arith.constant 0 : index
    %67 = vector.load %arg8[%c0_59, %c0_60] : memref<8x512xf32, #tpu.memory_space<vmem>>, vector<8x384xf32>
    %cst_61 = arith.constant dense<0.000000e+00> : vector<8x384xf32>
    %68 = tpu.matmul %66, %67, %cst_61 {dimension_numbers = #tpu.dot_dimension_numbers<[1], [0], [0], [1], [0, 0, 1, 1], [], []>} : vector<8x8xf32>, vector<8x384xf32>, vector<8x384xf32> -> vector<8x384xf32>
    %69 = arith.addf %64, %68 : vector<8x384xf32>
    %c1_62 = arith.constant 1 : index
    %c0_63 = arith.constant 0 : index
    %c0_64 = arith.constant 0 : index
    %70 = vector.load %arg5[%c1_62, %c0_63, %c0_64] : memref<9x8x8xf32, #tpu.memory_space<vmem>>, vector<1x8x8xf32>
    %71 = vector.shape_cast %70 : vector<1x8x8xf32> to vector<8x8xf32>
    %c0_65 = arith.constant 0 : index
    %c1_66 = arith.constant 1 : index
    %72 = vector.load %arg8[%c0_65, %c1_66] : memref<8x512xf32, #tpu.memory_space<vmem>>, vector<8x384xf32>
    %cst_67 = arith.constant dense<0.000000e+00> : vector<8x384xf32>
    %73 = tpu.matmul %71, %72, %cst_67 {dimension_numbers = #tpu.dot_dimension_numbers<[1], [0], [0], [1], [0, 0, 1, 1], [], []>} : vector<8x8xf32>, vector<8x384xf32>, vector<8x384xf32> -> vector<8x384xf32>
    %74 = arith.addf %69, %73 : vector<8x384xf32>
    %c2_68 = arith.constant 2 : index
    %c0_69 = arith.constant 0 : index
    %c0_70 = arith.constant 0 : index
    %75 = vector.load %arg5[%c2_68, %c0_69, %c0_70] : memref<9x8x8xf32, #tpu.memory_space<vmem>>, vector<1x8x8xf32>
    %76 = vector.shape_cast %75 : vector<1x8x8xf32> to vector<8x8xf32>
    %c0_71 = arith.constant 0 : index
    %c2_72 = arith.constant 2 : index
    %77 = vector.load %arg8[%c0_71, %c2_72] : memref<8x512xf32, #tpu.memory_space<vmem>>, vector<8x384xf32>
    %cst_73 = arith.constant dense<0.000000e+00> : vector<8x384xf32>
    %78 = tpu.matmul %76, %77, %cst_73 {dimension_numbers = #tpu.dot_dimension_numbers<[1], [0], [0], [1], [0, 0, 1, 1], [], []>} : vector<8x8xf32>, vector<8x384xf32>, vector<8x384xf32> -> vector<8x384xf32>
    %79 = arith.addf %74, %78 : vector<8x384xf32>
    %c3_74 = arith.constant 3 : index
    %c0_75 = arith.constant 0 : index
    %c0_76 = arith.constant 0 : index
    %80 = vector.load %arg5[%c3_74, %c0_75, %c0_76] : memref<9x8x8xf32, #tpu.memory_space<vmem>>, vector<1x8x8xf32>
    %81 = vector.shape_cast %80 : vector<1x8x8xf32> to vector<8x8xf32>
    %c0_77 = arith.constant 0 : index
    %c18_78 = arith.constant 18 : index
    %82 = vector.load %arg8[%c0_77, %c18_78] : memref<8x512xf32, #tpu.memory_space<vmem>>, vector<8x384xf32>
    %cst_79 = arith.constant dense<0.000000e+00> : vector<8x384xf32>
    %83 = tpu.matmul %81, %82, %cst_79 {dimension_numbers = #tpu.dot_dimension_numbers<[1], [0], [0], [1], [0, 0, 1, 1], [], []>} : vector<8x8xf32>, vector<8x384xf32>, vector<8x384xf32> -> vector<8x384xf32>
    %84 = arith.addf %79, %83 : vector<8x384xf32>
    %c4_80 = arith.constant 4 : index
    %c0_81 = arith.constant 0 : index
    %c0_82 = arith.constant 0 : index
    %85 = vector.load %arg5[%c4_80, %c0_81, %c0_82] : memref<9x8x8xf32, #tpu.memory_space<vmem>>, vector<1x8x8xf32>
    %86 = vector.shape_cast %85 : vector<1x8x8xf32> to vector<8x8xf32>
    %c0_83 = arith.constant 0 : index
    %c19_84 = arith.constant 19 : index
    %87 = vector.load %arg8[%c0_83, %c19_84] : memref<8x512xf32, #tpu.memory_space<vmem>>, vector<8x384xf32>
    %cst_85 = arith.constant dense<0.000000e+00> : vector<8x384xf32>
    %88 = tpu.matmul %86, %87, %cst_85 {dimension_numbers = #tpu.dot_dimension_numbers<[1], [0], [0], [1], [0, 0, 1, 1], [], []>} : vector<8x8xf32>, vector<8x384xf32>, vector<8x384xf32> -> vector<8x384xf32>
    %89 = arith.addf %84, %88 : vector<8x384xf32>
    %c5_86 = arith.constant 5 : index
    %c0_87 = arith.constant 0 : index
    %c0_88 = arith.constant 0 : index
    %90 = vector.load %arg5[%c5_86, %c0_87, %c0_88] : memref<9x8x8xf32, #tpu.memory_space<vmem>>, vector<1x8x8xf32>
    %91 = vector.shape_cast %90 : vector<1x8x8xf32> to vector<8x8xf32>
    %c0_89 = arith.constant 0 : index
    %c20_90 = arith.constant 20 : index
    %92 = vector.load %arg8[%c0_89, %c20_90] : memref<8x512xf32, #tpu.memory_space<vmem>>, vector<8x384xf32>
    %cst_91 = arith.constant dense<0.000000e+00> : vector<8x384xf32>
    %93 = tpu.matmul %91, %92, %cst_91 {dimension_numbers = #tpu.dot_dimension_numbers<[1], [0], [0], [1], [0, 0, 1, 1], [], []>} : vector<8x8xf32>, vector<8x384xf32>, vector<8x384xf32> -> vector<8x384xf32>
    %94 = arith.addf %89, %93 : vector<8x384xf32>
    %c6_92 = arith.constant 6 : index
    %c0_93 = arith.constant 0 : index
    %c0_94 = arith.constant 0 : index
    %95 = vector.load %arg5[%c6_92, %c0_93, %c0_94] : memref<9x8x8xf32, #tpu.memory_space<vmem>>, vector<1x8x8xf32>
    %96 = vector.shape_cast %95 : vector<1x8x8xf32> to vector<8x8xf32>
    %c0_95 = arith.constant 0 : index
    %c36_96 = arith.constant 36 : index
    %97 = vector.load %arg8[%c0_95, %c36_96] : memref<8x512xf32, #tpu.memory_space<vmem>>, vector<8x384xf32>
    %cst_97 = arith.constant dense<0.000000e+00> : vector<8x384xf32>
    %98 = tpu.matmul %96, %97, %cst_97 {dimension_numbers = #tpu.dot_dimension_numbers<[1], [0], [0], [1], [0, 0, 1, 1], [], []>} : vector<8x8xf32>, vector<8x384xf32>, vector<8x384xf32> -> vector<8x384xf32>
    %99 = arith.addf %94, %98 : vector<8x384xf32>
    %c7_98 = arith.constant 7 : index
    %c0_99 = arith.constant 0 : index
    %c0_100 = arith.constant 0 : index
    %100 = vector.load %arg5[%c7_98, %c0_99, %c0_100] : memref<9x8x8xf32, #tpu.memory_space<vmem>>, vector<1x8x8xf32>
    %101 = vector.shape_cast %100 : vector<1x8x8xf32> to vector<8x8xf32>
    %c0_101 = arith.constant 0 : index
    %c37_102 = arith.constant 37 : index
    %102 = vector.load %arg8[%c0_101, %c37_102] : memref<8x512xf32, #tpu.memory_space<vmem>>, vector<8x384xf32>
    %cst_103 = arith.constant dense<0.000000e+00> : vector<8x384xf32>
    %103 = tpu.matmul %101, %102, %cst_103 {dimension_numbers = #tpu.dot_dimension_numbers<[1], [0], [0], [1], [0, 0, 1, 1], [], []>} : vector<8x8xf32>, vector<8x384xf32>, vector<8x384xf32> -> vector<8x384xf32>
    %104 = arith.addf %99, %103 : vector<8x384xf32>
    %c8_104 = arith.constant 8 : index
    %c0_105 = arith.constant 0 : index
    %c0_106 = arith.constant 0 : index
    %105 = vector.load %arg5[%c8_104, %c0_105, %c0_106] : memref<9x8x8xf32, #tpu.memory_space<vmem>>, vector<1x8x8xf32>
    %106 = vector.shape_cast %105 : vector<1x8x8xf32> to vector<8x8xf32>
    %c0_107 = arith.constant 0 : index
    %c38_108 = arith.constant 38 : index
    %107 = vector.load %arg8[%c0_107, %c38_108] : memref<8x512xf32, #tpu.memory_space<vmem>>, vector<8x384xf32>
    %cst_109 = arith.constant dense<0.000000e+00> : vector<8x384xf32>
    %108 = tpu.matmul %106, %107, %cst_109 {dimension_numbers = #tpu.dot_dimension_numbers<[1], [0], [0], [1], [0, 0, 1, 1], [], []>} : vector<8x8xf32>, vector<8x384xf32>, vector<8x384xf32> -> vector<8x384xf32>
    %109 = arith.addf %104, %108 : vector<8x384xf32>
    %c0_110 = arith.constant 0 : index
    %c0_111 = arith.constant 0 : index
    %110 = vector.load %arg6[%c0_110, %c0_111] : memref<8x1xf32, #tpu.memory_space<vmem>>, vector<8x1xf32>
    %111 = vector.broadcast %110 : vector<8x1xf32> to vector<8x384xf32>
    %112 = arith.addf %109, %111 : vector<8x384xf32>
    %cst_112 = arith.constant 0.000000e+00 : f32
    %113 = vector.broadcast %cst_112 : f32 to vector<8x384xf32>
    %114 = arith.maximumf %112, %113 : vector<8x384xf32>
    %c0_113 = arith.constant 0 : index
    %c0_114 = arith.constant 0 : index
    %c0_115 = arith.constant 0 : index
    %115 = vector.load %arg7[%c0_113, %c0_114, %c0_115] : memref<1x8x384xf32, #tpu.memory_space<vmem>>, vector<1x8x384xf32>
    %116 = vector.shape_cast %115 : vector<1x8x384xf32> to vector<8x384xf32>
    %117 = vector.shape_cast %114 : vector<8x384xf32> to vector<1x8x384xf32>
    tpu.vector_store %arg7[%c0_113, %c0_114, %c0_115], %117 {strides = array<i32>} : memref<1x8x384xf32, #tpu.memory_space<vmem>>, vector<1x8x384xf32>,
    return
  }
  func.func @transform_0(%arg0: i32) -> (i32, i32, i32) {
    %c0_i32 = arith.constant 0 : i32
    %c0_i32_0 = arith.constant 0 : i32
    %c0_i32_1 = arith.constant 0 : i32
    return %arg0, %c0_i32, %c0_i32_0 : i32, i32, i32
  }
  func.func @transform_1(%arg0: i32) -> (i32, i32, i32) {
    %c0_i32 = arith.constant 0 : i32
    %c0_i32_0 = arith.constant 0 : i32
    %c0_i32_1 = arith.constant 0 : i32
    %c0_i32_2 = arith.constant 0 : i32
    return %c0_i32, %c0_i32_0, %c0_i32_1 : i32, i32, i32
  }
  func.func @transform_2(%arg0: i32) -> (i32, i32) {
    %c0_i32 = arith.constant 0 : i32
    %c0_i32_0 = arith.constant 0 : i32
    %c0_i32_1 = arith.constant 0 : i32
    return %c0_i32, %c0_i32_0 : i32, i32
  }
  func.func @transform_3(%arg0: i32) -> (i32, i32) {
    %c0_i32 = arith.constant 0 : i32
    %c0_i32_0 = arith.constant 0 : i32
    %c0_i32_1 = arith.constant 0 : i32
    return %c0_i32, %c0_i32_0 : i32, i32
  }
  func.func @transform_4(%arg0: i32) -> (i32, i32, i32) {
    %c0_i32 = arith.constant 0 : i32
    %c0_i32_0 = arith.constant 0 : i32
    %c0_i32_1 = arith.constant 0 : i32
    %c0_i32_2 = arith.constant 0 : i32
    return %c0_i32, %c0_i32_0, %c0_i32_1 : i32, i32, i32
  }
  func.func @transform_5(%arg0: i32) -> (i32, i32) {
    %c0_i32 = arith.constant 0 : i32
    %c0_i32_0 = arith.constant 0 : i32
    %c0_i32_1 = arith.constant 0 : i32
    return %c0_i32, %c0_i32_0 : i32, i32
  }
  func.func @transform_6(%arg0: i32) -> (i32, i32, i32) {
    %c0_i32 = arith.constant 0 : i32
    %c0_i32_0 = arith.constant 0 : i32
    %c0_i32_1 = arith.constant 0 : i32
    return %arg0, %c0_i32, %c0_i32_0 : i32, i32, i32
  }
}

</mosaic_0001>

<llo_original>
// kernel: tpu_custom_call.1
$region0: #{tpu_custom_call.1}
  #allocation0 [shape = 'u32[]', space=smem, size = 0x4, offset = 0x4, fixed_abs, tag = 'smem constant byte address 0x4 - core index']
  #allocation1 [shape = 'u32[144,128]{1,0:T(1,128)}', space=vmem, size = 0x12000, scoped, tag = 'internal scratch']
  #allocation2 [shape = 'f32[8,512]{1,0:T(8,128)}', space=vmem, size = 0x4000, scoped, tag = 'scratch operand']
  %s0 = inlined_call_operand.vmem [shape: f32[2,8,640], index: 0, kind: input, shape index: {}]
  %s1 = inlined_call_operand.vmem [shape: f32[9,8,8], index: 1, kind: input, shape index: {}]
  %s2 = inlined_call_operand.vmem [shape: f32[8,1], index: 2, kind: input, shape index: {}]
  %s3 = inlined_call_operand.vmem [shape: f32[1,512], index: 3, kind: input, shape index: {}]
  %s4 = inlined_call_operand.vmem [shape: f32[9,8,8], index: 4, kind: input, shape index: {}]
  %s5 = inlined_call_operand.vmem [shape: f32[8,1], index: 5, kind: input, shape index: {}]
  %s6 = inlined_call_operand.hbm [shape: f32[2,8,384], index: 6, kind: output, shape index: {}]
  %s7 = sld [smem:[#allocation0]]
  $region57: #{tpu_custom_call.1} parent=0
    _
  %s9 = ssub.s32 1, %s7
  %s10 = scalar_select 0, %s9, %s7
  $region1: #{tpu_custom_call.1} parent=0
    #allocation3 [shape = 'u8[24576]{0}', space=vmem, size = 0x6000, scoped, tag = 'output window, operand 0']
    #allocation4 [shape = 's32[2]{0}', space=sflag, size = 0x8, scoped, tag = 'scoped memory for tpu_custom_call.1']
    %11 = vsyncpa [#allocation4], 0
    %s12 = scalar_lea.sflag [#allocation4], 1
    %13 = vsyncpa %s12, 0
    loop: start=0, step=1, limit=4
    $region2: #{tpu_custom_call.1} parent=1 // loop_pre_header
      _
    $region3: #{tpu_custom_call.1} parent=1 // loop_header
      %s15 = sphi 0, %s19
      %p16 = scmp.ge.s32.totalorder %s15, 4
      %s25 = sphi 0, %s27
      %s28 = sphi 0, %s25
      %s29 = sphi 0, %s28
      %s45 = sphi 0, %s29
      %s49 = sphi 0, %s49
      %s51 = sphi 0, %s49
      %s52 = sphi 0, %s51
      %s66 = sphi 0, %s52
      %s70 = sphi 0, %s70
      %s72 = sphi 0, %s70
      %s73 = sphi 0, %s72
      %s87 = sphi 0, %s73
      %s91 = sphi 0, %s91
      %s93 = sphi 0, %s91
      %s94 = sphi 0, %s93
      %s108 = sphi 0, %s94
      %s112 = sphi 0, %s112
      %s114 = sphi 0, %s112
      %s115 = sphi 0, %s114
      %s129 = sphi 0, %s115
      %s133 = sphi 0, %s133
      %s135 = sphi 0, %s133
      %s136 = sphi 0, %s135
      %s150 = sphi 0, %s136
      %s156 = sphi 0, %s158
      %s159 = sphi 0, %s156
      %s160 = sphi 0, %s159
      %s176 = sphi 0, %s160
    $region4: #{tpu_custom_call.1} parent=1 // loop_header_branch
      %18 = sbr.rel (%p16) target = $region8
    $region5: #{tpu_custom_call.1} parent=1 // loop_body
      %s20 = ssub.s32 %s15, 1
      %s21 = ssub.s32 %s15, 2
      %s22 = sadd.s32 %s15, 1
      %s23 = ssub.s32 %s15, %s22
      %p24 = scmp.eq.s32.totalorder %s23, 0
      %s26 = sadd.s32 %s25, 1
      %s27 = scalar_select %p24, %s25, %s26
      %p30 = pneg %p24
      %p31 = scmp.eq.s32.totalorder %s15, 1
      %p32 = por %p30, %p31
      %p33 = scmp.ne.s32.totalorder %s25, %s28
      %p34 = scmp.eq.s32.totalorder %s15, 0
      %p35 = por %p33, %p34
      %p36 = scmp.ne.s32.totalorder %s25, %s28
      %p37 = scmp.eq.s32.totalorder %s20, 1
      %p38 = por %p36, %p37
      %p39 = scmp.ne.s32.totalorder %s28, %s29
      %p40 = scmp.eq.s32.totalorder %s20, 0
      %p41 = por %p39, %p40
      %p42 = scmp.ne.s32.totalorder %s28, %s29
      %p43 = scmp.eq.s32.totalorder %s21, 1
      %p44 = por %p42, %p43
      %p46 = scmp.ne.s32.totalorder %s29, %s45
      %p47 = scmp.eq.s32.totalorder %s21, 0
      %p48 = por %p46, %p47
      %s50 = sadd.s32 %s49, 1
      %p53 = scmp.eq.s32.totalorder %s15, 1
      %p54 = scmp.ne.s32.totalorder %s49, %s51
      %p55 = scmp.eq.s32.totalorder %s15, 0
      %p56 = por %p54, %p55
      %p57 = scmp.ne.s32.totalorder %s49, %s51
      %p58 = scmp.eq.s32.totalorder %s20, 1
      %p59 = por %p57, %p58
      %p60 = scmp.ne.s32.totalorder %s51, %s52
      %p61 = scmp.eq.s32.totalorder %s20, 0
      %p62 = por %p60, %p61
      %p63 = scmp.ne.s32.totalorder %s51, %s52
      %p64 = scmp.eq.s32.totalorder %s21, 1
      %p65 = por %p63, %p64
      %p67 = scmp.ne.s32.totalorder %s52, %s66
      %p68 = scmp.eq.s32.totalorder %s21, 0
      %p69 = por %p67, %p68
      %s71 = sadd.s32 %s70, 1
      %p74 = scmp.eq.s32.totalorder %s15, 1
      %p75 = scmp.ne.s32.totalorder %s70, %s72
      %p76 = scmp.eq.s32.totalorder %s15, 0
      %p77 = por %p75, %p76
      %p78 = scmp.ne.s32.totalorder %s70, %s72
      %p79 = scmp.eq.s32.totalorder %s20, 1
      %p80 = por %p78, %p79
      %p81 = scmp.ne.s32.totalorder %s72, %s73
      %p82 = scmp.eq.s32.totalorder %s20, 0
      %p83 = por %p81, %p82
      %p84 = scmp.ne.s32.totalorder %s72, %s73
      %p85 = scmp.eq.s32.totalorder %s21, 1
      %p86 = por %p84, %p85
      %p88 = scmp.ne.s32.totalorder %s73, %s87
      %p89 = scmp.eq.s32.totalorder %s21, 0
      %p90 = por %p88, %p89
      %s92 = sadd.s32 %s91, 1
      %p95 = scmp.eq.s32.totalorder %s15, 1
      %p96 = scmp.ne.s32.totalorder %s91, %s93
      %p97 = scmp.eq.s32.totalorder %s15, 0
      %p98 = por %p96, %p97
      %p99 = scmp.ne.s32.totalorder %s91, %s93
      %p100 = scmp.eq.s32.totalorder %s20, 1
      %p101 = por %p99, %p100
      %p102 = scmp.ne.s32.totalorder %s93, %s94
      %p103 = scmp.eq.s32.totalorder %s20, 0
      %p104 = por %p102, %p103
      %p105 = scmp.ne.s32.totalorder %s93, %s94
      %p106 = scmp.eq.s32.totalorder %s21, 1
      %p107 = por %p105, %p106
      %p109 = scmp.ne.s32.totalorder %s94, %s108
      %p110 = scmp.eq.s32.totalorder %s21, 0
      %p111 = por %p109, %p110
      %s113 = sadd.s32 %s112, 1
      %p116 = scmp.eq.s32.totalorder %s15, 1
      %p117 = scmp.ne.s32.totalorder %s112, %s114
      %p118 = scmp.eq.s32.totalorder %s15, 0
      %p119 = por %p117, %p118
      %p120 = scmp.ne.s32.totalorder %s112, %s114
      %p121 = scmp.eq.s32.totalorder %s20, 1
      %p122 = por %p120, %p121
      %p123 = scmp.ne.s32.totalorder %s114, %s115
      %p124 = scmp.eq.s32.totalorder %s20, 0
      %p125 = por %p123, %p124
      %p126 = scmp.ne.s32.totalorder %s114, %s115
      %p127 = scmp.eq.s32.totalorder %s21, 1
      %p128 = por %p126, %p127
      %p130 = scmp.ne.s32.totalorder %s115, %s129
      %p131 = scmp.eq.s32.totalorder %s21, 0
      %p132 = por %p130, %p131
      %s134 = sadd.s32 %s133, 1
      %p137 = scmp.eq.s32.totalorder %s15, 1
      %p138 = scmp.ne.s32.totalorder %s133, %s135
      %p139 = scmp.eq.s32.totalorder %s15, 0
      %p140 = por %p138, %p139
      %p141 = scmp.ne.s32.totalorder %s133, %s135
      %p142 = scmp.eq.s32.totalorder %s20, 1
      %p143 = por %p141, %p142
      %p144 = scmp.ne.s32.totalorder %s135, %s136
      %p145 = scmp.eq.s32.totalorder %s20, 0
      %p146 = por %p144, %p145
      %p147 = scmp.ne.s32.totalorder %s135, %s136
      %p148 = scmp.eq.s32.totalorder %s21, 1
      %p149 = por %p147, %p148
      %p151 = scmp.ne.s32.totalorder %s136, %s150
      %p152 = scmp.eq.s32.totalorder %s21, 0
      %p153 = por %p151, %p152
      %s154 = ssub.s32 %s15, %s22
      %p155 = scmp.eq.s32.totalorder %s154, 0
      %s157 = sadd.s32 %s156, 1
      %s158 = scalar_select %p155, %s156, %s157
      %p161 = pneg %p155
      %p162 = scmp.eq.s32.totalorder %s15, 1
      %p163 = por %p161, %p162
      %p164 = scmp.ne.s32.totalorder %s156, %s159
      %p165 = scmp.eq.s32.totalorder %s15, 0
      %p166 = por %p164, %p165
      %p167 = scmp.ne.s32.totalorder %s156, %s159
      %p168 = scmp.eq.s32.totalorder %s20, 1
      %p169 = por %p167, %p168
      %p170 = scmp.ne.s32.totalorder %s159, %s160
      %p171 = scmp.eq.s32.totalorder %s20, 0
      %p172 = por %p170, %p171
      %p173 = scmp.ne.s32.totalorder %s159, %s160
      %p174 = scmp.eq.s32.totalorder %s21, 1
      %p175 = por %p173, %p174
      %p177 = scmp.ne.s32.totalorder %s160, %s176
      %p178 = scmp.eq.s32.totalorder %s21, 0
      %p179 = por %p177, %p178
      %p180 = scmp.le.s32.totalorder 1, %s15
      %p181 = scmp.lt.s32.totalorder %s15, 3
      %p182 = pnand %p180, %p181
      %p183 = pneg %p182
      // Predicated region
      $region9: #{tpu_custom_call.1} parent=5 // pred_check
        _
      $region10: #{tpu_custom_call.1} parent=5 // pred_check_branch
        %185 = sbr.rel (%p182) target = $region12
      $region11: #{tpu_custom_call.1} parent=5 // pred_region
        %s186 = ssub.s32 %s15, 1
        // Predicated region
        $region13: #{tpu_custom_call.1} parent=11 // pred_check
          %p187 = pneg %p62
        $region14: #{tpu_custom_call.1} parent=11 // pred_check_branch
          %189 = sbr.rel (%p187) target = $region16
        $region15: #{tpu_custom_call.1} parent=11 // pred_region
          _
        $region16: #{tpu_custom_call.1} parent=11 // pred_fallthru
          _
        // Predicated region
        $region17: #{tpu_custom_call.1} parent=11 // pred_check
          %p190 = pneg %p83
        $region18: #{tpu_custom_call.1} parent=11 // pred_check_branch
          %192 = sbr.rel (%p190) target = $region20
        $region19: #{tpu_custom_call.1} parent=11 // pred_region
          _
        $region20: #{tpu_custom_call.1} parent=11 // pred_fallthru
          _
        // Predicated region
        $region21: #{tpu_custom_call.1} parent=11 // pred_check
          %p193 = pneg %p104
        $region22: #{tpu_custom_call.1} parent=11 // pred_check_branch
          %195 = sbr.rel (%p193) target = $region24
        $region23: #{tpu_custom_call.1} parent=11 // pred_region
          _
        $region24: #{tpu_custom_call.1} parent=11 // pred_fallthru
          _
        // Predicated region
        $region25: #{tpu_custom_call.1} parent=11 // pred_check
          %p196 = pneg %p125
        $region26: #{tpu_custom_call.1} parent=11 // pred_check_branch
          %198 = sbr.rel (%p196) target = $region28
        $region27: #{tpu_custom_call.1} parent=11 // pred_region
          _
        $region28: #{tpu_custom_call.1} parent=11 // pred_fallthru
          _
        // Predicated region
        $region29: #{tpu_custom_call.1} parent=11 // pred_check
          %p199 = pneg %p146
        $region30: #{tpu_custom_call.1} parent=11 // pred_check_branch
          %201 = sbr.rel (%p199) target = $region32
        $region31: #{tpu_custom_call.1} parent=11 // pred_region
          _
        $region32: #{tpu_custom_call.1} parent=11 // pred_fallthru
          _
      $region12: #{tpu_custom_call.1} parent=5 // pred_fallthru
        _
      %p202 = scmp.lt.s32.totalorder %s15, 2
      // Predicated region
      $region33: #{tpu_custom_call.1} parent=5 // pred_check
        %p203 = pneg %p202
      $region34: #{tpu_custom_call.1} parent=5 // pred_check_branch
        %205 = sbr.rel (%p203) target = $region36
      $region35: #{tpu_custom_call.1} parent=5 // pred_region
        // Predicated region
        $region37: #{tpu_custom_call.1} parent=35 // pred_check
          %p206 = pneg %p35
        $region38: #{tpu_custom_call.1} parent=35 // pred_check_branch
          %208 = sbr.rel (%p206) target = $region40
        $region39: #{tpu_custom_call.1} parent=35 // pred_region
          %p209 = scmp.lt.s32.totalorder %s15, 1
          %s210 = scalar_select %p209, %s15, 1
          %s211 = smul.addr %s210, 5
          %s212 = smul.addr %s211, 8
          %s213 = scalar_lea.vmem %s0, %s212
        $region40: #{tpu_custom_call.1} parent=35 // pred_fallthru
          _
      $region36: #{tpu_custom_call.1} parent=5 // pred_fallthru
        _
      %p214 = scmp.le.s32.totalorder 1, %s15
      %p215 = scmp.lt.s32.totalorder %s15, 3
      %p216 = pnand %p214, %p215
      %p217 = pneg %p216
      // Predicated region
      $region41: #{tpu_custom_call.1} parent=5 // pred_check
        _
      $region42: #{tpu_custom_call.1} parent=5 // pred_check_branch
        %219 = sbr.rel (%p216) target = $region44
      $region43: #{tpu_custom_call.1} parent=5 // pred_region
        %s220 = ssub.s32 %s15, 1
        %p221 = scmp.lt.s32.totalorder %s20, 1
        %s222 = scalar_select %p221, %s20, 1
        %s223 = smul.addr %s222, 5
        %s224 = smul.addr %s223, 8
        %s225 = scalar_lea.vmem %s0, %s224
        %p226 = pneg %p41
        %p227 = pneg %p38
        %p228 = pneg %p62
        %p229 = pneg %p59
        %p230 = pneg %p83
        %p231 = pneg %p80
        %p232 = pneg %p104
        %p233 = pneg %p101
        %p234 = pneg %p125
        %p235 = pneg %p122
        %p236 = pneg %p146
        %p237 = pneg %p143
        %p238 = pneg %p172
        %p239 = pneg %p169
        %s240 = sand.u32 %s159, 1
        %s241 = scalar_lea.sflag [#allocation4], %s240
        %s242 = sand.u32 %s159, 1
        %s243 = smul.addr %s242, 24
        %s244 = scalar_lea.vmem [#allocation3], %s243
        %p245 = scmp.lt.s32.totalorder %s20, 1
        %s246 = scalar_select %p245, %s20, 1
        %s247 = smul.addr %s246, 5
        %s248 = smul.addr %s247, 8
        %s249 = scalar_lea.vmem %s0, %s248
        %v250 = vld [vmem:[%s1] sm:$0xff]
        %v251 = vld [vmem:[%s249] sm:$0xff]
        %v252 = vld [vmem:[%s249 + $0x8] sm:$0xff]
        %v253 = vld [vmem:[%s249 + $0x10] sm:$0xff]
        %v254 = vld [vmem:[%s249 + $0x18] sm:$0xff]
        %s255 = scalar_lea.vmem %s1, 8
        %v256 = vld [vmem:[%s255] sm:$0xff]
        %v257 = vld [vmem:[%s249] sm:$0xff]
        %v258 = vld [vmem:[%s249 + $0x8] sm:$0xff]
        %v259 = vld [vmem:[%s249 + $0x10] sm:$0xff]
        %v260 = vld [vmem:[%s249 + $0x18] sm:$0xff]
        %v261 = vld [vmem:[%s249 + $0x20] sm:$0xff]
        %267 = vrot.lane.b32.xlu0 %v257, 127
        %v268 = vpop.permute.xlu0 %267
        %269 = vrot.lane.b32.xlu0 %v258, 127
        %v270 = vpop.permute.xlu0 %269
        %271 = vrot.lane.b32.xlu0 %v259, 127
        %v272 = vpop.permute.xlu0 %271
        %273 = vrot.lane.b32.xlu0 %v260, 127
        %v274 = vpop.permute.xlu0 %273
        %275 = vrot.lane.b32.xlu0 %v261, 127
        %v276 = vpop.permute.xlu0 %275
        %vm277 = vcmask 1039360
        %v278 = vsel %vm277, %v268, %v270
        %v279 = vsel %vm277, %v270, %v272
        %v280 = vsel %vm277, %v272, %v274
        %v281 = vsel %vm277, %v274, %v276
        %vm286 = vcmask 64512
        %v288 = vsel %vm286, %v256, 0
        %290 = vmatprep.subr.mxu0 %v279
        %291 = vmatpush1.msra.mxu0 %v278
        %292 = vmatprep.subr.mxu0 0.0
        %293 = vmatpush1.msra.mxu0 0.0
        %294 = vmatprep.subr.mxu0 0.0
        %295 = vmatpush1.msra.mxu0 0.0
        %296 = vmatprep.subr.mxu0 0.0
        %297 = vmatpush1.msra.mxu0 0.0
        %298 = vmatprep.subr.mxu0 0.0
        %299 = vmatpush1.msra.mxu0 0.0
        %300 = vmatprep.subr.mxu0 0.0
        %301 = vmatpush1.msra.mxu0 0.0
        %302 = vmatprep.subr.mxu0 0.0
        %303 = vmatpush1.msra.mxu0 0.0
        %304 = vmatprep.subr.mxu0 0.0
        %305 = vmatpush1.msra.mxu0 0.0
        %306 = vmatprep.subr.mxu0 0.0
        %307 = vmatpush1.msra.mxu0 0.0
        %308 = vmatprep.subr.mxu0 0.0
        %309 = vmatpush1.msra.mxu0 0.0
        %310 = vmatprep.subr.mxu0 0.0
        %311 = vmatpush1.msra.mxu0 0.0
        %312 = vmatprep.subr.mxu0 0.0
        %313 = vmatpush1.msra.mxu0 0.0
        %314 = vmatprep.subr.mxu0 0.0
        %315 = vmatpush1.msra.mxu0 0.0
        %316 = vmatprep.subr.mxu0 0.0
        %317 = vmatpush1.msra.mxu0 0.0
        %318 = vmatprep.subr.mxu0 0.0
        %319 = vmatpush1.msra.mxu0 0.0
        %320 = vmatprep.subr.mxu0 0.0
        %321 = vmatpush1.msra.mxu0 0.0
        %322 = vmatprep.subr.mxu0 0.0
        %323 = vmatpush1.msra.mxu0 0.0
        %324 = vmatprep.subr.mxu0 0.0
        %325 = vmatpush1.msra.mxu0 0.0
        %326 = vmatprep.subr.mxu0 0.0
        %327 = vmatpush1.msra.mxu0 0.0
        %328 = vmatprep.subr.mxu0 0.0
        %329 = vmatpush1.msra.mxu0 0.0
        %330 = vmatprep.subr.mxu0 0.0
        %331 = vmatpush1.msra.mxu0 0.0
        %332 = vmatprep.subr.mxu0 0.0
        %333 = vmatpush1.msra.mxu0 0.0
        %334 = vmatprep.subr.mxu0 0.0
        %335 = vmatpush1.msra.mxu0 0.0
        %336 = vmatprep.subr.mxu0 0.0
        %337 = vmatpush1.msra.mxu0 0.0
        %338 = vmatprep.subr.mxu0 0.0
        %339 = vmatpush1.msra.mxu0 0.0
        %340 = vmatprep.subr.mxu0 0.0
        %341 = vmatpush1.msra.mxu0 0.0
        %342 = vmatprep.subr.mxu0 0.0
        %343 = vmatpush1.msra.mxu0 0.0
        %344 = vmatprep.subr.mxu0 0.0
        %345 = vmatpush1.msra.mxu0 0.0
        %346 = vmatprep.subr.mxu0 0.0
        %347 = vmatpush1.msra.mxu0 0.0
        %348 = vmatprep.subr.mxu0 0.0
        %349 = vmatpush1.msra.mxu0 0.0
        %350 = vmatprep.subr.mxu0 0.0
        %351 = vmatpush1.msra.mxu0 0.0
        %352 = vmatprep.subr.mxu0 0.0
        %353 = vmatpush1.msra.mxu0 0.0
        %354 = vmatprep.mubr.f32.mxu0 0.0
        %355 = vmatmul.mubr.f32.gmra.mrb[0].mxu0 %v288
        %v356 = vpop.f32.mrb[0].mxu0
        %v357 = vadd.f32 0.0, %v356
        %v358 = vpop.f32.mrb[0].mxu0
        %v359 = vadd.f32 0.0, %v358
        %360 = vdwg.mxu0
        %361 = vmatprep.subr.mxu0 %v281
        %362 = vmatpush1.msra.mxu0 %v280
        %363 = vmatprep.subr.mxu0 0.0
        %364 = vmatpush1.msra.mxu0 0.0
        %365 = vmatprep.subr.mxu0 0.0
        %366 = vmatpush1.msra.mxu0 0.0
        %367 = vmatprep.subr.mxu0 0.0
        %368 = vmatpush1.msra.mxu0 0.0
        %369 = vmatprep.subr.mxu0 0.0
        %370 = vmatpush1.msra.mxu0 0.0
        %371 = vmatprep.subr.mxu0 0.0
        %372 = vmatpush1.msra.mxu0 0.0
        %373 = vmatprep.subr.mxu0 0.0
        %374 = vmatpush1.msra.mxu0 0.0
        %375 = vmatprep.subr.mxu0 0.0
        %376 = vmatpush1.msra.mxu0 0.0
        %377 = vmatprep.subr.mxu0 0.0
        %378 = vmatpush1.msra.mxu0 0.0
        %379 = vmatprep.subr.mxu0 0.0
        %380 = vmatpush1.msra.mxu0 0.0
        %381 = vmatprep.subr.mxu0 0.0
        %382 = vmatpush1.msra.mxu0 0.0
        %383 = vmatprep.subr.mxu0 0.0
        %384 = vmatpush1.msra.mxu0 0.0
        %385 = vmatprep.subr.mxu0 0.0
        %386 = vmatpush1.msra.mxu0 0.0
        %387 = vmatprep.subr.mxu0 0.0
        %388 = vmatpush1.msra.mxu0 0.0
        %389 = vmatprep.subr.mxu0 0.0
        %390 = vmatpush1.msra.mxu0 0.0
        %391 = vmatprep.subr.mxu0 0.0
        %392 = vmatpush1.msra.mxu0 0.0
        %393 = vmatprep.subr.mxu0 0.0
        %394 = vmatpush1.msra.mxu0 0.0
        %395 = vmatprep.subr.mxu0 0.0
        %396 = vmatpush1.msra.mxu0 0.0
        %397 = vmatprep.subr.mxu0 0.0
        %398 = vmatpush1.msra.mxu0 0.0
        %399 = vmatprep.subr.mxu0 0.0
        %400 = vmatpush1.msra.mxu0 0.0
        %401 = vmatprep.subr.mxu0 0.0
        %402 = vmatpush1.msra.mxu0 0.0
        %403 = vmatprep.subr.mxu0 0.0
        %404 = vmatpush1.msra.mxu0 0.0
        %405 = vmatprep.subr.mxu0 0.0
        %406 = vmatpush1.msra.mxu0 0.0
        %407 = vmatprep.subr.mxu0 0.0
        %408 = vmatpush1.msra.mxu0 0.0
        %409 = vmatprep.subr.mxu0 0.0
        %410 = vmatpush1.msra.mxu0 0.0
        %411 = vmatprep.subr.mxu0 0.0
        %412 = vmatpush1.msra.mxu0 0.0
        %413 = vmatprep.subr.mxu0 0.0
        %414 = vmatpush1.msra.mxu0 0.0
        %415 = vmatprep.subr.mxu0 0.0
        %416 = vmatpush1.msra.mxu0 0.0
        %417 = vmatprep.subr.mxu0 0.0
        %418 = vmatpush1.msra.mxu0 0.0
        %419 = vmatprep.subr.mxu0 0.0
        %420 = vmatpush1.msra.mxu0 0.0
        %421 = vmatprep.subr.mxu0 0.0
        %422 = vmatpush1.msra.mxu0 0.0
        %423 = vmatprep.subr.mxu0 0.0
        %424 = vmatpush1.msra.mxu0 0.0
        %425 = vmatprep.mubr.f32.mxu0 0.0
        %426 = vmatmul.mubr.f32.gmra.mrb[0].mxu0 %v288
        %v427 = vpop.f32.mrb[0].mxu0
        %v428 = vadd.f32 0.0, %v427
        %v429 = vpop.f32.mrb[0].mxu0
        %v430 = vadd.f32 0.0, %v429
        %431 = vdwg.mxu0
        %v433 = vsel %vm286, %v250, 0
        %435 = vmatprep.subr.mxu0 %v252
        %436 = vmatpush1.msra.mxu0 %v251
        %437 = vmatprep.subr.mxu0 0.0
        %438 = vmatpush1.msra.mxu0 0.0
        %439 = vmatprep.subr.mxu0 0.0
        %440 = vmatpush1.msra.mxu0 0.0
        %441 = vmatprep.subr.mxu0 0.0
        %442 = vmatpush1.msra.mxu0 0.0
        %443 = vmatprep.subr.mxu0 0.0
        %444 = vmatpush1.msra.mxu0 0.0
        %445 = vmatprep.subr.mxu0 0.0
        %446 = vmatpush1.msra.mxu0 0.0
        %447 = vmatprep.subr.mxu0 0.0
        %448 = vmatpush1.msra.mxu0 0.0
        %449 = vmatprep.subr.mxu0 0.0
        %450 = vmatpush1.msra.mxu0 0.0
        %451 = vmatprep.subr.mxu0 0.0
        %452 = vmatpush1.msra.mxu0 0.0
        %453 = vmatprep.subr.mxu0 0.0
        %454 = vmatpush1.msra.mxu0 0.0
        %455 = vmatprep.subr.mxu0 0.0
        %456 = vmatpush1.msra.mxu0 0.0
        %457 = vmatprep.subr.mxu0 0.0
        %458 = vmatpush1.msra.mxu0 0.0
        %459 = vmatprep.subr.mxu0 0.0
        %460 = vmatpush1.msra.mxu0 0.0
        %461 = vmatprep.subr.mxu0 0.0
        %462 = vmatpush1.msra.mxu0 0.0
        %463 = vmatprep.subr.mxu0 0.0
        %464 = vmatpush1.msra.mxu0 0.0
        %465 = vmatprep.subr.mxu0 0.0
        %466 = vmatpush1.msra.mxu0 0.0
        %467 = vmatprep.subr.mxu0 0.0
        %468 = vmatpush1.msra.mxu0 0.0
        %469 = vmatprep.subr.mxu0 0.0
        %470 = vmatpush1.msra.mxu0 0.0
        %471 = vmatprep.subr.mxu0 0.0
        %472 = vmatpush1.msra.mxu0 0.0
        %473 = vmatprep.subr.mxu0 0.0
        %474 = vmatpush1.msra.mxu0 0.0
        %475 = vmatprep.subr.mxu0 0.0
        %476 = vmatpush1.msra.mxu0 0.0
        %477 = vmatprep.subr.mxu0 0.0
        %478 = vmatpush1.msra.mxu0 0.0
        %479 = vmatprep.subr.mxu0 0.0
        %480 = vmatpush1.msra.mxu0 0.0
        %481 = vmatprep.subr.mxu0 0.0
        %482 = vmatpush1.msra.mxu0 0.0
        %483 = vmatprep.subr.mxu0 0.0
        %484 = vmatpush1.msra.mxu0 0.0
        %485 = vmatprep.subr.mxu0 0.0
        %486 = vmatpush1.msra.mxu0 0.0
        %487 = vmatprep.subr.mxu0 0.0
        %488 = vmatpush1.msra.mxu0 0.0
        %489 = vmatprep.subr.mxu0 0.0
        %490 = vmatpush1.msra.mxu0 0.0
        %491 = vmatprep.subr.mxu0 0.0
        %492 = vmatpush1.msra.mxu0 0.0
        %493 = vmatprep.subr.mxu0 0.0
        %494 = vmatpush1.msra.mxu0 0.0
        %495 = vmatprep.subr.mxu0 0.0
        %496 = vmatpush1.msra.mxu0 0.0
        %497 = vmatprep.subr.mxu0 0.0
        %498 = vmatpush1.msra.mxu0 0.0
        %499 = vmatprep.mubr.f32.mxu0 0.0
        %500 = vmatmul.mubr.f32.gmra.mrb[0].mxu0 %v433
        %v501 = vpop.f32.mrb[0].mxu0
        %v502 = vadd.f32 %v357, %v501
        %v503 = vpop.f32.mrb[0].mxu0
        %v504 = vadd.f32 %v359, %v503
        %505 = vdwg.mxu0
        %506 = vmatprep.subr.mxu0 %v254
        %507 = vmatpush1.msra.mxu0 %v253
        %508 = vmatprep.subr.mxu0 0.0
        %509 = vmatpush1.msra.mxu0 0.0
        %510 = vmatprep.subr.mxu0 0.0
        %511 = vmatpush1.msra.mxu0 0.0
        %512 = vmatprep.subr.mxu0 0.0
        %513 = vmatpush1.msra.mxu0 0.0
        %514 = vmatprep.subr.mxu0 0.0
        %515 = vmatpush1.msra.mxu0 0.0
        %516 = vmatprep.subr.mxu0 0.0
        %517 = vmatpush1.msra.mxu0 0.0
        %518 = vmatprep.subr.mxu0 0.0
        %519 = vmatpush1.msra.mxu0 0.0
        %520 = vmatprep.subr.mxu0 0.0
        %521 = vmatpush1.msra.mxu0 0.0
        %522 = vmatprep.subr.mxu0 0.0
        %523 = vmatpush1.msra.mxu0 0.0
        %524 = vmatprep.subr.mxu0 0.0
        %525 = vmatpush1.msra.mxu0 0.0
        %526 = vmatprep.subr.mxu0 0.0
        %527 = vmatpush1.msra.mxu0 0.0
        %528 = vmatprep.subr.mxu0 0.0
        %529 = vmatpush1.msra.mxu0 0.0
        %530 = vmatprep.subr.mxu0 0.0
        %531 = vmatpush1.msra.mxu0 0.0
        %532 = vmatprep.subr.mxu0 0.0
        %533 = vmatpush1.msra.mxu0 0.0
        %534 = vmatprep.subr.mxu0 0.0
        %535 = vmatpush1.msra.mxu0 0.0
        %536 = vmatprep.subr.mxu0 0.0
        %537 = vmatpush1.msra.mxu0 0.0
        %538 = vmatprep.subr.mxu0 0.0
        %539 = vmatpush1.msra.mxu0 0.0
        %540 = vmatprep.subr.mxu0 0.0
        %541 = vmatpush1.msra.mxu0 0.0
        %542 = vmatprep.subr.mxu0 0.0
        %543 = vmatpush1.msra.mxu0 0.0
        %544 = vmatprep.subr.mxu0 0.0
        %545 = vmatpush1.msra.mxu0 0.0
        %546 = vmatprep.subr.mxu0 0.0
        %547 = vmatpush1.msra.mxu0 0.0
        %548 = vmatprep.subr.mxu0 0.0
        %549 = vmatpush1.msra.mxu0 0.0
        %550 = vmatprep.subr.mxu0 0.0
        %551 = vmatpush1.msra.mxu0 0.0
        %552 = vmatprep.subr.mxu0 0.0
        %553 = vmatpush1.msra.mxu0 0.0
        %554 = vmatprep.subr.mxu0 0.0
        %555 = vmatpush1.msra.mxu0 0.0
        %556 = vmatprep.subr.mxu0 0.0
        %557 = vmatpush1.msra.mxu0 0.0
        %558 = vmatprep.subr.mxu0 0.0
        %559 = vmatpush1.msra.mxu0 0.0
        %560 = vmatprep.subr.mxu0 0.0
        %561 = vmatpush1.msra.mxu0 0.0
        %562 = vmatprep.subr.mxu0 0.0
        %563 = vmatpush1.msra.mxu0 0.0
        %564 = vmatprep.subr.mxu0 0.0
        %565 = vmatpush1.msra.mxu0 0.0
        %566 = vmatprep.subr.mxu0 0.0
        %567 = vmatpush1.msra.mxu0 0.0
        %568 = vmatprep.subr.mxu0 0.0
        %569 = vmatpush1.msra.mxu0 0.0
        %570 = vmatprep.mubr.f32.mxu0 0.0
        %571 = vmatmul.mubr.f32.gmra.mrb[0].mxu0 %v433
        %v572 = vpop.f32.mrb[0].mxu0
        %v573 = vadd.f32 %v428, %v572
        %v574 = vpop.f32.mrb[0].mxu0
        %v575 = vadd.f32 %v430, %v574
        %576 = vdwg.mxu0
        %s577 = scalar_lea.vmem %s1, 16
        %v578 = vld [vmem:[%s577] sm:$0xff]
        %579 = vrot.lane.b32.xlu0 %v257, 126
        %v580 = vpop.permute.xlu0 %579
        %581 = vrot.lane.b32.xlu0 %v258, 126
        %v582 = vpop.permute.xlu0 %581
        %583 = vrot.lane.b32.xlu0 %v259, 126
        %v584 = vpop.permute.xlu0 %583
        %585 = vrot.lane.b32.xlu0 %v260, 126
        %v586 = vpop.permute.xlu0 %585
        %587 = vrot.lane.b32.xlu0 %v261, 126
        %v588 = vpop.permute.xlu0 %587
        %vm589 = vcmask 1031168
        %v590 = vsel %vm589, %v580, %v582
        %v591 = vsel %vm589, %v582, %v584
        %v592 = vsel %vm589, %v584, %v586
        %v593 = vsel %vm589, %v586, %v588
        %v599 = vsel %vm286, %v578, 0
        %601 = vmatprep.subr.mxu0 %v591
        %602 = vmatpush1.msra.mxu0 %v590
        %603 = vmatprep.subr.mxu0 0.0
        %604 = vmatpush1.msra.mxu0 0.0
        %605 = vmatprep.subr.mxu0 0.0
        %606 = vmatpush1.msra.mxu0 0.0
        %607 = vmatprep.subr.mxu0 0.0
        %608 = vmatpush1.msra.mxu0 0.0
        %609 = vmatprep.subr.mxu0 0.0
        %610 = vmatpush1.msra.mxu0 0.0
        %611 = vmatprep.subr.mxu0 0.0
        %612 = vmatpush1.msra.mxu0 0.0
        %613 = vmatprep.subr.mxu0 0.0
        %614 = vmatpush1.msra.mxu0 0.0
        %615 = vmatprep.subr.mxu0 0.0
        %616 = vmatpush1.msra.mxu0 0.0
        %617 = vmatprep.subr.mxu0 0.0
        %618 = vmatpush1.msra.mxu0 0.0
        %619 = vmatprep.subr.mxu0 0.0
        %620 = vmatpush1.msra.mxu0 0.0
        %621 = vmatprep.subr.mxu0 0.0
        %622 = vmatpush1.msra.mxu0 0.0
        %623 = vmatprep.subr.mxu0 0.0
        %624 = vmatpush1.msra.mxu0 0.0
        %625 = vmatprep.subr.mxu0 0.0
        %626 = vmatpush1.msra.mxu0 0.0
        %627 = vmatprep.subr.mxu0 0.0
        %628 = vmatpush1.msra.mxu0 0.0
        %629 = vmatprep.subr.mxu0 0.0
        %630 = vmatpush1.msra.mxu0 0.0
        %631 = vmatprep.subr.mxu0 0.0
        %632 = vmatpush1.msra.mxu0 0.0
        %633 = vmatprep.subr.mxu0 0.0
        %634 = vmatpush1.msra.mxu0 0.0
        %635 = vmatprep.subr.mxu0 0.0
        %636 = vmatpush1.msra.mxu0 0.0
        %637 = vmatprep.subr.mxu0 0.0
        %638 = vmatpush1.msra.mxu0 0.0
        %639 = vmatprep.subr.mxu0 0.0
        %640 = vmatpush1.msra.mxu0 0.0
        %641 = vmatprep.subr.mxu0 0.0
        %642 = vmatpush1.msra.mxu0 0.0
        %643 = vmatprep.subr.mxu0 0.0
        %644 = vmatpush1.msra.mxu0 0.0
        %645 = vmatprep.subr.mxu0 0.0
        %646 = vmatpush1.msra.mxu0 0.0
        %647 = vmatprep.subr.mxu0 0.0
        %648 = vmatpush1.msra.mxu0 0.0
        %649 = vmatprep.subr.mxu0 0.0
        %650 = vmatpush1.msra.mxu0 0.0
        %651 = vmatprep.subr.mxu0 0.0
        %652 = vmatpush1.msra.mxu0 0.0
        %653 = vmatprep.subr.mxu0 0.0
        %654 = vmatpush1.msra.mxu0 0.0
        %655 = vmatprep.subr.mxu0 0.0
        %656 = vmatpush1.msra.mxu0 0.0
        %657 = vmatprep.subr.mxu0 0.0
        %658 = vmatpush1.msra.mxu0 0.0
        %659 = vmatprep.subr.mxu0 0.0
        %660 = vmatpush1.msra.mxu0 0.0
        %661 = vmatprep.subr.mxu0 0.0
        %662 = vmatpush1.msra.mxu0 0.0
        %663 = vmatprep.subr.mxu0 0.0
        %664 = vmatpush1.msra.mxu0 0.0
        %665 = vmatprep.mubr.f32.mxu0 0.0
        %666 = vmatmul.mubr.f32.gmra.mrb[0].mxu0 %v599
        %v667 = vpop.f32.mrb[0].mxu0
        %v668 = vadd.f32 0.0, %v667
        %v669 = vpop.f32.mrb[0].mxu0
        %v670 = vadd.f32 0.0, %v669
        %671 = vdwg.mxu0
        %672 = vmatprep.subr.mxu0 %v593
        %673 = vmatpush1.msra.mxu0 %v592
        %674 = vmatprep.subr.mxu0 0.0
        %675 = vmatpush1.msra.mxu0 0.0
        %676 = vmatprep.subr.mxu0 0.0
        %677 = vmatpush1.msra.mxu0 0.0
        %678 = vmatprep.subr.mxu0 0.0
        %679 = vmatpush1.msra.mxu0 0.0
        %680 = vmatprep.subr.mxu0 0.0
        %681 = vmatpush1.msra.mxu0 0.0
        %682 = vmatprep.subr.mxu0 0.0
        %683 = vmatpush1.msra.mxu0 0.0
        %684 = vmatprep.subr.mxu0 0.0
        %685 = vmatpush1.msra.mxu0 0.0
        %686 = vmatprep.subr.mxu0 0.0
        %687 = vmatpush1.msra.mxu0 0.0
        %688 = vmatprep.subr.mxu0 0.0
        %689 = vmatpush1.msra.mxu0 0.0
        %690 = vmatprep.subr.mxu0 0.0
        %691 = vmatpush1.msra.mxu0 0.0
        %692 = vmatprep.subr.mxu0 0.0
        %693 = vmatpush1.msra.mxu0 0.0
        %694 = vmatprep.subr.mxu0 0.0
        %695 = vmatpush1.msra.mxu0 0.0
        %696 = vmatprep.subr.mxu0 0.0
        %697 = vmatpush1.msra.mxu0 0.0
        %698 = vmatprep.subr.mxu0 0.0
        %699 = vmatpush1.msra.mxu0 0.0
        %700 = vmatprep.subr.mxu0 0.0
        %701 = vmatpush1.msra.mxu0 0.0
        %702 = vmatprep.subr.mxu0 0.0
        %703 = vmatpush1.msra.mxu0 0.0
        %704 = vmatprep.subr.mxu0 0.0
        %705 = vmatpush1.msra.mxu0 0.0
        %706 = vmatprep.subr.mxu0 0.0
        %707 = vmatpush1.msra.mxu0 0.0
        %708 = vmatprep.subr.mxu0 0.0
        %709 = vmatpush1.msra.mxu0 0.0
        %710 = vmatprep.subr.mxu0 0.0
        %711 = vmatpush1.msra.mxu0 0.0
        %712 = vmatprep.subr.mxu0 0.0
        %713 = vmatpush1.msra.mxu0 0.0
        %714 = vmatprep.subr.mxu0 0.0
        %715 = vmatpush1.msra.mxu0 0.0
        %716 = vmatprep.subr.mxu0 0.0
        %717 = vmatpush1.msra.mxu0 0.0
        %718 = vmatprep.subr.mxu0 0.0
        %719 = vmatpush1.msra.mxu0 0.0
        %720 = vmatprep.subr.mxu0 0.0
        %721 = vmatpush1.msra.mxu0 0.0
        %722 = vmatprep.subr.mxu0 0.0
        %723 = vmatpush1.msra.mxu0 0.0
        %724 = vmatprep.subr.mxu0 0.0
        %725 = vmatpush1.msra.mxu0 0.0
        %726 = vmatprep.subr.mxu0 0.0
        %727 = vmatpush1.msra.mxu0 0.0
        %728 = vmatprep.subr.mxu0 0.0
        %729 = vmatpush1.msra.mxu0 0.0
        %730 = vmatprep.subr.mxu0 0.0
        %731 = vmatpush1.msra.mxu0 0.0
        %732 = vmatprep.subr.mxu0 0.0
        %733 = vmatpush1.msra.mxu0 0.0
        %734 = vmatprep.subr.mxu0 0.0
        %735 = vmatpush1.msra.mxu0 0.0
        %736 = vmatprep.mubr.f32.mxu0 0.0
        %737 = vmatmul.mubr.f32.gmra.mrb[0].mxu0 %v599
        %v738 = vpop.f32.mrb[0].mxu0
        %v739 = vadd.f32 0.0, %v738
        %v740 = vpop.f32.mrb[0].mxu0
        %v741 = vadd.f32 0.0, %v740
        %742 = vdwg.mxu0
        %v743 = vadd.f32 %v502, %v668
        %v744 = vadd.f32 %v504, %v670
        %v745 = vadd.f32 %v573, %v739
        %v746 = vadd.f32 %v575, %v741
        %s747 = scalar_lea.vmem %s1, 24
        %v748 = vld [vmem:[%s747] sm:$0xff]
        %749 = vrot.lane.b32.xlu0 %v257, 110
        %v750 = vpop.permute.xlu0 %749
        %751 = vrot.lane.b32.xlu0 %v258, 110
        %v752 = vpop.permute.xlu0 %751
        %753 = vrot.lane.b32.xlu0 %v259, 110
        %v754 = vpop.permute.xlu0 %753
        %755 = vrot.lane.b32.xlu0 %v260, 110
        %v756 = vpop.permute.xlu0 %755
        %757 = vrot.lane.b32.xlu0 %v261, 110
        %v758 = vpop.permute.xlu0 %757
        %vm759 = vcmask 900096
        %v760 = vsel %vm759, %v750, %v752
        %v761 = vsel %vm759, %v752, %v754
        %v762 = vsel %vm759, %v754, %v756
        %v763 = vsel %vm759, %v756, %v758
        %v769 = vsel %vm286, %v748, 0
        %771 = vmatprep.subr.mxu0 %v761
        %772 = vmatpush1.msra.mxu0 %v760
        %773 = vmatprep.subr.mxu0 0.0
        %774 = vmatpush1.msra.mxu0 0.0
        %775 = vmatprep.subr.mxu0 0.0
        %776 = vmatpush1.msra.mxu0 0.0
        %777 = vmatprep.subr.mxu0 0.0
        %778 = vmatpush1.msra.mxu0 0.0
        %779 = vmatprep.subr.mxu0 0.0
        %780 = vmatpush1.msra.mxu0 0.0
        %781 = vmatprep.subr.mxu0 0.0
        %782 = vmatpush1.msra.mxu0 0.0
        %783 = vmatprep.subr.mxu0 0.0
        %784 = vmatpush1.msra.mxu0 0.0
        %785 = vmatprep.subr.mxu0 0.0
        %786 = vmatpush1.msra.mxu0 0.0
        %787 = vmatprep.subr.mxu0 0.0
        %788 = vmatpush1.msra.mxu0 0.0
        %789 = vmatprep.subr.mxu0 0.0
        %790 = vmatpush1.msra.mxu0 0.0
        %791 = vmatprep.subr.mxu0 0.0
        %792 = vmatpush1.msra.mxu0 0.0
        %793 = vmatprep.subr.mxu0 0.0
        %794 = vmatpush1.msra.mxu0 0.0
        %795 = vmatprep.subr.mxu0 0.0
        %796 = vmatpush1.msra.mxu0 0.0
        %797 = vmatprep.subr.mxu0 0.0
        %798 = vmatpush1.msra.mxu0 0.0
        %799 = vmatprep.subr.mxu0 0.0
        %800 = vmatpush1.msra.mxu0 0.0
        %801 = vmatprep.subr.mxu0 0.0
        %802 = vmatpush1.msra.mxu0 0.0
        %803 = vmatprep.subr.mxu0 0.0
        %804 = vmatpush1.msra.mxu0 0.0
        %805 = vmatprep.subr.mxu0 0.0
        %806 = vmatpush1.msra.mxu0 0.0
        %807 = vmatprep.subr.mxu0 0.0
        %808 = vmatpush1.msra.mxu0 0.0
        %809 = vmatprep.subr.mxu0 0.0
        %810 = vmatpush1.msra.mxu0 0.0
        %811 = vmatprep.subr.mxu0 0.0
        %812 = vmatpush1.msra.mxu0 0.0
        %813 = vmatprep.subr.mxu0 0.0
        %814 = vmatpush1.msra.mxu0 0.0
        %815 = vmatprep.subr.mxu0 0.0
        %816 = vmatpush1.msra.mxu0 0.0
        %817 = vmatprep.subr.mxu0 0.0
        %818 = vmatpush1.msra.mxu0 0.0
        %819 = vmatprep.subr.mxu0 0.0
        %820 = vmatpush1.msra.mxu0 0.0
        %821 = vmatprep.subr.mxu0 0.0
        %822 = vmatpush1.msra.mxu0 0.0
        %823 = vmatprep.subr.mxu0 0.0
        %824 = vmatpush1.msra.mxu0 0.0
        %825 = vmatprep.subr.mxu0 0.0
        %826 = vmatpush1.msra.mxu0 0.0
        %827 = vmatprep.subr.mxu0 0.0
        %828 = vmatpush1.msra.mxu0 0.0
        %829 = vmatprep.subr.mxu0 0.0
        %830 = vmatpush1.msra.mxu0 0.0
        %831 = vmatprep.subr.mxu0 0.0
        %832 = vmatpush1.msra.mxu0 0.0
        %833 = vmatprep.subr.mxu0 0.0
        %834 = vmatpush1.msra.mxu0 0.0
        %835 = vmatprep.mubr.f32.mxu0 0.0
        %836 = vmatmul.mubr.f32.gmra.mrb[0].mxu0 %v769
        %v837 = vpop.f32.mrb[0].mxu0
        %v838 = vadd.f32 0.0, %v837
        %v839 = vpop.f32.mrb[0].mxu0
        %v840 = vadd.f32 0.0, %v839
        %841 = vdwg.mxu0
        %842 = vmatprep.subr.mxu0 %v763
        %843 = vmatpush1.msra.mxu0 %v762
        %844 = vmatprep.subr.mxu0 0.0
        %845 = vmatpush1.msra.mxu0 0.0
        %846 = vmatprep.subr.mxu0 0.0
        %847 = vmatpush1.msra.mxu0 0.0
        %848 = vmatprep.subr.mxu0 0.0
        %849 = vmatpush1.msra.mxu0 0.0
        %850 = vmatprep.subr.mxu0 0.0
        %851 = vmatpush1.msra.mxu0 0.0
        %852 = vmatprep.subr.mxu0 0.0
        %853 = vmatpush1.msra.mxu0 0.0
        %854 = vmatprep.subr.mxu0 0.0
        %855 = vmatpush1.msra.mxu0 0.0
        %856 = vmatprep.subr.mxu0 0.0
        %857 = vmatpush1.msra.mxu0 0.0
        %858 = vmatprep.subr.mxu0 0.0
        %859 = vmatpush1.msra.mxu0 0.0
        %860 = vmatprep.subr.mxu0 0.0
        %861 = vmatpush1.msra.mxu0 0.0
        %862 = vmatprep.subr.mxu0 0.0
        %863 = vmatpush1.msra.mxu0 0.0
        %864 = vmatprep.subr.mxu0 0.0
        %865 = vmatpush1.msra.mxu0 0.0
        %866 = vmatprep.subr.mxu0 0.0
        %867 = vmatpush1.msra.mxu0 0.0
        %868 = vmatprep.subr.mxu0 0.0
        %869 = vmatpush1.msra.mxu0 0.0
        %870 = vmatprep.subr.mxu0 0.0
        %871 = vmatpush1.msra.mxu0 0.0
        %872 = vmatprep.subr.mxu0 0.0
        %873 = vmatpush1.msra.mxu0 0.0
        %874 = vmatprep.subr.mxu0 0.0
        %875 = vmatpush1.msra.mxu0 0.0
        %876 = vmatprep.subr.mxu0 0.0
        %877 = vmatpush1.msra.mxu0 0.0
        %878 = vmatprep.subr.mxu0 0.0
        %879 = vmatpush1.msra.mxu0 0.0
        %880 = vmatprep.subr.mxu0 0.0
        %881 = vmatpush1.msra.mxu0 0.0
        %882 = vmatprep.subr.mxu0 0.0
        %883 = vmatpush1.msra.mxu0 0.0
        %884 = vmatprep.subr.mxu0 0.0
        %885 = vmatpush1.msra.mxu0 0.0
        %886 = vmatprep.subr.mxu0 0.0
        %887 = vmatpush1.msra.mxu0 0.0
        %888 = vmatprep.subr.mxu0 0.0
        %889 = vmatpush1.msra.mxu0 0.0
        %890 = vmatprep.subr.mxu0 0.0
        %891 = vmatpush1.msra.mxu0 0.0
        %892 = vmatprep.subr.mxu0 0.0
        %893 = vmatpush1.msra.mxu0 0.0
        %894 = vmatprep.subr.mxu0 0.0
        %895 = vmatpush1.msra.mxu0 0.0
        %896 = vmatprep.subr.mxu0 0.0
        %897 = vmatpush1.msra.mxu0 0.0
        %898 = vmatprep.subr.mxu0 0.0
        %899 = vmatpush1.msra.mxu0 0.0
        %900 = vmatprep.subr.mxu0 0.0
        %901 = vmatpush1.msra.mxu0 0.0
        %902 = vmatprep.subr.mxu0 0.0
        %903 = vmatpush1.msra.mxu0 0.0
        %904 = vmatprep.subr.mxu0 0.0
        %905 = vmatpush1.msra.mxu0 0.0
        %906 = vmatprep.mubr.f32.mxu0 0.0
        %907 = vmatmul.mubr.f32.gmra.mrb[0].mxu0 %v769
        %v908 = vpop.f32.mrb[0].mxu0
        %v909 = vadd.f32 0.0, %v908
        %v910 = vpop.f32.mrb[0].mxu0
        %v911 = vadd.f32 0.0, %v910
        %912 = vdwg.mxu0
        %v913 = vadd.f32 %v743, %v838
        %v914 = vadd.f32 %v744, %v840
        %v915 = vadd.f32 %v745, %v909
        %v916 = vadd.f32 %v746, %v911
        %s917 = scalar_lea.vmem %s1, 32
        %v918 = vld [vmem:[%s917] sm:$0xff]
        %919 = vrot.lane.b32.xlu0 %v257, 109
        %v920 = vpop.permute.xlu0 %919
        %921 = vrot.lane.b32.xlu0 %v258, 109
        %v922 = vpop.permute.xlu0 %921
        %923 = vrot.lane.b32.xlu0 %v259, 109
        %v924 = vpop.permute.xlu0 %923
        %925 = vrot.lane.b32.xlu0 %v260, 109
        %v926 = vpop.permute.xlu0 %925
        %927 = vrot.lane.b32.xlu0 %v261, 109
        %v928 = vpop.permute.xlu0 %927
        %vm929 = vcmask 891904
        %v930 = vsel %vm929, %v920, %v922
        %v931 = vsel %vm929, %v922, %v924
        %v932 = vsel %vm929, %v924, %v926
        %v933 = vsel %vm929, %v926, %v928
        %v939 = vsel %vm286, %v918, 0
        %941 = vmatprep.subr.mxu0 %v931
        %942 = vmatpush1.msra.mxu0 %v930
        %943 = vmatprep.subr.mxu0 0.0
        %944 = vmatpush1.msra.mxu0 0.0
        %945 = vmatprep.subr.mxu0 0.0
        %946 = vmatpush1.msra.mxu0 0.0
        %947 = vmatprep.subr.mxu0 0.0
        %948 = vmatpush1.msra.mxu0 0.0
        %949 = vmatprep.subr.mxu0 0.0
        %950 = vmatpush1.msra.mxu0 0.0
        %951 = vmatprep.subr.mxu0 0.0
        %952 = vmatpush1.msra.mxu0 0.0
        %953 = vmatprep.subr.mxu0 0.0
        %954 = vmatpush1.msra.mxu0 0.0
        %955 = vmatprep.subr.mxu0 0.0
        %956 = vmatpush1.msra.mxu0 0.0
        %957 = vmatprep.subr.mxu0 0.0
        %958 = vmatpush1.msra.mxu0 0.0
        %959 = vmatprep.subr.mxu0 0.0
        %960 = vmatpush1.msra.mxu0 0.0
        %961 = vmatprep.subr.mxu0 0.0
        %962 = vmatpush1.msra.mxu0 0.0
        %963 = vmatprep.subr.mxu0 0.0
        %964 = vmatpush1.msra.mxu0 0.0
        %965 = vmatprep.subr.mxu0 0.0
        %966 = vmatpush1.msra.mxu0 0.0
        %967 = vmatprep.subr.mxu0 0.0
        %968 = vmatpush1.msra.mxu0 0.0
        %969 = vmatprep.subr.mxu0 0.0
        %970 = vmatpush1.msra.mxu0 0.0
        %971 = vmatprep.subr.mxu0 0.0
        %972 = vmatpush1.msra.mxu0 0.0
        %973 = vmatprep.subr.mxu0 0.0
        %974 = vmatpush1.msra.mxu0 0.0
        %975 = vmatprep.subr.mxu0 0.0
        %976 = vmatpush1.msra.mxu0 0.0
        %977 = vmatprep.subr.mxu0 0.0
        %978 = vmatpush1.msra.mxu0 0.0
        %979 = vmatprep.subr.mxu0 0.0
        %980 = vmatpush1.msra.mxu0 0.0
        %981 = vmatprep.subr.mxu0 0.0
        %982 = vmatpush1.msra.mxu0 0.0
        %983 = vmatprep.subr.mxu0 0.0
        %984 = vmatpush1.msra.mxu0 0.0
        %985 = vmatprep.subr.mxu0 0.0
        %986 = vmatpush1.msra.mxu0 0.0
        %987 = vmatprep.subr.mxu0 0.0
        %988 = vmatpush1.msra.mxu0 0.0
        %989 = vmatprep.subr.mxu0 0.0
        %990 = vmatpush1.msra.mxu0 0.0
        %991 = vmatprep.subr.mxu0 0.0
        %992 = vmatpush1.msra.mxu0 0.0
        %993 = vmatprep.subr.mxu0 0.0
        %994 = vmatpush1.msra.mxu0 0.0
        %995 = vmatprep.subr.mxu0 0.0
        %996 = vmatpush1.msra.mxu0 0.0
        %997 = vmatprep.subr.mxu0 0.0
        %998 = vmatpush1.msra.mxu0 0.0
        %999 = vmatprep.subr.mxu0 0.0
        %1000 = vmatpush1.msra.mxu0 0.0
        %1001 = vmatprep.subr.mxu0 0.0
        %1002 = vmatpush1.msra.mxu0 0.0
        %1003 = vmatprep.subr.mxu0 0.0
        %1004 = vmatpush1.msra.mxu0 0.0
        %1005 = vmatprep.mubr.f32.mxu0 0.0
        %1006 = vmatmul.mubr.f32.gmra.mrb[0].mxu0 %v939
        %v1007 = vpop.f32.mrb[0].mxu0
        %v1008 = vadd.f32 0.0, %v1007
        %v1009 = vpop.f32.mrb[0].mxu0
        %v1010 = vadd.f32 0.0, %v1009
        %1011 = vdwg.mxu0
        %1012 = vmatprep.subr.mxu0 %v933
        %1013 = vmatpush1.msra.mxu0 %v932
        %1014 = vmatprep.subr.mxu0 0.0
        %1015 = vmatpush1.msra.mxu0 0.0
        %1016 = vmatprep.subr.mxu0 0.0
        %1017 = vmatpush1.msra.mxu0 0.0
        %1018 = vmatprep.subr.mxu0 0.0
        %1019 = vmatpush1.msra.mxu0 0.0
        %1020 = vmatprep.subr.mxu0 0.0
        %1021 = vmatpush1.msra.mxu0 0.0
        %1022 = vmatprep.subr.mxu0 0.0
        %1023 = vmatpush1.msra.mxu0 0.0
        %1024 = vmatprep.subr.mxu0 0.0
        %1025 = vmatpush1.msra.mxu0 0.0
        %1026 = vmatprep.subr.mxu0 0.0
        %1027 = vmatpush1.msra.mxu0 0.0
        %1028 = vmatprep.subr.mxu0 0.0
        %1029 = vmatpush1.msra.mxu0 0.0
        %1030 = vmatprep.subr.mxu0 0.0
        %1031 = vmatpush1.msra.mxu0 0.0
        %1032 = vmatprep.subr.mxu0 0.0
        %1033 = vmatpush1.msra.mxu0 0.0
        %1034 = vmatprep.subr.mxu0 0.0
        %1035 = vmatpush1.msra.mxu0 0.0
        %1036 = vmatprep.subr.mxu0 0.0
        %1037 = vmatpush1.msra.mxu0 0.0
        %1038 = vmatprep.subr.mxu0 0.0
        %1039 = vmatpush1.msra.mxu0 0.0
        %1040 = vmatprep.subr.mxu0 0.0
        %1041 = vmatpush1.msra.mxu0 0.0
        %1042 = vmatprep.subr.mxu0 0.0
        %1043 = vmatpush1.msra.mxu0 0.0
        %1044 = vmatprep.subr.mxu0 0.0
        %1045 = vmatpush1.msra.mxu0 0.0
        %1046 = vmatprep.subr.mxu0 0.0
        %1047 = vmatpush1.msra.mxu0 0.0
        %1048 = vmatprep.subr.mxu0 0.0
        %1049 = vmatpush1.msra.mxu0 0.0
        %1050 = vmatprep.subr.mxu0 0.0
        %1051 = vmatpush1.msra.mxu0 0.0
        %1052 = vmatprep.subr.mxu0 0.0
        %1053 = vmatpush1.msra.mxu0 0.0
        %1054 = vmatprep.subr.mxu0 0.0
        %1055 = vmatpush1.msra.mxu0 0.0
        %1056 = vmatprep.subr.mxu0 0.0
        %1057 = vmatpush1.msra.mxu0 0.0
        %1058 = vmatprep.subr.mxu0 0.0
        %1059 = vmatpush1.msra.mxu0 0.0
        %1060 = vmatprep.subr.mxu0 0.0
        %1061 = vmatpush1.msra.mxu0 0.0
        %1062 = vmatprep.subr.mxu0 0.0
        %1063 = vmatpush1.msra.mxu0 0.0
        %1064 = vmatprep.subr.mxu0 0.0
        %1065 = vmatpush1.msra.mxu0 0.0
        %1066 = vmatprep.subr.mxu0 0.0
        %1067 = vmatpush1.msra.mxu0 0.0
        %1068 = vmatprep.subr.mxu0 0.0
        %1069 = vmatpush1.msra.mxu0 0.0
        %1070 = vmatprep.subr.mxu0 0.0
        %1071 = vmatpush1.msra.mxu0 0.0
        %1072 = vmatprep.subr.mxu0 0.0
        %1073 = vmatpush1.msra.mxu0 0.0
        %1074 = vmatprep.subr.mxu0 0.0
        %1075 = vmatpush1.msra.mxu0 0.0
        %1076 = vmatprep.mubr.f32.mxu0 0.0
        %1077 = vmatmul.mubr.f32.gmra.mrb[0].mxu0 %v939
        %v1078 = vpop.f32.mrb[0].mxu0
        %v1079 = vadd.f32 0.0, %v1078
        %v1080 = vpop.f32.mrb[0].mxu0
        %v1081 = vadd.f32 0.0, %v1080
        %1082 = vdwg.mxu0
        %v1083 = vadd.f32 %v913, %v1008
        %v1084 = vadd.f32 %v914, %v1010
        %v1085 = vadd.f32 %v915, %v1079
        %v1086 = vadd.f32 %v916, %v1081
        %s1087 = scalar_lea.vmem %s1, 40
        %v1088 = vld [vmem:[%s1087] sm:$0xff]
        %1089 = vrot.lane.b32.xlu0 %v257, 108
        %v1090 = vpop.permute.xlu0 %1089
        %1091 = vrot.lane.b32.xlu0 %v258, 108
        %v1092 = vpop.permute.xlu0 %1091
        %1093 = vrot.lane.b32.xlu0 %v259, 108
        %v1094 = vpop.permute.xlu0 %1093
        %1095 = vrot.lane.b32.xlu0 %v260, 108
        %v1096 = vpop.permute.xlu0 %1095
        %1097 = vrot.lane.b32.xlu0 %v261, 108
        %v1098 = vpop.permute.xlu0 %1097
        %vm1099 = vcmask 883712
        %v1100 = vsel %vm1099, %v1090, %v1092
        %v1101 = vsel %vm1099, %v1092, %v1094
        %v1102 = vsel %vm1099, %v1094, %v1096
        %v1103 = vsel %vm1099, %v1096, %v1098
        %v1109 = vsel %vm286, %v1088, 0
        %1111 = vmatprep.subr.mxu0 %v1101
        %1112 = vmatpush1.msra.mxu0 %v1100
        %1113 = vmatprep.subr.mxu0 0.0
        %1114 = vmatpush1.msra.mxu0 0.0
        %1115 = vmatprep.subr.mxu0 0.0
        %1116 = vmatpush1.msra.mxu0 0.0
        %1117 = vmatprep.subr.mxu0 0.0
        %1118 = vmatpush1.msra.mxu0 0.0
        %1119 = vmatprep.subr.mxu0 0.0
        %1120 = vmatpush1.msra.mxu0 0.0
        %1121 = vmatprep.subr.mxu0 0.0
        %1122 = vmatpush1.msra.mxu0 0.0
        %1123 = vmatprep.subr.mxu0 0.0
        %1124 = vmatpush1.msra.mxu0 0.0
        %1125 = vmatprep.subr.mxu0 0.0
        %1126 = vmatpush1.msra.mxu0 0.0
        %1127 = vmatprep.subr.mxu0 0.0
        %1128 = vmatpush1.msra.mxu0 0.0
        %1129 = vmatprep.subr.mxu0 0.0
        %1130 = vmatpush1.msra.mxu0 0.0
        %1131 = vmatprep.subr.mxu0 0.0
        %1132 = vmatpush1.msra.mxu0 0.0
        %1133 = vmatprep.subr.mxu0 0.0
        %1134 = vmatpush1.msra.mxu0 0.0
        %1135 = vmatprep.subr.mxu0 0.0
        %1136 = vmatpush1.msra.mxu0 0.0
        %1137 = vmatprep.subr.mxu0 0.0
        %1138 = vmatpush1.msra.mxu0 0.0
        %1139 = vmatprep.subr.mxu0 0.0
        %1140 = vmatpush1.msra.mxu0 0.0
        %1141 = vmatprep.subr.mxu0 0.0
        %1142 = vmatpush1.msra.mxu0 0.0
        %1143 = vmatprep.subr.mxu0 0.0
        %1144 = vmatpush1.msra.mxu0 0.0
        %1145 = vmatprep.subr.mxu0 0.0
        %1146 = vmatpush1.msra.mxu0 0.0
        %1147 = vmatprep.subr.mxu0 0.0
        %1148 = vmatpush1.msra.mxu0 0.0
        %1149 = vmatprep.subr.mxu0 0.0
        %1150 = vmatpush1.msra.mxu0 0.0
        %1151 = vmatprep.subr.mxu0 0.0
        %1152 = vmatpush1.msra.mxu0 0.0
        %1153 = vmatprep.subr.mxu0 0.0
        %1154 = vmatpush1.msra.mxu0 0.0
        %1155 = vmatprep.subr.mxu0 0.0
        %1156 = vmatpush1.msra.mxu0 0.0
        %1157 = vmatprep.subr.mxu0 0.0
        %1158 = vmatpush1.msra.mxu0 0.0
        %1159 = vmatprep.subr.mxu0 0.0
        %1160 = vmatpush1.msra.mxu0 0.0
        %1161 = vmatprep.subr.mxu0 0.0
        %1162 = vmatpush1.msra.mxu0 0.0
        %1163 = vmatprep.subr.mxu0 0.0
        %1164 = vmatpush1.msra.mxu0 0.0
        %1165 = vmatprep.subr.mxu0 0.0
        %1166 = vmatpush1.msra.mxu0 0.0
        %1167 = vmatprep.subr.mxu0 0.0
        %1168 = vmatpush1.msra.mxu0 0.0
        %1169 = vmatprep.subr.mxu0 0.0
        %1170 = vmatpush1.msra.mxu0 0.0
        %1171 = vmatprep.subr.mxu0 0.0
        %1172 = vmatpush1.msra.mxu0 0.0
        %1173 = vmatprep.subr.mxu0 0.0
        %1174 = vmatpush1.msra.mxu0 0.0
        %1175 = vmatprep.mubr.f32.mxu0 0.0
        %1176 = vmatmul.mubr.f32.gmra.mrb[0].mxu0 %v1109
        %v1177 = vpop.f32.mrb[0].mxu0
        %v1178 = vadd.f32 0.0, %v1177
        %v1179 = vpop.f32.mrb[0].mxu0
        %v1180 = vadd.f32 0.0, %v1179
        %1181 = vdwg.mxu0
        %1182 = vmatprep.subr.mxu0 %v1103
        %1183 = vmatpush1.msra.mxu0 %v1102
        %1184 = vmatprep.subr.mxu0 0.0
        %1185 = vmatpush1.msra.mxu0 0.0
        %1186 = vmatprep.subr.mxu0 0.0
        %1187 = vmatpush1.msra.mxu0 0.0
        %1188 = vmatprep.subr.mxu0 0.0
        %1189 = vmatpush1.msra.mxu0 0.0
        %1190 = vmatprep.subr.mxu0 0.0
        %1191 = vmatpush1.msra.mxu0 0.0
        %1192 = vmatprep.subr.mxu0 0.0
        %1193 = vmatpush1.msra.mxu0 0.0
        %1194 = vmatprep.subr.mxu0 0.0
        %1195 = vmatpush1.msra.mxu0 0.0
        %1196 = vmatprep.subr.mxu0 0.0
        %1197 = vmatpush1.msra.mxu0 0.0
        %1198 = vmatprep.subr.mxu0 0.0
        %1199 = vmatpush1.msra.mxu0 0.0
        %1200 = vmatprep.subr.mxu0 0.0
        %1201 = vmatpush1.msra.mxu0 0.0
        %1202 = vmatprep.subr.mxu0 0.0
        %1203 = vmatpush1.msra.mxu0 0.0
        %1204 = vmatprep.subr.mxu0 0.0
        %1205 = vmatpush1.msra.mxu0 0.0
        %1206 = vmatprep.subr.mxu0 0.0
        %1207 = vmatpush1.msra.mxu0 0.0
        %1208 = vmatprep.subr.mxu0 0.0
        %1209 = vmatpush1.msra.mxu0 0.0
        %1210 = vmatprep.subr.mxu0 0.0
        %1211 = vmatpush1.msra.mxu0 0.0
        %1212 = vmatprep.subr.mxu0 0.0
        %1213 = vmatpush1.msra.mxu0 0.0
        %1214 = vmatprep.subr.mxu0 0.0
        %1215 = vmatpush1.msra.mxu0 0.0
        %1216 = vmatprep.subr.mxu0 0.0
        %1217 = vmatpush1.msra.mxu0 0.0
        %1218 = vmatprep.subr.mxu0 0.0
        %1219 = vmatpush1.msra.mxu0 0.0
        %1220 = vmatprep.subr.mxu0 0.0
        %1221 = vmatpush1.msra.mxu0 0.0
        %1222 = vmatprep.subr.mxu0 0.0
        %1223 = vmatpush1.msra.mxu0 0.0
        %1224 = vmatprep.subr.mxu0 0.0
        %1225 = vmatpush1.msra.mxu0 0.0
        %1226 = vmatprep.subr.mxu0 0.0
        %1227 = vmatpush1.msra.mxu0 0.0
        %1228 = vmatprep.subr.mxu0 0.0
        %1229 = vmatpush1.msra.mxu0 0.0
        %1230 = vmatprep.subr.mxu0 0.0
        %1231 = vmatpush1.msra.mxu0 0.0
        %1232 = vmatprep.subr.mxu0 0.0
        %1233 = vmatpush1.msra.mxu0 0.0
        %1234 = vmatprep.subr.mxu0 0.0
        %1235 = vmatpush1.msra.mxu0 0.0
        %1236 = vmatprep.subr.mxu0 0.0
        %1237 = vmatpush1.msra.mxu0 0.0
        %1238 = vmatprep.subr.mxu0 0.0
        %1239 = vmatpush1.msra.mxu0 0.0
        %1240 = vmatprep.subr.mxu0 0.0
        %1241 = vmatpush1.msra.mxu0 0.0
        %1242 = vmatprep.subr.mxu0 0.0
        %1243 = vmatpush1.msra.mxu0 0.0
        %1244 = vmatprep.subr.mxu0 0.0
        %1245 = vmatpush1.msra.mxu0 0.0
        %1246 = vmatprep.mubr.f32.mxu0 0.0
        %1247 = vmatmul.mubr.f32.gmra.mrb[0].mxu0 %v1109
        %v1248 = vpop.f32.mrb[0].mxu0
        %v1249 = vadd.f32 0.0, %v1248
        %v1250 = vpop.f32.mrb[0].mxu0
        %v1251 = vadd.f32 0.0, %v1250
        %1252 = vdwg.mxu0
        %v1253 = vadd.f32 %v1083, %v1178
        %v1254 = vadd.f32 %v1084, %v1180
        %v1255 = vadd.f32 %v1085, %v1249
        %v1256 = vadd.f32 %v1086, %v1251
        %s1257 = scalar_lea.vmem %s1, 48
        %v1258 = vld [vmem:[%s1257] sm:$0xff]
        %1259 = vrot.lane.b32.xlu0 %v257, 92
        %v1260 = vpop.permute.xlu0 %1259
        %1261 = vrot.lane.b32.xlu0 %v258, 92
        %v1262 = vpop.permute.xlu0 %1261
        %1263 = vrot.lane.b32.xlu0 %v259, 92
        %v1264 = vpop.permute.xlu0 %1263
        %1265 = vrot.lane.b32.xlu0 %v260, 92
        %v1266 = vpop.permute.xlu0 %1265
        %1267 = vrot.lane.b32.xlu0 %v261, 92
        %v1268 = vpop.permute.xlu0 %1267
        %vm1269 = vcmask 752640
        %v1270 = vsel %vm1269, %v1260, %v1262
        %v1271 = vsel %vm1269, %v1262, %v1264
        %v1272 = vsel %vm1269, %v1264, %v1266
        %v1273 = vsel %vm1269, %v1266, %v1268
        %v1279 = vsel %vm286, %v1258, 0
        %1281 = vmatprep.subr.mxu0 %v1271
        %1282 = vmatpush1.msra.mxu0 %v1270
        %1283 = vmatprep.subr.mxu0 0.0
        %1284 = vmatpush1.msra.mxu0 0.0
        %1285 = vmatprep.subr.mxu0 0.0
        %1286 = vmatpush1.msra.mxu0 0.0
        %1287 = vmatprep.subr.mxu0 0.0
        %1288 = vmatpush1.msra.mxu0 0.0
        %1289 = vmatprep.subr.mxu0 0.0
        %1290 = vmatpush1.msra.mxu0 0.0
        %1291 = vmatprep.subr.mxu0 0.0
        %1292 = vmatpush1.msra.mxu0 0.0
        %1293 = vmatprep.subr.mxu0 0.0
        %1294 = vmatpush1.msra.mxu0 0.0
        %1295 = vmatprep.subr.mxu0 0.0
        %1296 = vmatpush1.msra.mxu0 0.0
        %1297 = vmatprep.subr.mxu0 0.0
        %1298 = vmatpush1.msra.mxu0 0.0
        %1299 = vmatprep.subr.mxu0 0.0
        %1300 = vmatpush1.msra.mxu0 0.0
        %1301 = vmatprep.subr.mxu0 0.0
        %1302 = vmatpush1.msra.mxu0 0.0
        %1303 = vmatprep.subr.mxu0 0.0
        %1304 = vmatpush1.msra.mxu0 0.0
        %1305 = vmatprep.subr.mxu0 0.0
        %1306 = vmatpush1.msra.mxu0 0.0
        %1307 = vmatprep.subr.mxu0 0.0
        %1308 = vmatpush1.msra.mxu0 0.0
        %1309 = vmatprep.subr.mxu0 0.0
        %1310 = vmatpush1.msra.mxu0 0.0
        %1311 = vmatprep.subr.mxu0 0.0
        %1312 = vmatpush1.msra.mxu0 0.0
        %1313 = vmatprep.subr.mxu0 0.0
        %1314 = vmatpush1.msra.mxu0 0.0
        %1315 = vmatprep.subr.mxu0 0.0
        %1316 = vmatpush1.msra.mxu0 0.0
        %1317 = vmatprep.subr.mxu0 0.0
        %1318 = vmatpush1.msra.mxu0 0.0
        %1319 = vmatprep.subr.mxu0 0.0
        %1320 = vmatpush1.msra.mxu0 0.0
        %1321 = vmatprep.subr.mxu0 0.0
        %1322 = vmatpush1.msra.mxu0 0.0
        %1323 = vmatprep.subr.mxu0 0.0
        %1324 = vmatpush1.msra.mxu0 0.0
        %1325 = vmatprep.subr.mxu0 0.0
        %1326 = vmatpush1.msra.mxu0 0.0
        %1327 = vmatprep.subr.mxu0 0.0
        %1328 = vmatpush1.msra.mxu0 0.0
        %1329 = vmatprep.subr.mxu0 0.0
        %1330 = vmatpush1.msra.mxu0 0.0
        %1331 = vmatprep.subr.mxu0 0.0
        %1332 = vmatpush1.msra.mxu0 0.0
        %1333 = vmatprep.subr.mxu0 0.0
        %1334 = vmatpush1.msra.mxu0 0.0
        %1335 = vmatprep.subr.mxu0 0.0
        %1336 = vmatpush1.msra.mxu0 0.0
        %1337 = vmatprep.subr.mxu0 0.0
        %1338 = vmatpush1.msra.mxu0 0.0
        %1339 = vmatprep.subr.mxu0 0.0
        %1340 = vmatpush1.msra.mxu0 0.0
        %1341 = vmatprep.subr.mxu0 0.0
        %1342 = vmatpush1.msra.mxu0 0.0
        %1343 = vmatprep.subr.mxu0 0.0
        %1344 = vmatpush1.msra.mxu0 0.0
        %1345 = vmatprep.mubr.f32.mxu0 0.0
        %1346 = vmatmul.mubr.f32.gmra.mrb[0].mxu0 %v1279
        %v1347 = vpop.f32.mrb[0].mxu0
        %v1348 = vadd.f32 0.0, %v1347
        %v1349 = vpop.f32.mrb[0].mxu0
        %v1350 = vadd.f32 0.0, %v1349
        %1351 = vdwg.mxu0
        %1352 = vmatprep.subr.mxu0 %v1273
        %1353 = vmatpush1.msra.mxu0 %v1272
        %1354 = vmatprep.subr.mxu0 0.0
        %1355 = vmatpush1.msra.mxu0 0.0
        %1356 = vmatprep.subr.mxu0 0.0
        %1357 = vmatpush1.msra.mxu0 0.0
        %1358 = vmatprep.subr.mxu0 0.0
        %1359 = vmatpush1.msra.mxu0 0.0
        %1360 = vmatprep.subr.mxu0 0.0
        %1361 = vmatpush1.msra.mxu0 0.0
        %1362 = vmatprep.subr.mxu0 0.0
        %1363 = vmatpush1.msra.mxu0 0.0
        %1364 = vmatprep.subr.mxu0 0.0
        %1365 = vmatpush1.msra.mxu0 0.0
        %1366 = vmatprep.subr.mxu0 0.0
        %1367 = vmatpush1.msra.mxu0 0.0
        %1368 = vmatprep.subr.mxu0 0.0
        %1369 = vmatpush1.msra.mxu0 0.0
        %1370 = vmatprep.subr.mxu0 0.0
        %1371 = vmatpush1.msra.mxu0 0.0
        %1372 = vmatprep.subr.mxu0 0.0
        %1373 = vmatpush1.msra.mxu0 0.0
        %1374 = vmatprep.subr.mxu0 0.0
        %1375 = vmatpush1.msra.mxu0 0.0
        %1376 = vmatprep.subr.mxu0 0.0
        %1377 = vmatpush1.msra.mxu0 0.0
        %1378 = vmatprep.subr.mxu0 0.0
        %1379 = vmatpush1.msra.mxu0 0.0
        %1380 = vmatprep.subr.mxu0 0.0
        %1381 = vmatpush1.msra.mxu0 0.0
        %1382 = vmatprep.subr.mxu0 0.0
        %1383 = vmatpush1.msra.mxu0 0.0
        %1384 = vmatprep.subr.mxu0 0.0
        %1385 = vmatpush1.msra.mxu0 0.0
        %1386 = vmatprep.subr.mxu0 0.0
        %1387 = vmatpush1.msra.mxu0 0.0
        %1388 = vmatprep.subr.mxu0 0.0
        %1389 = vmatpush1.msra.mxu0 0.0
        %1390 = vmatprep.subr.mxu0 0.0
        %1391 = vmatpush1.msra.mxu0 0.0
        %1392 = vmatprep.subr.mxu0 0.0
        %1393 = vmatpush1.msra.mxu0 0.0
        %1394 = vmatprep.subr.mxu0 0.0
        %1395 = vmatpush1.msra.mxu0 0.0
        %1396 = vmatprep.subr.mxu0 0.0
        %1397 = vmatpush1.msra.mxu0 0.0
        %1398 = vmatprep.subr.mxu0 0.0
        %1399 = vmatpush1.msra.mxu0 0.0
        %1400 = vmatprep.subr.mxu0 0.0
        %1401 = vmatpush1.msra.mxu0 0.0
        %1402 = vmatprep.subr.mxu0 0.0
        %1403 = vmatpush1.msra.mxu0 0.0
        %1404 = vmatprep.subr.mxu0 0.0
        %1405 = vmatpush1.msra.mxu0 0.0
        %1406 = vmatprep.subr.mxu0 0.0
        %1407 = vmatpush1.msra.mxu0 0.0
        %1408 = vmatprep.subr.mxu0 0.0
        %1409 = vmatpush1.msra.mxu0 0.0
        %1410 = vmatprep.subr.mxu0 0.0
        %1411 = vmatpush1.msra.mxu0 0.0
        %1412 = vmatprep.subr.mxu0 0.0
        %1413 = vmatpush1.msra.mxu0 0.0
        %1414 = vmatprep.subr.mxu0 0.0
        %1415 = vmatpush1.msra.mxu0 0.0
        %1416 = vmatprep.mubr.f32.mxu0 0.0
        %1417 = vmatmul.mubr.f32.gmra.mrb[0].mxu0 %v1279
        %v1418 = vpop.f32.mrb[0].mxu0
        %v1419 = vadd.f32 0.0, %v1418
        %v1420 = vpop.f32.mrb[0].mxu0
        %v1421 = vadd.f32 0.0, %v1420
        %1422 = vdwg.mxu0
        %v1423 = vadd.f32 %v1253, %v1348
        %v1424 = vadd.f32 %v1254, %v1350
        %v1425 = vadd.f32 %v1255, %v1419
        %v1426 = vadd.f32 %v1256, %v1421
        %s1427 = scalar_lea.vmem %s1, 56
        %v1428 = vld [vmem:[%s1427] sm:$0xff]
        %1429 = vrot.lane.b32.xlu0 %v257, 91
        %v1430 = vpop.permute.xlu0 %1429
        %1431 = vrot.lane.b32.xlu0 %v258, 91
        %v1432 = vpop.permute.xlu0 %1431
        %1433 = vrot.lane.b32.xlu0 %v259, 91
        %v1434 = vpop.permute.xlu0 %1433
        %1435 = vrot.lane.b32.xlu0 %v260, 91
        %v1436 = vpop.permute.xlu0 %1435
        %1437 = vrot.lane.b32.xlu0 %v261, 91
        %v1438 = vpop.permute.xlu0 %1437
        %vm1439 = vcmask 744448
        %v1440 = vsel %vm1439, %v1430, %v1432
        %v1441 = vsel %vm1439, %v1432, %v1434
        %v1442 = vsel %vm1439, %v1434, %v1436
        %v1443 = vsel %vm1439, %v1436, %v1438
        %v1449 = vsel %vm286, %v1428, 0
        %1451 = vmatprep.subr.mxu0 %v1441
        %1452 = vmatpush1.msra.mxu0 %v1440
        %1453 = vmatprep.subr.mxu0 0.0
        %1454 = vmatpush1.msra.mxu0 0.0
        %1455 = vmatprep.subr.mxu0 0.0
        %1456 = vmatpush1.msra.mxu0 0.0
        %1457 = vmatprep.subr.mxu0 0.0
        %1458 = vmatpush1.msra.mxu0 0.0
        %1459 = vmatprep.subr.mxu0 0.0
        %1460 = vmatpush1.msra.mxu0 0.0
        %1461 = vmatprep.subr.mxu0 0.0
        %1462 = vmatpush1.msra.mxu0 0.0
        %1463 = vmatprep.subr.mxu0 0.0
        %1464 = vmatpush1.msra.mxu0 0.0
        %1465 = vmatprep.subr.mxu0 0.0
        %1466 = vmatpush1.msra.mxu0 0.0
        %1467 = vmatprep.subr.mxu0 0.0
        %1468 = vmatpush1.msra.mxu0 0.0
        %1469 = vmatprep.subr.mxu0 0.0
        %1470 = vmatpush1.msra.mxu0 0.0
        %1471 = vmatprep.subr.mxu0 0.0
        %1472 = vmatpush1.msra.mxu0 0.0
        %1473 = vmatprep.subr.mxu0 0.0
        %1474 = vmatpush1.msra.mxu0 0.0
        %1475 = vmatprep.subr.mxu0 0.0
        %1476 = vmatpush1.msra.mxu0 0.0
        %1477 = vmatprep.subr.mxu0 0.0
        %1478 = vmatpush1.msra.mxu0 0.0
        %1479 = vmatprep.subr.mxu0 0.0
        %1480 = vmatpush1.msra.mxu0 0.0
        %1481 = vmatprep.subr.mxu0 0.0
        %1482 = vmatpush1.msra.mxu0 0.0
        %1483 = vmatprep.subr.mxu0 0.0
        %1484 = vmatpush1.msra.mxu0 0.0
        %1485 = vmatprep.subr.mxu0 0.0
        %1486 = vmatpush1.msra.mxu0 0.0
        %1487 = vmatprep.subr.mxu0 0.0
        %1488 = vmatpush1.msra.mxu0 0.0
        %1489 = vmatprep.subr.mxu0 0.0
        %1490 = vmatpush1.msra.mxu0 0.0
        %1491 = vmatprep.subr.mxu0 0.0
        %1492 = vmatpush1.msra.mxu0 0.0
        %1493 = vmatprep.subr.mxu0 0.0
        %1494 = vmatpush1.msra.mxu0 0.0
        %1495 = vmatprep.subr.mxu0 0.0
        %1496 = vmatpush1.msra.mxu0 0.0
        %1497 = vmatprep.subr.mxu0 0.0
        %1498 = vmatpush1.msra.mxu0 0.0
        %1499 = vmatprep.subr.mxu0 0.0
        %1500 = vmatpush1.msra.mxu0 0.0
        %1501 = vmatprep.subr.mxu0 0.0
        %1502 = vmatpush1.msra.mxu0 0.0
        %1503 = vmatprep.subr.mxu0 0.0
        %1504 = vmatpush1.msra.mxu0 0.0
        %1505 = vmatprep.subr.mxu0 0.0
        %1506 = vmatpush1.msra.mxu0 0.0
        %1507 = vmatprep.subr.mxu0 0.0
        %1508 = vmatpush1.msra.mxu0 0.0
        %1509 = vmatprep.subr.mxu0 0.0
        %1510 = vmatpush1.msra.mxu0 0.0
        %1511 = vmatprep.subr.mxu0 0.0
        %1512 = vmatpush1.msra.mxu0 0.0
        %1513 = vmatprep.subr.mxu0 0.0
        %1514 = vmatpush1.msra.mxu0 0.0
        %1515 = vmatprep.mubr.f32.mxu0 0.0
        %1516 = vmatmul.mubr.f32.gmra.mrb[0].mxu0 %v1449
        %v1517 = vpop.f32.mrb[0].mxu0
        %v1518 = vadd.f32 0.0, %v1517
        %v1519 = vpop.f32.mrb[0].mxu0
        %v1520 = vadd.f32 0.0, %v1519
        %1521 = vdwg.mxu0
        %1522 = vmatprep.subr.mxu0 %v1443
        %1523 = vmatpush1.msra.mxu0 %v1442
        %1524 = vmatprep.subr.mxu0 0.0
        %1525 = vmatpush1.msra.mxu0 0.0
        %1526 = vmatprep.subr.mxu0 0.0
        %1527 = vmatpush1.msra.mxu0 0.0
        %1528 = vmatprep.subr.mxu0 0.0
        %1529 = vmatpush1.msra.mxu0 0.0
        %1530 = vmatprep.subr.mxu0 0.0
        %1531 = vmatpush1.msra.mxu0 0.0
        %1532 = vmatprep.subr.mxu0 0.0
        %1533 = vmatpush1.msra.mxu0 0.0
        %1534 = vmatprep.subr.mxu0 0.0
        %1535 = vmatpush1.msra.mxu0 0.0
        %1536 = vmatprep.subr.mxu0 0.0
        %1537 = vmatpush1.msra.mxu0 0.0
        %1538 = vmatprep.subr.mxu0 0.0
        %1539 = vmatpush1.msra.mxu0 0.0
        %1540 = vmatprep.subr.mxu0 0.0
        %1541 = vmatpush1.msra.mxu0 0.0
        %1542 = vmatprep.subr.mxu0 0.0
        %1543 = vmatpush1.msra.mxu0 0.0
        %1544 = vmatprep.subr.mxu0 0.0
        %1545 = vmatpush1.msra.mxu0 0.0
        %1546 = vmatprep.subr.mxu0 0.0
        %1547 = vmatpush1.msra.mxu0 0.0
        %1548 = vmatprep.subr.mxu0 0.0
        %1549 = vmatpush1.msra.mxu0 0.0
        %1550 = vmatprep.subr.mxu0 0.0
        %1551 = vmatpush1.msra.mxu0 0.0
        %1552 = vmatprep.subr.mxu0 0.0
        %1553 = vmatpush1.msra.mxu0 0.0
        %1554 = vmatprep.subr.mxu0 0.0
        %1555 = vmatpush1.msra.mxu0 0.0
        %1556 = vmatprep.subr.mxu0 0.0
        %1557 = vmatpush1.msra.mxu0 0.0
        %1558 = vmatprep.subr.mxu0 0.0
        %1559 = vmatpush1.msra.mxu0 0.0
        %1560 = vmatprep.subr.mxu0 0.0
        %1561 = vmatpush1.msra.mxu0 0.0
        %1562 = vmatprep.subr.mxu0 0.0
        %1563 = vmatpush1.msra.mxu0 0.0
        %1564 = vmatprep.subr.mxu0 0.0
        %1565 = vmatpush1.msra.mxu0 0.0
        %1566 = vmatprep.subr.mxu0 0.0
        %1567 = vmatpush1.msra.mxu0 0.0
        %1568 = vmatprep.subr.mxu0 0.0
        %1569 = vmatpush1.msra.mxu0 0.0
        %1570 = vmatprep.subr.mxu0 0.0
        %1571 = vmatpush1.msra.mxu0 0.0
        %1572 = vmatprep.subr.mxu0 0.0
        %1573 = vmatpush1.msra.mxu0 0.0
        %1574 = vmatprep.subr.mxu0 0.0
        %1575 = vmatpush1.msra.mxu0 0.0
        %1576 = vmatprep.subr.mxu0 0.0
        %1577 = vmatpush1.msra.mxu0 0.0
        %1578 = vmatprep.subr.mxu0 0.0
        %1579 = vmatpush1.msra.mxu0 0.0
        %1580 = vmatprep.subr.mxu0 0.0
        %1581 = vmatpush1.msra.mxu0 0.0
        %1582 = vmatprep.subr.mxu0 0.0
        %1583 = vmatpush1.msra.mxu0 0.0
        %1584 = vmatprep.subr.mxu0 0.0
        %1585 = vmatpush1.msra.mxu0 0.0
        %1586 = vmatprep.mubr.f32.mxu0 0.0
        %1587 = vmatmul.mubr.f32.gmra.mrb[0].mxu0 %v1449
        %v1588 = vpop.f32.mrb[0].mxu0
        %v1589 = vadd.f32 0.0, %v1588
        %v1590 = vpop.f32.mrb[0].mxu0
        %v1591 = vadd.f32 0.0, %v1590
        %1592 = vdwg.mxu0
        %v1593 = vadd.f32 %v1423, %v1518
        %v1594 = vadd.f32 %v1424, %v1520
        %v1595 = vadd.f32 %v1425, %v1589
        %v1596 = vadd.f32 %v1426, %v1591
        %s1597 = scalar_lea.vmem %s1, 64
        %v1598 = vld [vmem:[%s1597] sm:$0xff]
        %1599 = vrot.lane.b32.xlu0 %v257, 90
        %v1600 = vpop.permute.xlu0 %1599
        %1601 = vrot.lane.b32.xlu0 %v258, 90
        %v1602 = vpop.permute.xlu0 %1601
        %1603 = vrot.lane.b32.xlu0 %v259, 90
        %v1604 = vpop.permute.xlu0 %1603
        %1605 = vrot.lane.b32.xlu0 %v260, 90
        %v1606 = vpop.permute.xlu0 %1605
        %1607 = vrot.lane.b32.xlu0 %v261, 90
        %v1608 = vpop.permute.xlu0 %1607
        %vm1609 = vcmask 736256
        %v1610 = vsel %vm1609, %v1600, %v1602
        %v1611 = vsel %vm1609, %v1602, %v1604
        %v1612 = vsel %vm1609, %v1604, %v1606
        %v1613 = vsel %vm1609, %v1606, %v1608
        %v1619 = vsel %vm286, %v1598, 0
        %1621 = vmatprep.subr.mxu0 %v1611
        %1622 = vmatpush1.msra.mxu0 %v1610
        %1623 = vmatprep.subr.mxu0 0.0
        %1624 = vmatpush1.msra.mxu0 0.0
        %1625 = vmatprep.subr.mxu0 0.0
        %1626 = vmatpush1.msra.mxu0 0.0
        %1627 = vmatprep.subr.mxu0 0.0
        %1628 = vmatpush1.msra.mxu0 0.0
        %1629 = vmatprep.subr.mxu0 0.0
        %1630 = vmatpush1.msra.mxu0 0.0
        %1631 = vmatprep.subr.mxu0 0.0
        %1632 = vmatpush1.msra.mxu0 0.0
        %1633 = vmatprep.subr.mxu0 0.0
        %1634 = vmatpush1.msra.mxu0 0.0
        %1635 = vmatprep.subr.mxu0 0.0
        %1636 = vmatpush1.msra.mxu0 0.0
        %1637 = vmatprep.subr.mxu0 0.0
        %1638 = vmatpush1.msra.mxu0 0.0
        %1639 = vmatprep.subr.mxu0 0.0
        %1640 = vmatpush1.msra.mxu0 0.0
        %1641 = vmatprep.subr.mxu0 0.0
        %1642 = vmatpush1.msra.mxu0 0.0
        %1643 = vmatprep.subr.mxu0 0.0
        %1644 = vmatpush1.msra.mxu0 0.0
        %1645 = vmatprep.subr.mxu0 0.0
        %1646 = vmatpush1.msra.mxu0 0.0
        %1647 = vmatprep.subr.mxu0 0.0
        %1648 = vmatpush1.msra.mxu0 0.0
        %1649 = vmatprep.subr.mxu0 0.0
        %1650 = vmatpush1.msra.mxu0 0.0
        %1651 = vmatprep.subr.mxu0 0.0
        %1652 = vmatpush1.msra.mxu0 0.0
        %1653 = vmatprep.subr.mxu0 0.0
        %1654 = vmatpush1.msra.mxu0 0.0
        %1655 = vmatprep.subr.mxu0 0.0
        %1656 = vmatpush1.msra.mxu0 0.0
        %1657 = vmatprep.subr.mxu0 0.0
        %1658 = vmatpush1.msra.mxu0 0.0
        %1659 = vmatprep.subr.mxu0 0.0
        %1660 = vmatpush1.msra.mxu0 0.0
        %1661 = vmatprep.subr.mxu0 0.0
        %1662 = vmatpush1.msra.mxu0 0.0
        %1663 = vmatprep.subr.mxu0 0.0
        %1664 = vmatpush1.msra.mxu0 0.0
        %1665 = vmatprep.subr.mxu0 0.0
        %1666 = vmatpush1.msra.mxu0 0.0
        %1667 = vmatprep.subr.mxu0 0.0
        %1668 = vmatpush1.msra.mxu0 0.0
        %1669 = vmatprep.subr.mxu0 0.0
        %1670 = vmatpush1.msra.mxu0 0.0
        %1671 = vmatprep.subr.mxu0 0.0
        %1672 = vmatpush1.msra.mxu0 0.0
        %1673 = vmatprep.subr.mxu0 0.0
        %1674 = vmatpush1.msra.mxu0 0.0
        %1675 = vmatprep.subr.mxu0 0.0
        %1676 = vmatpush1.msra.mxu0 0.0
        %1677 = vmatprep.subr.mxu0 0.0
        %1678 = vmatpush1.msra.mxu0 0.0
        %1679 = vmatprep.subr.mxu0 0.0
        %1680 = vmatpush1.msra.mxu0 0.0
        %1681 = vmatprep.subr.mxu0 0.0
        %1682 = vmatpush1.msra.mxu0 0.0
        %1683 = vmatprep.subr.mxu0 0.0
        %1684 = vmatpush1.msra.mxu0 0.0
        %1685 = vmatprep.mubr.f32.mxu0 0.0
        %1686 = vmatmul.mubr.f32.gmra.mrb[0].mxu0 %v1619
        %v1687 = vpop.f32.mrb[0].mxu0
        %v1688 = vadd.f32 0.0, %v1687
        %v1689 = vpop.f32.mrb[0].mxu0
        %v1690 = vadd.f32 0.0, %v1689
        %1691 = vdwg.mxu0
        %1692 = vmatprep.subr.mxu0 %v1613
        %1693 = vmatpush1.msra.mxu0 %v1612
        %1694 = vmatprep.subr.mxu0 0.0
        %1695 = vmatpush1.msra.mxu0 0.0
        %1696 = vmatprep.subr.mxu0 0.0
        %1697 = vmatpush1.msra.mxu0 0.0
        %1698 = vmatprep.subr.mxu0 0.0
        %1699 = vmatpush1.msra.mxu0 0.0
        %1700 = vmatprep.subr.mxu0 0.0
        %1701 = vmatpush1.msra.mxu0 0.0
        %1702 = vmatprep.subr.mxu0 0.0
        %1703 = vmatpush1.msra.mxu0 0.0
        %1704 = vmatprep.subr.mxu0 0.0
        %1705 = vmatpush1.msra.mxu0 0.0
        %1706 = vmatprep.subr.mxu0 0.0
        %1707 = vmatpush1.msra.mxu0 0.0
        %1708 = vmatprep.subr.mxu0 0.0
        %1709 = vmatpush1.msra.mxu0 0.0
        %1710 = vmatprep.subr.mxu0 0.0
        %1711 = vmatpush1.msra.mxu0 0.0
        %1712 = vmatprep.subr.mxu0 0.0
        %1713 = vmatpush1.msra.mxu0 0.0
        %1714 = vmatprep.subr.mxu0 0.0
        %1715 = vmatpush1.msra.mxu0 0.0
        %1716 = vmatprep.subr.mxu0 0.0
        %1717 = vmatpush1.msra.mxu0 0.0
        %1718 = vmatprep.subr.mxu0 0.0
        %1719 = vmatpush1.msra.mxu0 0.0
        %1720 = vmatprep.subr.mxu0 0.0
        %1721 = vmatpush1.msra.mxu0 0.0
        %1722 = vmatprep.subr.mxu0 0.0
        %1723 = vmatpush1.msra.mxu0 0.0
        %1724 = vmatprep.subr.mxu0 0.0
        %1725 = vmatpush1.msra.mxu0 0.0
        %1726 = vmatprep.subr.mxu0 0.0
        %1727 = vmatpush1.msra.mxu0 0.0
        %1728 = vmatprep.subr.mxu0 0.0
        %1729 = vmatpush1.msra.mxu0 0.0
        %1730 = vmatprep.subr.mxu0 0.0
        %1731 = vmatpush1.msra.mxu0 0.0
        %1732 = vmatprep.subr.mxu0 0.0
        %1733 = vmatpush1.msra.mxu0 0.0
        %1734 = vmatprep.subr.mxu0 0.0
        %1735 = vmatpush1.msra.mxu0 0.0
        %1736 = vmatprep.subr.mxu0 0.0
        %1737 = vmatpush1.msra.mxu0 0.0
        %1738 = vmatprep.subr.mxu0 0.0
        %1739 = vmatpush1.msra.mxu0 0.0
        %1740 = vmatprep.subr.mxu0 0.0
        %1741 = vmatpush1.msra.mxu0 0.0
        %1742 = vmatprep.subr.mxu0 0.0
        %1743 = vmatpush1.msra.mxu0 0.0
        %1744 = vmatprep.subr.mxu0 0.0
        %1745 = vmatpush1.msra.mxu0 0.0
        %1746 = vmatprep.subr.mxu0 0.0
        %1747 = vmatpush1.msra.mxu0 0.0
        %1748 = vmatprep.subr.mxu0 0.0
        %1749 = vmatpush1.msra.mxu0 0.0
        %1750 = vmatprep.subr.mxu0 0.0
        %1751 = vmatpush1.msra.mxu0 0.0
        %1752 = vmatprep.subr.mxu0 0.0
        %1753 = vmatpush1.msra.mxu0 0.0
        %1754 = vmatprep.subr.mxu0 0.0
        %1755 = vmatpush1.msra.mxu0 0.0
        %1756 = vmatprep.mubr.f32.mxu0 0.0
        %1757 = vmatmul.mubr.f32.gmra.mrb[0].mxu0 %v1619
        %v1758 = vpop.f32.mrb[0].mxu0
        %v1759 = vadd.f32 0.0, %v1758
        %v1760 = vpop.f32.mrb[0].mxu0
        %v1761 = vadd.f32 0.0, %v1760
        %1762 = vdwg.mxu0
        %v1763 = vadd.f32 %v1593, %v1688
        %v1764 = vadd.f32 %v1594, %v1690
        %v1765 = vadd.f32 %v1595, %v1759
        %v1766 = vadd.f32 %v1596, %v1761
        %v1767 = vld [vmem:[%s2] sm:$0xff]
        %1769 = vset.pattern.permute.xlu0 0
        %1770 = vperm.xlu0 %1769, %v1767
        %v1771 = vpop.permute.xlu0 %1770
        %v1773 = vadd.f32 %v1763, %v1771
        %v1774 = vadd.f32 %v1764, %v1771
        %v1775 = vadd.f32 %v1765, %v1771
        %v1776 = vadd.f32 %v1766, %v1771
        %v1777 = vmax.f32 %v1773, 0.0
        %v1778 = vmax.f32 %v1774, 0.0
        %v1779 = vmax.f32 %v1775, 0.0
        %v1780 = vmax.f32 %v1776, 0.0
        %v1781 = vld [vmem:[%s3] sm:$0xf]
        %v1783 = vlaneseq
        %v1784 = vshrl.u32 %v1783, 7
        %v1785 = vsub.s32 0, %v1784
        %v1786 = vrot.slane %v1781, %v1785
        %v1787 = vlaneseq
        %v1788 = vshrl.u32 %v1787, 7
        %v1789 = vsub.s32 1, %v1788
        %v1790 = vrot.slane %v1781, %v1789
        %v1791 = vlaneseq
        %v1792 = vshrl.u32 %v1791, 7
        %v1793 = vsub.s32 2, %v1792
        %v1794 = vrot.slane %v1781, %v1793
        %v1795 = vlaneseq
        %v1796 = vshrl.u32 %v1795, 7
        %v1797 = vsub.s32 3, %v1796
        %v1798 = vrot.slane %v1781, %v1797
        %v1803 = vmul.f32 %v1777, %v1786
        %v1804 = vmul.f32 %v1778, %v1790
        %v1805 = vmul.f32 %v1779, %v1794
        %v1806 = vmul.f32 %v1780, %v1798
        %1807 = vst [vmem:[#allocation2] sm:$0xff] %v1803
        %1808 = vst [vmem:[#allocation2 + $0x8] sm:$0xff] %v1804
        %1809 = vst [vmem:[#allocation2 + $0x10] sm:$0xff] %v1805
        %1810 = vst [vmem:[#allocation2 + $0x18] sm:$0xff] %v1806
        %v1811 = vld [vmem:[%s4] sm:$0xff]
        %v1812 = vld [vmem:[#allocation2] sm:$0xff]
        %v1813 = vld [vmem:[#allocation2 + $0x8] sm:$0xff]
        %v1814 = vld [vmem:[#allocation2 + $0x10] sm:$0xff]
        %s1815 = scalar_lea.vmem %s4, 8
        %v1816 = vld [vmem:[%s1815] sm:$0xff]
        %v1817 = vld [vmem:[#allocation2] sm:$0xff]
        %v1818 = vld [vmem:[#allocation2 + $0x8] sm:$0xff]
        %v1819 = vld [vmem:[#allocation2 + $0x10] sm:$0xff]
        %v1820 = vld [vmem:[#allocation2 + $0x18] sm:$0xff]
        %1825 = vrot.lane.b32.xlu0 %v1817, 127
        %v1826 = vpop.permute.xlu0 %1825
        %1827 = vrot.lane.b32.xlu0 %v1818, 127
        %v1828 = vpop.permute.xlu0 %1827
        %1829 = vrot.lane.b32.xlu0 %v1819, 127
        %v1830 = vpop.permute.xlu0 %1829
        %1831 = vrot.lane.b32.xlu0 %v1820, 127
        %v1832 = vpop.permute.xlu0 %1831
        %v1833 = vsel %vm277, %v1826, %v1828
        %v1834 = vsel %vm277, %v1828, %v1830
        %v1835 = vsel %vm277, %v1830, %v1832
        %v1840 = vsel %vm286, %v1816, 0
        %1842 = vmatprep.subr.mxu0 %v1834
        %1843 = vmatpush1.msra.mxu0 %v1833
        %1844 = vmatprep.subr.mxu0 0.0
        %1845 = vmatpush1.msra.mxu0 0.0
        %1846 = vmatprep.subr.mxu0 0.0
        %1847 = vmatpush1.msra.mxu0 0.0
        %1848 = vmatprep.subr.mxu0 0.0
        %1849 = vmatpush1.msra.mxu0 0.0
        %1850 = vmatprep.subr.mxu0 0.0
        %1851 = vmatpush1.msra.mxu0 0.0
        %1852 = vmatprep.subr.mxu0 0.0
        %1853 = vmatpush1.msra.mxu0 0.0
        %1854 = vmatprep.subr.mxu0 0.0
        %1855 = vmatpush1.msra.mxu0 0.0
        %1856 = vmatprep.subr.mxu0 0.0
        %1857 = vmatpush1.msra.mxu0 0.0
        %1858 = vmatprep.subr.mxu0 0.0
        %1859 = vmatpush1.msra.mxu0 0.0
        %1860 = vmatprep.subr.mxu0 0.0
        %1861 = vmatpush1.msra.mxu0 0.0
        %1862 = vmatprep.subr.mxu0 0.0
        %1863 = vmatpush1.msra.mxu0 0.0
        %1864 = vmatprep.subr.mxu0 0.0
        %1865 = vmatpush1.msra.mxu0 0.0
        %1866 = vmatprep.subr.mxu0 0.0
        %1867 = vmatpush1.msra.mxu0 0.0
        %1868 = vmatprep.subr.mxu0 0.0
        %1869 = vmatpush1.msra.mxu0 0.0
        %1870 = vmatprep.subr.mxu0 0.0
        %1871 = vmatpush1.msra.mxu0 0.0
        %1872 = vmatprep.subr.mxu0 0.0
        %1873 = vmatpush1.msra.mxu0 0.0
        %1874 = vmatprep.subr.mxu0 0.0
        %1875 = vmatpush1.msra.mxu0 0.0
        %1876 = vmatprep.subr.mxu0 0.0
        %1877 = vmatpush1.msra.mxu0 0.0
        %1878 = vmatprep.subr.mxu0 0.0
        %1879 = vmatpush1.msra.mxu0 0.0
        %1880 = vmatprep.subr.mxu0 0.0
        %1881 = vmatpush1.msra.mxu0 0.0
        %1882 = vmatprep.subr.mxu0 0.0
        %1883 = vmatpush1.msra.mxu0 0.0
        %1884 = vmatprep.subr.mxu0 0.0
        %1885 = vmatpush1.msra.mxu0 0.0
        %1886 = vmatprep.subr.mxu0 0.0
        %1887 = vmatpush1.msra.mxu0 0.0
        %1888 = vmatprep.subr.mxu0 0.0
        %1889 = vmatpush1.msra.mxu0 0.0
        %1890 = vmatprep.subr.mxu0 0.0
        %1891 = vmatpush1.msra.mxu0 0.0
        %1892 = vmatprep.subr.mxu0 0.0
        %1893 = vmatpush1.msra.mxu0 0.0
        %1894 = vmatprep.subr.mxu0 0.0
        %1895 = vmatpush1.msra.mxu0 0.0
        %1896 = vmatprep.subr.mxu0 0.0
        %1897 = vmatpush1.msra.mxu0 0.0
        %1898 = vmatprep.subr.mxu0 0.0
        %1899 = vmatpush1.msra.mxu0 0.0
        %1900 = vmatprep.subr.mxu0 0.0
        %1901 = vmatpush1.msra.mxu0 0.0
        %1902 = vmatprep.subr.mxu0 0.0
        %1903 = vmatpush1.msra.mxu0 0.0
        %1904 = vmatprep.subr.mxu0 0.0
        %1905 = vmatpush1.msra.mxu0 0.0
        %1906 = vmatprep.mubr.f32.mxu0 0.0
        %1907 = vmatmul.mubr.f32.gmra.mrb[0].mxu0 %v1840
        %v1908 = vpop.f32.mrb[0].mxu0
        %v1909 = vadd.f32 0.0, %v1908
        %v1910 = vpop.f32.mrb[0].mxu0
        %v1911 = vadd.f32 0.0, %v1910
        %1912 = vdwg.mxu0
        %1913 = vmatprep.subr.mxu0 0.0
        %1914 = vmatpush1.msra.mxu0 %v1835
        %1915 = vmatprep.subr.mxu0 0.0
        %1916 = vmatpush1.msra.mxu0 0.0
        %1917 = vmatprep.subr.mxu0 0.0
        %1918 = vmatpush1.msra.mxu0 0.0
        %1919 = vmatprep.subr.mxu0 0.0
        %1920 = vmatpush1.msra.mxu0 0.0
        %1921 = vmatprep.subr.mxu0 0.0
        %1922 = vmatpush1.msra.mxu0 0.0
        %1923 = vmatprep.subr.mxu0 0.0
        %1924 = vmatpush1.msra.mxu0 0.0
        %1925 = vmatprep.subr.mxu0 0.0
        %1926 = vmatpush1.msra.mxu0 0.0
        %1927 = vmatprep.subr.mxu0 0.0
        %1928 = vmatpush1.msra.mxu0 0.0
        %1929 = vmatprep.subr.mxu0 0.0
        %1930 = vmatpush1.msra.mxu0 0.0
        %1931 = vmatprep.subr.mxu0 0.0
        %1932 = vmatpush1.msra.mxu0 0.0
        %1933 = vmatprep.subr.mxu0 0.0
        %1934 = vmatpush1.msra.mxu0 0.0
        %1935 = vmatprep.subr.mxu0 0.0
        %1936 = vmatpush1.msra.mxu0 0.0
        %1937 = vmatprep.subr.mxu0 0.0
        %1938 = vmatpush1.msra.mxu0 0.0
        %1939 = vmatprep.subr.mxu0 0.0
        %1940 = vmatpush1.msra.mxu0 0.0
        %1941 = vmatprep.subr.mxu0 0.0
        %1942 = vmatpush1.msra.mxu0 0.0
        %1943 = vmatprep.subr.mxu0 0.0
        %1944 = vmatpush1.msra.mxu0 0.0
        %1945 = vmatprep.subr.mxu0 0.0
        %1946 = vmatpush1.msra.mxu0 0.0
        %1947 = vmatprep.subr.mxu0 0.0
        %1948 = vmatpush1.msra.mxu0 0.0
        %1949 = vmatprep.subr.mxu0 0.0
        %1950 = vmatpush1.msra.mxu0 0.0
        %1951 = vmatprep.subr.mxu0 0.0
        %1952 = vmatpush1.msra.mxu0 0.0
        %1953 = vmatprep.subr.mxu0 0.0
        %1954 = vmatpush1.msra.mxu0 0.0
        %1955 = vmatprep.subr.mxu0 0.0
        %1956 = vmatpush1.msra.mxu0 0.0
        %1957 = vmatprep.subr.mxu0 0.0
        %1958 = vmatpush1.msra.mxu0 0.0
        %1959 = vmatprep.subr.mxu0 0.0
        %1960 = vmatpush1.msra.mxu0 0.0
        %1961 = vmatprep.subr.mxu0 0.0
        %1962 = vmatpush1.msra.mxu0 0.0
        %1963 = vmatprep.subr.mxu0 0.0
        %1964 = vmatpush1.msra.mxu0 0.0
        %1965 = vmatprep.subr.mxu0 0.0
        %1966 = vmatpush1.msra.mxu0 0.0
        %1967 = vmatprep.subr.mxu0 0.0
        %1968 = vmatpush1.msra.mxu0 0.0
        %1969 = vmatprep.subr.mxu0 0.0
        %1970 = vmatpush1.msra.mxu0 0.0
        %1971 = vmatprep.subr.mxu0 0.0
        %1972 = vmatpush1.msra.mxu0 0.0
        %1973 = vmatprep.subr.mxu0 0.0
        %1974 = vmatpush1.msra.mxu0 0.0
        %1975 = vmatprep.subr.mxu0 0.0
        %1976 = vmatpush1.msra.mxu0 0.0
        %1977 = vmatprep.mubr.f32.mxu0 0.0
        %1978 = vmatmul.mubr.f32.gmra.mrb[0].mxu0 %v1840
        %v1979 = vpop.f32.mrb[0].mxu0
        %v1980 = vadd.f32 0.0, %v1979
        %v1981 = vpop.f32.mrb[0].mxu0
        %1982 = vdwg.mxu0
        %v1984 = vsel %vm286, %v1811, 0
        %1986 = vmatprep.subr.mxu0 %v1813
        %1987 = vmatpush1.msra.mxu0 %v1812
        %1988 = vmatprep.subr.mxu0 0.0
        %1989 = vmatpush1.msra.mxu0 0.0
        %1990 = vmatprep.subr.mxu0 0.0
        %1991 = vmatpush1.msra.mxu0 0.0
        %1992 = vmatprep.subr.mxu0 0.0
        %1993 = vmatpush1.msra.mxu0 0.0
        %1994 = vmatprep.subr.mxu0 0.0
        %1995 = vmatpush1.msra.mxu0 0.0
        %1996 = vmatprep.subr.mxu0 0.0
        %1997 = vmatpush1.msra.mxu0 0.0
        %1998 = vmatprep.subr.mxu0 0.0
        %1999 = vmatpush1.msra.mxu0 0.0
        %2000 = vmatprep.subr.mxu0 0.0
        %2001 = vmatpush1.msra.mxu0 0.0
        %2002 = vmatprep.subr.mxu0 0.0
        %2003 = vmatpush1.msra.mxu0 0.0
        %2004 = vmatprep.subr.mxu0 0.0
        %2005 = vmatpush1.msra.mxu0 0.0
        %2006 = vmatprep.subr.mxu0 0.0
        %2007 = vmatpush1.msra.mxu0 0.0
        %2008 = vmatprep.subr.mxu0 0.0
        %2009 = vmatpush1.msra.mxu0 0.0
        %2010 = vmatprep.subr.mxu0 0.0
        %2011 = vmatpush1.msra.mxu0 0.0
        %2012 = vmatprep.subr.mxu0 0.0
        %2013 = vmatpush1.msra.mxu0 0.0
        %2014 = vmatprep.subr.mxu0 0.0
        %2015 = vmatpush1.msra.mxu0 0.0
        %2016 = vmatprep.subr.mxu0 0.0
        %2017 = vmatpush1.msra.mxu0 0.0
        %2018 = vmatprep.subr.mxu0 0.0
        %2019 = vmatpush1.msra.mxu0 0.0
        %2020 = vmatprep.subr.mxu0 0.0
        %2021 = vmatpush1.msra.mxu0 0.0
        %2022 = vmatprep.subr.mxu0 0.0
        %2023 = vmatpush1.msra.mxu0 0.0
        %2024 = vmatprep.subr.mxu0 0.0
        %2025 = vmatpush1.msra.mxu0 0.0
        %2026 = vmatprep.subr.mxu0 0.0
        %2027 = vmatpush1.msra.mxu0 0.0
        %2028 = vmatprep.subr.mxu0 0.0
        %2029 = vmatpush1.msra.mxu0 0.0
        %2030 = vmatprep.subr.mxu0 0.0
        %2031 = vmatpush1.msra.mxu0 0.0
        %2032 = vmatprep.subr.mxu0 0.0
        %2033 = vmatpush1.msra.mxu0 0.0
        %2034 = vmatprep.subr.mxu0 0.0
        %2035 = vmatpush1.msra.mxu0 0.0
        %2036 = vmatprep.subr.mxu0 0.0
        %2037 = vmatpush1.msra.mxu0 0.0
        %2038 = vmatprep.subr.mxu0 0.0
        %2039 = vmatpush1.msra.mxu0 0.0
        %2040 = vmatprep.subr.mxu0 0.0
        %2041 = vmatpush1.msra.mxu0 0.0
        %2042 = vmatprep.subr.mxu0 0.0
        %2043 = vmatpush1.msra.mxu0 0.0
        %2044 = vmatprep.subr.mxu0 0.0
        %2045 = vmatpush1.msra.mxu0 0.0
        %2046 = vmatprep.subr.mxu0 0.0
        %2047 = vmatpush1.msra.mxu0 0.0
        %2048 = vmatprep.subr.mxu0 0.0
        %2049 = vmatpush1.msra.mxu0 0.0
        %2050 = vmatprep.mubr.f32.mxu0 0.0
        %2051 = vmatmul.mubr.f32.gmra.mrb[0].mxu0 %v1984
        %v2052 = vpop.f32.mrb[0].mxu0
        %v2053 = vadd.f32 %v1909, %v2052
        %v2054 = vpop.f32.mrb[0].mxu0
        %v2055 = vadd.f32 %v1911, %v2054
        %2056 = vdwg.mxu0
        %2057 = vmatprep.subr.mxu0 0.0
        %2058 = vmatpush1.msra.mxu0 %v1814
        %2059 = vmatprep.subr.mxu0 0.0
        %2060 = vmatpush1.msra.mxu0 0.0
        %2061 = vmatprep.subr.mxu0 0.0
        %2062 = vmatpush1.msra.mxu0 0.0
        %2063 = vmatprep.subr.mxu0 0.0
        %2064 = vmatpush1.msra.mxu0 0.0
        %2065 = vmatprep.subr.mxu0 0.0
        %2066 = vmatpush1.msra.mxu0 0.0
        %2067 = vmatprep.subr.mxu0 0.0
        %2068 = vmatpush1.msra.mxu0 0.0
        %2069 = vmatprep.subr.mxu0 0.0
        %2070 = vmatpush1.msra.mxu0 0.0
        %2071 = vmatprep.subr.mxu0 0.0
        %2072 = vmatpush1.msra.mxu0 0.0
        %2073 = vmatprep.subr.mxu0 0.0
        %2074 = vmatpush1.msra.mxu0 0.0
        %2075 = vmatprep.subr.mxu0 0.0
        %2076 = vmatpush1.msra.mxu0 0.0
        %2077 = vmatprep.subr.mxu0 0.0
        %2078 = vmatpush1.msra.mxu0 0.0
        %2079 = vmatprep.subr.mxu0 0.0
        %2080 = vmatpush1.msra.mxu0 0.0
        %2081 = vmatprep.subr.mxu0 0.0
        %2082 = vmatpush1.msra.mxu0 0.0
        %2083 = vmatprep.subr.mxu0 0.0
        %2084 = vmatpush1.msra.mxu0 0.0
        %2085 = vmatprep.subr.mxu0 0.0
        %2086 = vmatpush1.msra.mxu0 0.0
        %2087 = vmatprep.subr.mxu0 0.0
        %2088 = vmatpush1.msra.mxu0 0.0
        %2089 = vmatprep.subr.mxu0 0.0
        %2090 = vmatpush1.msra.mxu0 0.0
        %2091 = vmatprep.subr.mxu0 0.0
        %2092 = vmatpush1.msra.mxu0 0.0
        %2093 = vmatprep.subr.mxu0 0.0
        %2094 = vmatpush1.msra.mxu0 0.0
        %2095 = vmatprep.subr.mxu0 0.0
        %2096 = vmatpush1.msra.mxu0 0.0
        %2097 = vmatprep.subr.mxu0 0.0
        %2098 = vmatpush1.msra.mxu0 0.0
        %2099 = vmatprep.subr.mxu0 0.0
        %2100 = vmatpush1.msra.mxu0 0.0
        %2101 = vmatprep.subr.mxu0 0.0
        %2102 = vmatpush1.msra.mxu0 0.0
        %2103 = vmatprep.subr.mxu0 0.0
        %2104 = vmatpush1.msra.mxu0 0.0
        %2105 = vmatprep.subr.mxu0 0.0
        %2106 = vmatpush1.msra.mxu0 0.0
        %2107 = vmatprep.subr.mxu0 0.0
        %2108 = vmatpush1.msra.mxu0 0.0
        %2109 = vmatprep.subr.mxu0 0.0
        %2110 = vmatpush1.msra.mxu0 0.0
        %2111 = vmatprep.subr.mxu0 0.0
        %2112 = vmatpush1.msra.mxu0 0.0
        %2113 = vmatprep.subr.mxu0 0.0
        %2114 = vmatpush1.msra.mxu0 0.0
        %2115 = vmatprep.subr.mxu0 0.0
        %2116 = vmatpush1.msra.mxu0 0.0
        %2117 = vmatprep.subr.mxu0 0.0
        %2118 = vmatpush1.msra.mxu0 0.0
        %2119 = vmatprep.subr.mxu0 0.0
        %2120 = vmatpush1.msra.mxu0 0.0
        %2121 = vmatprep.mubr.f32.mxu0 0.0
        %2122 = vmatmul.mubr.f32.gmra.mrb[0].mxu0 %v1984
        %v2123 = vpop.f32.mrb[0].mxu0
        %v2124 = vadd.f32 %v1980, %v2123
        %v2125 = vpop.f32.mrb[0].mxu0
        %2126 = vdwg.mxu0
        %s2127 = scalar_lea.vmem %s4, 16
        %v2128 = vld [vmem:[%s2127] sm:$0xff]
        %2129 = vrot.lane.b32.xlu0 %v1817, 126
        %v2130 = vpop.permute.xlu0 %2129
        %2131 = vrot.lane.b32.xlu0 %v1818, 126
        %v2132 = vpop.permute.xlu0 %2131
        %2133 = vrot.lane.b32.xlu0 %v1819, 126
        %v2134 = vpop.permute.xlu0 %2133
        %2135 = vrot.lane.b32.xlu0 %v1820, 126
        %v2136 = vpop.permute.xlu0 %2135
        %v2137 = vsel %vm589, %v2130, %v2132
        %v2138 = vsel %vm589, %v2132, %v2134
        %v2139 = vsel %vm589, %v2134, %v2136
        %v2144 = vsel %vm286, %v2128, 0
        %2146 = vmatprep.subr.mxu0 %v2138
        %2147 = vmatpush1.msra.mxu0 %v2137
        %2148 = vmatprep.subr.mxu0 0.0
        %2149 = vmatpush1.msra.mxu0 0.0
        %2150 = vmatprep.subr.mxu0 0.0
        %2151 = vmatpush1.msra.mxu0 0.0
        %2152 = vmatprep.subr.mxu0 0.0
        %2153 = vmatpush1.msra.mxu0 0.0
        %2154 = vmatprep.subr.mxu0 0.0
        %2155 = vmatpush1.msra.mxu0 0.0
        %2156 = vmatprep.subr.mxu0 0.0
        %2157 = vmatpush1.msra.mxu0 0.0
        %2158 = vmatprep.subr.mxu0 0.0
        %2159 = vmatpush1.msra.mxu0 0.0
        %2160 = vmatprep.subr.mxu0 0.0
        %2161 = vmatpush1.msra.mxu0 0.0
        %2162 = vmatprep.subr.mxu0 0.0
        %2163 = vmatpush1.msra.mxu0 0.0
        %2164 = vmatprep.subr.mxu0 0.0
        %2165 = vmatpush1.msra.mxu0 0.0
        %2166 = vmatprep.subr.mxu0 0.0
        %2167 = vmatpush1.msra.mxu0 0.0
        %2168 = vmatprep.subr.mxu0 0.0
        %2169 = vmatpush1.msra.mxu0 0.0
        %2170 = vmatprep.subr.mxu0 0.0
        %2171 = vmatpush1.msra.mxu0 0.0
        %2172 = vmatprep.subr.mxu0 0.0
        %2173 = vmatpush1.msra.mxu0 0.0
        %2174 = vmatprep.subr.mxu0 0.0
        %2175 = vmatpush1.msra.mxu0 0.0
        %2176 = vmatprep.subr.mxu0 0.0
        %2177 = vmatpush1.msra.mxu0 0.0
        %2178 = vmatprep.subr.mxu0 0.0
        %2179 = vmatpush1.msra.mxu0 0.0
        %2180 = vmatprep.subr.mxu0 0.0
        %2181 = vmatpush1.msra.mxu0 0.0
        %2182 = vmatprep.subr.mxu0 0.0
        %2183 = vmatpush1.msra.mxu0 0.0
        %2184 = vmatprep.subr.mxu0 0.0
        %2185 = vmatpush1.msra.mxu0 0.0
        %2186 = vmatprep.subr.mxu0 0.0
        %2187 = vmatpush1.msra.mxu0 0.0
        %2188 = vmatprep.subr.mxu0 0.0
        %2189 = vmatpush1.msra.mxu0 0.0
        %2190 = vmatprep.subr.mxu0 0.0
        %2191 = vmatpush1.msra.mxu0 0.0
        %2192 = vmatprep.subr.mxu0 0.0
        %2193 = vmatpush1.msra.mxu0 0.0
        %2194 = vmatprep.subr.mxu0 0.0
        %2195 = vmatpush1.msra.mxu0 0.0
        %2196 = vmatprep.subr.mxu0 0.0
        %2197 = vmatpush1.msra.mxu0 0.0
        %2198 = vmatprep.subr.mxu0 0.0
        %2199 = vmatpush1.msra.mxu0 0.0
        %2200 = vmatprep.subr.mxu0 0.0
        %2201 = vmatpush1.msra.mxu0 0.0
        %2202 = vmatprep.subr.mxu0 0.0
        %2203 = vmatpush1.msra.mxu0 0.0
        %2204 = vmatprep.subr.mxu0 0.0
        %2205 = vmatpush1.msra.mxu0 0.0
        %2206 = vmatprep.subr.mxu0 0.0
        %2207 = vmatpush1.msra.mxu0 0.0
        %2208 = vmatprep.subr.mxu0 0.0
        %2209 = vmatpush1.msra.mxu0 0.0
        %2210 = vmatprep.mubr.f32.mxu0 0.0
        %2211 = vmatmul.mubr.f32.gmra.mrb[0].mxu0 %v2144
        %v2212 = vpop.f32.mrb[0].mxu0
        %v2213 = vadd.f32 0.0, %v2212
        %v2214 = vpop.f32.mrb[0].mxu0
        %v2215 = vadd.f32 0.0, %v2214
        %2216 = vdwg.mxu0
        %2217 = vmatprep.subr.mxu0 0.0
        %2218 = vmatpush1.msra.mxu0 %v2139
        %2219 = vmatprep.subr.mxu0 0.0
        %2220 = vmatpush1.msra.mxu0 0.0
        %2221 = vmatprep.subr.mxu0 0.0
        %2222 = vmatpush1.msra.mxu0 0.0
        %2223 = vmatprep.subr.mxu0 0.0
        %2224 = vmatpush1.msra.mxu0 0.0
        %2225 = vmatprep.subr.mxu0 0.0
        %2226 = vmatpush1.msra.mxu0 0.0
        %2227 = vmatprep.subr.mxu0 0.0
        %2228 = vmatpush1.msra.mxu0 0.0
        %2229 = vmatprep.subr.mxu0 0.0
        %2230 = vmatpush1.msra.mxu0 0.0
        %2231 = vmatprep.subr.mxu0 0.0
        %2232 = vmatpush1.msra.mxu0 0.0
        %2233 = vmatprep.subr.mxu0 0.0
        %2234 = vmatpush1.msra.mxu0 0.0
        %2235 = vmatprep.subr.mxu0 0.0
        %2236 = vmatpush1.msra.mxu0 0.0
        %2237 = vmatprep.subr.mxu0 0.0
        %2238 = vmatpush1.msra.mxu0 0.0
        %2239 = vmatprep.subr.mxu0 0.0
        %2240 = vmatpush1.msra.mxu0 0.0
        %2241 = vmatprep.subr.mxu0 0.0
        %2242 = vmatpush1.msra.mxu0 0.0
        %2243 = vmatprep.subr.mxu0 0.0
        %2244 = vmatpush1.msra.mxu0 0.0
        %2245 = vmatprep.subr.mxu0 0.0
        %2246 = vmatpush1.msra.mxu0 0.0
        %2247 = vmatprep.subr.mxu0 0.0
        %2248 = vmatpush1.msra.mxu0 0.0
        %2249 = vmatprep.subr.mxu0 0.0
        %2250 = vmatpush1.msra.mxu0 0.0
        %2251 = vmatprep.subr.mxu0 0.0
        %2252 = vmatpush1.msra.mxu0 0.0
        %2253 = vmatprep.subr.mxu0 0.0
        %2254 = vmatpush1.msra.mxu0 0.0
        %2255 = vmatprep.subr.mxu0 0.0
        %2256 = vmatpush1.msra.mxu0 0.0
        %2257 = vmatprep.subr.mxu0 0.0
        %2258 = vmatpush1.msra.mxu0 0.0
        %2259 = vmatprep.subr.mxu0 0.0
        %2260 = vmatpush1.msra.mxu0 0.0
        %2261 = vmatprep.subr.mxu0 0.0
        %2262 = vmatpush1.msra.mxu0 0.0
        %2263 = vmatprep.subr.mxu0 0.0
        %2264 = vmatpush1.msra.mxu0 0.0
        %2265 = vmatprep.subr.mxu0 0.0
        %2266 = vmatpush1.msra.mxu0 0.0
        %2267 = vmatprep.subr.mxu0 0.0
        %2268 = vmatpush1.msra.mxu0 0.0
        %2269 = vmatprep.subr.mxu0 0.0
        %2270 = vmatpush1.msra.mxu0 0.0
        %2271 = vmatprep.subr.mxu0 0.0
        %2272 = vmatpush1.msra.mxu0 0.0
        %2273 = vmatprep.subr.mxu0 0.0
        %2274 = vmatpush1.msra.mxu0 0.0
        %2275 = vmatprep.subr.mxu0 0.0
        %2276 = vmatpush1.msra.mxu0 0.0
        %2277 = vmatprep.subr.mxu0 0.0
        %2278 = vmatpush1.msra.mxu0 0.0
        %2279 = vmatprep.subr.mxu0 0.0
        %2280 = vmatpush1.msra.mxu0 0.0
        %2281 = vmatprep.mubr.f32.mxu0 0.0
        %2282 = vmatmul.mubr.f32.gmra.mrb[0].mxu0 %v2144
        %v2283 = vpop.f32.mrb[0].mxu0
        %v2284 = vadd.f32 0.0, %v2283
        %v2285 = vpop.f32.mrb[0].mxu0
        %2286 = vdwg.mxu0
        %v2287 = vadd.f32 %v2053, %v2213
        %v2288 = vadd.f32 %v2055, %v2215
        %v2289 = vadd.f32 %v2124, %v2284
        %s2290 = scalar_lea.vmem %s4, 24
        %v2291 = vld [vmem:[%s2290] sm:$0xff]
        %2292 = vrot.lane.b32.xlu0 %v1817, 110
        %v2293 = vpop.permute.xlu0 %2292
        %2294 = vrot.lane.b32.xlu0 %v1818, 110
        %v2295 = vpop.permute.xlu0 %2294
        %2296 = vrot.lane.b32.xlu0 %v1819, 110
        %v2297 = vpop.permute.xlu0 %2296
        %2298 = vrot.lane.b32.xlu0 %v1820, 110
        %v2299 = vpop.permute.xlu0 %2298
        %v2300 = vsel %vm759, %v2293, %v2295
        %v2301 = vsel %vm759, %v2295, %v2297
        %v2302 = vsel %vm759, %v2297, %v2299
        %v2307 = vsel %vm286, %v2291, 0
        %2309 = vmatprep.subr.mxu0 %v2301
        %2310 = vmatpush1.msra.mxu0 %v2300
        %2311 = vmatprep.subr.mxu0 0.0
        %2312 = vmatpush1.msra.mxu0 0.0
        %2313 = vmatprep.subr.mxu0 0.0
        %2314 = vmatpush1.msra.mxu0 0.0
        %2315 = vmatprep.subr.mxu0 0.0
        %2316 = vmatpush1.msra.mxu0 0.0
        %2317 = vmatprep.subr.mxu0 0.0
        %2318 = vmatpush1.msra.mxu0 0.0
        %2319 = vmatprep.subr.mxu0 0.0
        %2320 = vmatpush1.msra.mxu0 0.0
        %2321 = vmatprep.subr.mxu0 0.0
        %2322 = vmatpush1.msra.mxu0 0.0
        %2323 = vmatprep.subr.mxu0 0.0
        %2324 = vmatpush1.msra.mxu0 0.0
        %2325 = vmatprep.subr.mxu0 0.0
        %2326 = vmatpush1.msra.mxu0 0.0
        %2327 = vmatprep.subr.mxu0 0.0
        %2328 = vmatpush1.msra.mxu0 0.0
        %2329 = vmatprep.subr.mxu0 0.0
        %2330 = vmatpush1.msra.mxu0 0.0
        %2331 = vmatprep.subr.mxu0 0.0
        %2332 = vmatpush1.msra.mxu0 0.0
        %2333 = vmatprep.subr.mxu0 0.0
        %2334 = vmatpush1.msra.mxu0 0.0
        %2335 = vmatprep.subr.mxu0 0.0
        %2336 = vmatpush1.msra.mxu0 0.0
        %2337 = vmatprep.subr.mxu0 0.0
        %2338 = vmatpush1.msra.mxu0 0.0
        %2339 = vmatprep.subr.mxu0 0.0
        %2340 = vmatpush1.msra.mxu0 0.0
        %2341 = vmatprep.subr.mxu0 0.0
        %2342 = vmatpush1.msra.mxu0 0.0
        %2343 = vmatprep.subr.mxu0 0.0
        %2344 = vmatpush1.msra.mxu0 0.0
        %2345 = vmatprep.subr.mxu0 0.0
        %2346 = vmatpush1.msra.mxu0 0.0
        %2347 = vmatprep.subr.mxu0 0.0
        %2348 = vmatpush1.msra.mxu0 0.0
        %2349 = vmatprep.subr.mxu0 0.0
        %2350 = vmatpush1.msra.mxu0 0.0
        %2351 = vmatprep.subr.mxu0 0.0
        %2352 = vmatpush1.msra.mxu0 0.0
        %2353 = vmatprep.subr.mxu0 0.0
        %2354 = vmatpush1.msra.mxu0 0.0
        %2355 = vmatprep.subr.mxu0 0.0
        %2356 = vmatpush1.msra.mxu0 0.0
        %2357 = vmatprep.subr.mxu0 0.0
        %2358 = vmatpush1.msra.mxu0 0.0
        %2359 = vmatprep.subr.mxu0 0.0
        %2360 = vmatpush1.msra.mxu0 0.0
        %2361 = vmatprep.subr.mxu0 0.0
        %2362 = vmatpush1.msra.mxu0 0.0
        %2363 = vmatprep.subr.mxu0 0.0
        %2364 = vmatpush1.msra.mxu0 0.0
        %2365 = vmatprep.subr.mxu0 0.0
        %2366 = vmatpush1.msra.mxu0 0.0
        %2367 = vmatprep.subr.mxu0 0.0
        %2368 = vmatpush1.msra.mxu0 0.0
        %2369 = vmatprep.subr.mxu0 0.0
        %2370 = vmatpush1.msra.mxu0 0.0
        %2371 = vmatprep.subr.mxu0 0.0
        %2372 = vmatpush1.msra.mxu0 0.0
        %2373 = vmatprep.mubr.f32.mxu0 0.0
        %2374 = vmatmul.mubr.f32.gmra.mrb[0].mxu0 %v2307
        %v2375 = vpop.f32.mrb[0].mxu0
        %v2376 = vadd.f32 0.0, %v2375
        %v2377 = vpop.f32.mrb[0].mxu0
        %v2378 = vadd.f32 0.0, %v2377
        %2379 = vdwg.mxu0
        %2380 = vmatprep.subr.mxu0 0.0
        %2381 = vmatpush1.msra.mxu0 %v2302
        %2382 = vmatprep.subr.mxu0 0.0
        %2383 = vmatpush1.msra.mxu0 0.0
        %2384 = vmatprep.subr.mxu0 0.0
        %2385 = vmatpush1.msra.mxu0 0.0
        %2386 = vmatprep.subr.mxu0 0.0
        %2387 = vmatpush1.msra.mxu0 0.0
        %2388 = vmatprep.subr.mxu0 0.0
        %2389 = vmatpush1.msra.mxu0 0.0
        %2390 = vmatprep.subr.mxu0 0.0
        %2391 = vmatpush1.msra.mxu0 0.0
        %2392 = vmatprep.subr.mxu0 0.0
        %2393 = vmatpush1.msra.mxu0 0.0
        %2394 = vmatprep.subr.mxu0 0.0
        %2395 = vmatpush1.msra.mxu0 0.0
        %2396 = vmatprep.subr.mxu0 0.0
        %2397 = vmatpush1.msra.mxu0 0.0
        %2398 = vmatprep.subr.mxu0 0.0
        %2399 = vmatpush1.msra.mxu0 0.0
        %2400 = vmatprep.subr.mxu0 0.0
        %2401 = vmatpush1.msra.mxu0 0.0
        %2402 = vmatprep.subr.mxu0 0.0
        %2403 = vmatpush1.msra.mxu0 0.0
        %2404 = vmatprep.subr.mxu0 0.0
        %2405 = vmatpush1.msra.mxu0 0.0
        %2406 = vmatprep.subr.mxu0 0.0
        %2407 = vmatpush1.msra.mxu0 0.0
        %2408 = vmatprep.subr.mxu0 0.0
        %2409 = vmatpush1.msra.mxu0 0.0
        %2410 = vmatprep.subr.mxu0 0.0
        %2411 = vmatpush1.msra.mxu0 0.0
        %2412 = vmatprep.subr.mxu0 0.0
        %2413 = vmatpush1.msra.mxu0 0.0
        %2414 = vmatprep.subr.mxu0 0.0
        %2415 = vmatpush1.msra.mxu0 0.0
        %2416 = vmatprep.subr.mxu0 0.0
        %2417 = vmatpush1.msra.mxu0 0.0
        %2418 = vmatprep.subr.mxu0 0.0
        %2419 = vmatpush1.msra.mxu0 0.0
        %2420 = vmatprep.subr.mxu0 0.0
        %2421 = vmatpush1.msra.mxu0 0.0
        %2422 = vmatprep.subr.mxu0 0.0
        %2423 = vmatpush1.msra.mxu0 0.0
        %2424 = vmatprep.subr.mxu0 0.0
        %2425 = vmatpush1.msra.mxu0 0.0
        %2426 = vmatprep.subr.mxu0 0.0
        %2427 = vmatpush1.msra.mxu0 0.0
        %2428 = vmatprep.subr.mxu0 0.0
        %2429 = vmatpush1.msra.mxu0 0.0
        %2430 = vmatprep.subr.mxu0 0.0
        %2431 = vmatpush1.msra.mxu0 0.0
        %2432 = vmatprep.subr.mxu0 0.0
        %2433 = vmatpush1.msra.mxu0 0.0
        %2434 = vmatprep.subr.mxu0 0.0
        %2435 = vmatpush1.msra.mxu0 0.0
        %2436 = vmatprep.subr.mxu0 0.0
        %2437 = vmatpush1.msra.mxu0 0.0
        %2438 = vmatprep.subr.mxu0 0.0
        %2439 = vmatpush1.msra.mxu0 0.0
        %2440 = vmatprep.subr.mxu0 0.0
        %2441 = vmatpush1.msra.mxu0 0.0
        %2442 = vmatprep.subr.mxu0 0.0
        %2443 = vmatpush1.msra.mxu0 0.0
        %2444 = vmatprep.mubr.f32.mxu0 0.0
        %2445 = vmatmul.mubr.f32.gmra.mrb[0].mxu0 %v2307
        %v2446 = vpop.f32.mrb[0].mxu0
        %v2447 = vadd.f32 0.0, %v2446
        %v2448 = vpop.f32.mrb[0].mxu0
        %2449 = vdwg.mxu0
        %v2450 = vadd.f32 %v2287, %v2376
        %v2451 = vadd.f32 %v2288, %v2378
        %v2452 = vadd.f32 %v2289, %v2447
        %s2453 = scalar_lea.vmem %s4, 32
        %v2454 = vld [vmem:[%s2453] sm:$0xff]
        %2455 = vrot.lane.b32.xlu0 %v1817, 109
        %v2456 = vpop.permute.xlu0 %2455
        %2457 = vrot.lane.b32.xlu0 %v1818, 109
        %v2458 = vpop.permute.xlu0 %2457
        %2459 = vrot.lane.b32.xlu0 %v1819, 109
        %v2460 = vpop.permute.xlu0 %2459
        %2461 = vrot.lane.b32.xlu0 %v1820, 109
        %v2462 = vpop.permute.xlu0 %2461
        %v2463 = vsel %vm929, %v2456, %v2458
        %v2464 = vsel %vm929, %v2458, %v2460
        %v2465 = vsel %vm929, %v2460, %v2462
        %v2470 = vsel %vm286, %v2454, 0
        %2472 = vmatprep.subr.mxu0 %v2464
        %2473 = vmatpush1.msra.mxu0 %v2463
        %2474 = vmatprep.subr.mxu0 0.0
        %2475 = vmatpush1.msra.mxu0 0.0
        %2476 = vmatprep.subr.mxu0 0.0
        %2477 = vmatpush1.msra.mxu0 0.0
        %2478 = vmatprep.subr.mxu0 0.0
        %2479 = vmatpush1.msra.mxu0 0.0
        %2480 = vmatprep.subr.mxu0 0.0
        %2481 = vmatpush1.msra.mxu0 0.0
        %2482 = vmatprep.subr.mxu0 0.0
        %2483 = vmatpush1.msra.mxu0 0.0
        %2484 = vmatprep.subr.mxu0 0.0
        %2485 = vmatpush1.msra.mxu0 0.0
        %2486 = vmatprep.subr.mxu0 0.0
        %2487 = vmatpush1.msra.mxu0 0.0
        %2488 = vmatprep.subr.mxu0 0.0
        %2489 = vmatpush1.msra.mxu0 0.0
        %2490 = vmatprep.subr.mxu0 0.0
        %2491 = vmatpush1.msra.mxu0 0.0
        %2492 = vmatprep.subr.mxu0 0.0
        %2493 = vmatpush1.msra.mxu0 0.0
        %2494 = vmatprep.subr.mxu0 0.0
        %2495 = vmatpush1.msra.mxu0 0.0
        %2496 = vmatprep.subr.mxu0 0.0
        %2497 = vmatpush1.msra.mxu0 0.0
        %2498 = vmatprep.subr.mxu0 0.0
        %2499 = vmatpush1.msra.mxu0 0.0
        %2500 = vmatprep.subr.mxu0 0.0
        %2501 = vmatpush1.msra.mxu0 0.0
        %2502 = vmatprep.subr.mxu0 0.0
        %2503 = vmatpush1.msra.mxu0 0.0
        %2504 = vmatprep.subr.mxu0 0.0
        %2505 = vmatpush1.msra.mxu0 0.0
        %2506 = vmatprep.subr.mxu0 0.0
        %2507 = vmatpush1.msra.mxu0 0.0
        %2508 = vmatprep.subr.mxu0 0.0
        %2509 = vmatpush1.msra.mxu0 0.0
        %2510 = vmatprep.subr.mxu0 0.0
        %2511 = vmatpush1.msra.mxu0 0.0
        %2512 = vmatprep.subr.mxu0 0.0
        %2513 = vmatpush1.msra.mxu0 0.0
        %2514 = vmatprep.subr.mxu0 0.0
        %2515 = vmatpush1.msra.mxu0 0.0
        %2516 = vmatprep.subr.mxu0 0.0
        %2517 = vmatpush1.msra.mxu0 0.0
        %2518 = vmatprep.subr.mxu0 0.0
        %2519 = vmatpush1.msra.mxu0 0.0
        %2520 = vmatprep.subr.mxu0 0.0
        %2521 = vmatpush1.msra.mxu0 0.0
        %2522 = vmatprep.subr.mxu0 0.0
        %2523 = vmatpush1.msra.mxu0 0.0
        %2524 = vmatprep.subr.mxu0 0.0
        %2525 = vmatpush1.msra.mxu0 0.0
        %2526 = vmatprep.subr.mxu0 0.0
        %2527 = vmatpush1.msra.mxu0 0.0
        %2528 = vmatprep.subr.mxu0 0.0
        %2529 = vmatpush1.msra.mxu0 0.0
        %2530 = vmatprep.subr.mxu0 0.0
        %2531 = vmatpush1.msra.mxu0 0.0
        %2532 = vmatprep.subr.mxu0 0.0
        %2533 = vmatpush1.msra.mxu0 0.0
        %2534 = vmatprep.subr.mxu0 0.0
        %2535 = vmatpush1.msra.mxu0 0.0
        %2536 = vmatprep.mubr.f32.mxu0 0.0
        %2537 = vmatmul.mubr.f32.gmra.mrb[0].mxu0 %v2470
        %v2538 = vpop.f32.mrb[0].mxu0
        %v2539 = vadd.f32 0.0, %v2538
        %v2540 = vpop.f32.mrb[0].mxu0
        %v2541 = vadd.f32 0.0, %v2540
        %2542 = vdwg.mxu0
        %2543 = vmatprep.subr.mxu0 0.0
        %2544 = vmatpush1.msra.mxu0 %v2465
        %2545 = vmatprep.subr.mxu0 0.0
        %2546 = vmatpush1.msra.mxu0 0.0
        %2547 = vmatprep.subr.mxu0 0.0
        %2548 = vmatpush1.msra.mxu0 0.0
        %2549 = vmatprep.subr.mxu0 0.0
        %2550 = vmatpush1.msra.mxu0 0.0
        %2551 = vmatprep.subr.mxu0 0.0
        %2552 = vmatpush1.msra.mxu0 0.0
        %2553 = vmatprep.subr.mxu0 0.0
        %2554 = vmatpush1.msra.mxu0 0.0
        %2555 = vmatprep.subr.mxu0 0.0
        %2556 = vmatpush1.msra.mxu0 0.0
        %2557 = vmatprep.subr.mxu0 0.0
        %2558 = vmatpush1.msra.mxu0 0.0
        %2559 = vmatprep.subr.mxu0 0.0
        %2560 = vmatpush1.msra.mxu0 0.0
        %2561 = vmatprep.subr.mxu0 0.0
        %2562 = vmatpush1.msra.mxu0 0.0
        %2563 = vmatprep.subr.mxu0 0.0
        %2564 = vmatpush1.msra.mxu0 0.0
        %2565 = vmatprep.subr.mxu0 0.0
        %2566 = vmatpush1.msra.mxu0 0.0
        %2567 = vmatprep.subr.mxu0 0.0
        %2568 = vmatpush1.msra.mxu0 0.0
        %2569 = vmatprep.subr.mxu0 0.0
        %2570 = vmatpush1.msra.mxu0 0.0
        %2571 = vmatprep.subr.mxu0 0.0
        %2572 = vmatpush1.msra.mxu0 0.0
        %2573 = vmatprep.subr.mxu0 0.0
        %2574 = vmatpush1.msra.mxu0 0.0
        %2575 = vmatprep.subr.mxu0 0.0
        %2576 = vmatpush1.msra.mxu0 0.0
        %2577 = vmatprep.subr.mxu0 0.0
        %2578 = vmatpush1.msra.mxu0 0.0
        %2579 = vmatprep.subr.mxu0 0.0
        %2580 = vmatpush1.msra.mxu0 0.0
        %2581 = vmatprep.subr.mxu0 0.0
        %2582 = vmatpush1.msra.mxu0 0.0
        %2583 = vmatprep.subr.mxu0 0.0
        %2584 = vmatpush1.msra.mxu0 0.0
        %2585 = vmatprep.subr.mxu0 0.0
        %2586 = vmatpush1.msra.mxu0 0.0
        %2587 = vmatprep.subr.mxu0 0.0
        %2588 = vmatpush1.msra.mxu0 0.0
        %2589 = vmatprep.subr.mxu0 0.0
        %2590 = vmatpush1.msra.mxu0 0.0
        %2591 = vmatprep.subr.mxu0 0.0
        %2592 = vmatpush1.msra.mxu0 0.0
        %2593 = vmatprep.subr.mxu0 0.0
        %2594 = vmatpush1.msra.mxu0 0.0
        %2595 = vmatprep.subr.mxu0 0.0
        %2596 = vmatpush1.msra.mxu0 0.0
        %2597 = vmatprep.subr.mxu0 0.0
        %2598 = vmatpush1.msra.mxu0 0.0
        %2599 = vmatprep.subr.mxu0 0.0
        %2600 = vmatpush1.msra.mxu0 0.0
        %2601 = vmatprep.subr.mxu0 0.0
        %2602 = vmatpush1.msra.mxu0 0.0
        %2603 = vmatprep.subr.mxu0 0.0
        %2604 = vmatpush1.msra.mxu0 0.0
        %2605 = vmatprep.subr.mxu0 0.0
        %2606 = vmatpush1.msra.mxu0 0.0
        %2607 = vmatprep.mubr.f32.mxu0 0.0
        %2608 = vmatmul.mubr.f32.gmra.mrb[0].mxu0 %v2470
        %v2609 = vpop.f32.mrb[0].mxu0
        %v2610 = vadd.f32 0.0, %v2609
        %v2611 = vpop.f32.mrb[0].mxu0
        %2612 = vdwg.mxu0
        %v2613 = vadd.f32 %v2450, %v2539
        %v2614 = vadd.f32 %v2451, %v2541
        %v2615 = vadd.f32 %v2452, %v2610
        %s2616 = scalar_lea.vmem %s4, 40
        %v2617 = vld [vmem:[%s2616] sm:$0xff]
        %2618 = vrot.lane.b32.xlu0 %v1817, 108
        %v2619 = vpop.permute.xlu0 %2618
        %2620 = vrot.lane.b32.xlu0 %v1818, 108
        %v2621 = vpop.permute.xlu0 %2620
        %2622 = vrot.lane.b32.xlu0 %v1819, 108
        %v2623 = vpop.permute.xlu0 %2622
        %2624 = vrot.lane.b32.xlu0 %v1820, 108
        %v2625 = vpop.permute.xlu0 %2624
        %v2626 = vsel %vm1099, %v2619, %v2621
        %v2627 = vsel %vm1099, %v2621, %v2623
        %v2628 = vsel %vm1099, %v2623, %v2625
        %v2633 = vsel %vm286, %v2617, 0
        %2635 = vmatprep.subr.mxu0 %v2627
        %2636 = vmatpush1.msra.mxu0 %v2626
        %2637 = vmatprep.subr.mxu0 0.0
        %2638 = vmatpush1.msra.mxu0 0.0
        %2639 = vmatprep.subr.mxu0 0.0
        %2640 = vmatpush1.msra.mxu0 0.0
        %2641 = vmatprep.subr.mxu0 0.0
        %2642 = vmatpush1.msra.mxu0 0.0
        %2643 = vmatprep.subr.mxu0 0.0
        %2644 = vmatpush1.msra.mxu0 0.0
        %2645 = vmatprep.subr.mxu0 0.0
        %2646 = vmatpush1.msra.mxu0 0.0
        %2647 = vmatprep.subr.mxu0 0.0
        %2648 = vmatpush1.msra.mxu0 0.0
        %2649 = vmatprep.subr.mxu0 0.0
        %2650 = vmatpush1.msra.mxu0 0.0
        %2651 = vmatprep.subr.mxu0 0.0
        %2652 = vmatpush1.msra.mxu0 0.0
        %2653 = vmatprep.subr.mxu0 0.0
        %2654 = vmatpush1.msra.mxu0 0.0
        %2655 = vmatprep.subr.mxu0 0.0
        %2656 = vmatpush1.msra.mxu0 0.0
        %2657 = vmatprep.subr.mxu0 0.0
        %2658 = vmatpush1.msra.mxu0 0.0
        %2659 = vmatprep.subr.mxu0 0.0
        %2660 = vmatpush1.msra.mxu0 0.0
        %2661 = vmatprep.subr.mxu0 0.0
        %2662 = vmatpush1.msra.mxu0 0.0
        %2663 = vmatprep.subr.mxu0 0.0
        %2664 = vmatpush1.msra.mxu0 0.0
        %2665 = vmatprep.subr.mxu0 0.0
        %2666 = vmatpush1.msra.mxu0 0.0
        %2667 = vmatprep.subr.mxu0 0.0
        %2668 = vmatpush1.msra.mxu0 0.0
        %2669 = vmatprep.subr.mxu0 0.0
        %2670 = vmatpush1.msra.mxu0 0.0
        %2671 = vmatprep.subr.mxu0 0.0
        %2672 = vmatpush1.msra.mxu0 0.0
        %2673 = vmatprep.subr.mxu0 0.0
        %2674 = vmatpush1.msra.mxu0 0.0
        %2675 = vmatprep.subr.mxu0 0.0
        %2676 = vmatpush1.msra.mxu0 0.0
        %2677 = vmatprep.subr.mxu0 0.0
        %2678 = vmatpush1.msra.mxu0 0.0
        %2679 = vmatprep.subr.mxu0 0.0
        %2680 = vmatpush1.msra.mxu0 0.0
        %2681 = vmatprep.subr.mxu0 0.0
        %2682 = vmatpush1.msra.mxu0 0.0
        %2683 = vmatprep.subr.mxu0 0.0
        %2684 = vmatpush1.msra.mxu0 0.0
        %2685 = vmatprep.subr.mxu0 0.0
        %2686 = vmatpush1.msra.mxu0 0.0
        %2687 = vmatprep.subr.mxu0 0.0
        %2688 = vmatpush1.msra.mxu0 0.0
        %2689 = vmatprep.subr.mxu0 0.0
        %2690 = vmatpush1.msra.mxu0 0.0
        %2691 = vmatprep.subr.mxu0 0.0
        %2692 = vmatpush1.msra.mxu0 0.0
        %2693 = vmatprep.subr.mxu0 0.0
        %2694 = vmatpush1.msra.mxu0 0.0
        %2695 = vmatprep.subr.mxu0 0.0
        %2696 = vmatpush1.msra.mxu0 0.0
        %2697 = vmatprep.subr.mxu0 0.0
        %2698 = vmatpush1.msra.mxu0 0.0
        %2699 = vmatprep.mubr.f32.mxu0 0.0
        %2700 = vmatmul.mubr.f32.gmra.mrb[0].mxu0 %v2633
        %v2701 = vpop.f32.mrb[0].mxu0
        %v2702 = vadd.f32 0.0, %v2701
        %v2703 = vpop.f32.mrb[0].mxu0
        %v2704 = vadd.f32 0.0, %v2703
        %2705 = vdwg.mxu0
        %2706 = vmatprep.subr.mxu0 0.0
        %2707 = vmatpush1.msra.mxu0 %v2628
        %2708 = vmatprep.subr.mxu0 0.0
        %2709 = vmatpush1.msra.mxu0 0.0
        %2710 = vmatprep.subr.mxu0 0.0
        %2711 = vmatpush1.msra.mxu0 0.0
        %2712 = vmatprep.subr.mxu0 0.0
        %2713 = vmatpush1.msra.mxu0 0.0
        %2714 = vmatprep.subr.mxu0 0.0
        %2715 = vmatpush1.msra.mxu0 0.0
        %2716 = vmatprep.subr.mxu0 0.0
        %2717 = vmatpush1.msra.mxu0 0.0
        %2718 = vmatprep.subr.mxu0 0.0
        %2719 = vmatpush1.msra.mxu0 0.0
        %2720 = vmatprep.subr.mxu0 0.0
        %2721 = vmatpush1.msra.mxu0 0.0
        %2722 = vmatprep.subr.mxu0 0.0
        %2723 = vmatpush1.msra.mxu0 0.0
        %2724 = vmatprep.subr.mxu0 0.0
        %2725 = vmatpush1.msra.mxu0 0.0
        %2726 = vmatprep.subr.mxu0 0.0
        %2727 = vmatpush1.msra.mxu0 0.0
        %2728 = vmatprep.subr.mxu0 0.0
        %2729 = vmatpush1.msra.mxu0 0.0
        %2730 = vmatprep.subr.mxu0 0.0
        %2731 = vmatpush1.msra.mxu0 0.0
        %2732 = vmatprep.subr.mxu0 0.0
        %2733 = vmatpush1.msra.mxu0 0.0
        %2734 = vmatprep.subr.mxu0 0.0
        %2735 = vmatpush1.msra.mxu0 0.0
        %2736 = vmatprep.subr.mxu0 0.0
        %2737 = vmatpush1.msra.mxu0 0.0
        %2738 = vmatprep.subr.mxu0 0.0
        %2739 = vmatpush1.msra.mxu0 0.0
        %2740 = vmatprep.subr.mxu0 0.0
        %2741 = vmatpush1.msra.mxu0 0.0
        %2742 = vmatprep.subr.mxu0 0.0
        %2743 = vmatpush1.msra.mxu0 0.0
        %2744 = vmatprep.subr.mxu0 0.0
        %2745 = vmatpush1.msra.mxu0 0.0
        %2746 = vmatprep.subr.mxu0 0.0
        %2747 = vmatpush1.msra.mxu0 0.0
        %2748 = vmatprep.subr.mxu0 0.0
        %2749 = vmatpush1.msra.mxu0 0.0
        %2750 = vmatprep.subr.mxu0 0.0
        %2751 = vmatpush1.msra.mxu0 0.0
        %2752 = vmatprep.subr.mxu0 0.0
        %2753 = vmatpush1.msra.mxu0 0.0
        %2754 = vmatprep.subr.mxu0 0.0
        %2755 = vmatpush1.msra.mxu0 0.0
        %2756 = vmatprep.subr.mxu0 0.0
        %2757 = vmatpush1.msra.mxu0 0.0
        %2758 = vmatprep.subr.mxu0 0.0
        %2759 = vmatpush1.msra.mxu0 0.0
        %2760 = vmatprep.subr.mxu0 0.0
        %2761 = vmatpush1.msra.mxu0 0.0
        %2762 = vmatprep.subr.mxu0 0.0
        %2763 = vmatpush1.msra.mxu0 0.0
        %2764 = vmatprep.subr.mxu0 0.0
        %2765 = vmatpush1.msra.mxu0 0.0
        %2766 = vmatprep.subr.mxu0 0.0
        %2767 = vmatpush1.msra.mxu0 0.0
        %2768 = vmatprep.subr.mxu0 0.0
        %2769 = vmatpush1.msra.mxu0 0.0
        %2770 = vmatprep.mubr.f32.mxu0 0.0
        %2771 = vmatmul.mubr.f32.gmra.mrb[0].mxu0 %v2633
        %v2772 = vpop.f32.mrb[0].mxu0
        %v2773 = vadd.f32 0.0, %v2772
        %v2774 = vpop.f32.mrb[0].mxu0
        %2775 = vdwg.mxu0
        %v2776 = vadd.f32 %v2613, %v2702
        %v2777 = vadd.f32 %v2614, %v2704
        %v2778 = vadd.f32 %v2615, %v2773
        %s2779 = scalar_lea.vmem %s4, 48
        %v2780 = vld [vmem:[%s2779] sm:$0xff]
        %2781 = vrot.lane.b32.xlu0 %v1817, 92
        %v2782 = vpop.permute.xlu0 %2781
        %2783 = vrot.lane.b32.xlu0 %v1818, 92
        %v2784 = vpop.permute.xlu0 %2783
        %2785 = vrot.lane.b32.xlu0 %v1819, 92
        %v2786 = vpop.permute.xlu0 %2785
        %2787 = vrot.lane.b32.xlu0 %v1820, 92
        %v2788 = vpop.permute.xlu0 %2787
        %v2789 = vsel %vm1269, %v2782, %v2784
        %v2790 = vsel %vm1269, %v2784, %v2786
        %v2791 = vsel %vm1269, %v2786, %v2788
        %v2796 = vsel %vm286, %v2780, 0
        %2798 = vmatprep.subr.mxu0 %v2790
        %2799 = vmatpush1.msra.mxu0 %v2789
        %2800 = vmatprep.subr.mxu0 0.0
        %2801 = vmatpush1.msra.mxu0 0.0
        %2802 = vmatprep.subr.mxu0 0.0
        %2803 = vmatpush1.msra.mxu0 0.0
        %2804 = vmatprep.subr.mxu0 0.0
        %2805 = vmatpush1.msra.mxu0 0.0
        %2806 = vmatprep.subr.mxu0 0.0
        %2807 = vmatpush1.msra.mxu0 0.0
        %2808 = vmatprep.subr.mxu0 0.0
        %2809 = vmatpush1.msra.mxu0 0.0
        %2810 = vmatprep.subr.mxu0 0.0
        %2811 = vmatpush1.msra.mxu0 0.0
        %2812 = vmatprep.subr.mxu0 0.0
        %2813 = vmatpush1.msra.mxu0 0.0
        %2814 = vmatprep.subr.mxu0 0.0
        %2815 = vmatpush1.msra.mxu0 0.0
        %2816 = vmatprep.subr.mxu0 0.0
        %2817 = vmatpush1.msra.mxu0 0.0
        %2818 = vmatprep.subr.mxu0 0.0
        %2819 = vmatpush1.msra.mxu0 0.0
        %2820 = vmatprep.subr.mxu0 0.0
        %2821 = vmatpush1.msra.mxu0 0.0
        %2822 = vmatprep.subr.mxu0 0.0
        %2823 = vmatpush1.msra.mxu0 0.0
        %2824 = vmatprep.subr.mxu0 0.0
        %2825 = vmatpush1.msra.mxu0 0.0
        %2826 = vmatprep.subr.mxu0 0.0
        %2827 = vmatpush1.msra.mxu0 0.0
        %2828 = vmatprep.subr.mxu0 0.0
        %2829 = vmatpush1.msra.mxu0 0.0
        %2830 = vmatprep.subr.mxu0 0.0
        %2831 = vmatpush1.msra.mxu0 0.0
        %2832 = vmatprep.subr.mxu0 0.0
        %2833 = vmatpush1.msra.mxu0 0.0
        %2834 = vmatprep.subr.mxu0 0.0
        %2835 = vmatpush1.msra.mxu0 0.0
        %2836 = vmatprep.subr.mxu0 0.0
        %2837 = vmatpush1.msra.mxu0 0.0
        %2838 = vmatprep.subr.mxu0 0.0
        %2839 = vmatpush1.msra.mxu0 0.0
        %2840 = vmatprep.subr.mxu0 0.0
        %2841 = vmatpush1.msra.mxu0 0.0
        %2842 = vmatprep.subr.mxu0 0.0
        %2843 = vmatpush1.msra.mxu0 0.0
        %2844 = vmatprep.subr.mxu0 0.0
        %2845 = vmatpush1.msra.mxu0 0.0
        %2846 = vmatprep.subr.mxu0 0.0
        %2847 = vmatpush1.msra.mxu0 0.0
        %2848 = vmatprep.subr.mxu0 0.0
        %2849 = vmatpush1.msra.mxu0 0.0
        %2850 = vmatprep.subr.mxu0 0.0
        %2851 = vmatpush1.msra.mxu0 0.0
        %2852 = vmatprep.subr.mxu0 0.0
        %2853 = vmatpush1.msra.mxu0 0.0
        %2854 = vmatprep.subr.mxu0 0.0
        %2855 = vmatpush1.msra.mxu0 0.0
        %2856 = vmatprep.subr.mxu0 0.0
        %2857 = vmatpush1.msra.mxu0 0.0
        %2858 = vmatprep.subr.mxu0 0.0
        %2859 = vmatpush1.msra.mxu0 0.0
        %2860 = vmatprep.subr.mxu0 0.0
        %2861 = vmatpush1.msra.mxu0 0.0
        %2862 = vmatprep.mubr.f32.mxu0 0.0
        %2863 = vmatmul.mubr.f32.gmra.mrb[0].mxu0 %v2796
        %v2864 = vpop.f32.mrb[0].mxu0
        %v2865 = vadd.f32 0.0, %v2864
        %v2866 = vpop.f32.mrb[0].mxu0
        %v2867 = vadd.f32 0.0, %v2866
        %2868 = vdwg.mxu0
        %2869 = vmatprep.subr.mxu0 0.0
        %2870 = vmatpush1.msra.mxu0 %v2791
        %2871 = vmatprep.subr.mxu0 0.0
        %2872 = vmatpush1.msra.mxu0 0.0
        %2873 = vmatprep.subr.mxu0 0.0
        %2874 = vmatpush1.msra.mxu0 0.0
        %2875 = vmatprep.subr.mxu0 0.0
        %2876 = vmatpush1.msra.mxu0 0.0
        %2877 = vmatprep.subr.mxu0 0.0
        %2878 = vmatpush1.msra.mxu0 0.0
        %2879 = vmatprep.subr.mxu0 0.0
        %2880 = vmatpush1.msra.mxu0 0.0
        %2881 = vmatprep.subr.mxu0 0.0
        %2882 = vmatpush1.msra.mxu0 0.0
        %2883 = vmatprep.subr.mxu0 0.0
        %2884 = vmatpush1.msra.mxu0 0.0
        %2885 = vmatprep.subr.mxu0 0.0
        %2886 = vmatpush1.msra.mxu0 0.0
        %2887 = vmatprep.subr.mxu0 0.0
        %2888 = vmatpush1.msra.mxu0 0.0
        %2889 = vmatprep.subr.mxu0 0.0
        %2890 = vmatpush1.msra.mxu0 0.0
        %2891 = vmatprep.subr.mxu0 0.0
        %2892 = vmatpush1.msra.mxu0 0.0
        %2893 = vmatprep.subr.mxu0 0.0
        %2894 = vmatpush1.msra.mxu0 0.0
        %2895 = vmatprep.subr.mxu0 0.0
        %2896 = vmatpush1.msra.mxu0 0.0
        %2897 = vmatprep.subr.mxu0 0.0
        %2898 = vmatpush1.msra.mxu0 0.0
        %2899 = vmatprep.subr.mxu0 0.0
        %2900 = vmatpush1.msra.mxu0 0.0
        %2901 = vmatprep.subr.mxu0 0.0
        %2902 = vmatpush1.msra.mxu0 0.0
        %2903 = vmatprep.subr.mxu0 0.0
        %2904 = vmatpush1.msra.mxu0 0.0
        %2905 = vmatprep.subr.mxu0 0.0
        %2906 = vmatpush1.msra.mxu0 0.0
        %2907 = vmatprep.subr.mxu0 0.0
        %2908 = vmatpush1.msra.mxu0 0.0
        %2909 = vmatprep.subr.mxu0 0.0
        %2910 = vmatpush1.msra.mxu0 0.0
        %2911 = vmatprep.subr.mxu0 0.0
        %2912 = vmatpush1.msra.mxu0 0.0
        %2913 = vmatprep.subr.mxu0 0.0
        %2914 = vmatpush1.msra.mxu0 0.0
        %2915 = vmatprep.subr.mxu0 0.0
        %2916 = vmatpush1.msra.mxu0 0.0
        %2917 = vmatprep.subr.mxu0 0.0
        %2918 = vmatpush1.msra.mxu0 0.0
        %2919 = vmatprep.subr.mxu0 0.0
        %2920 = vmatpush1.msra.mxu0 0.0
        %2921 = vmatprep.subr.mxu0 0.0
        %2922 = vmatpush1.msra.mxu0 0.0
        %2923 = vmatprep.subr.mxu0 0.0
        %2924 = vmatpush1.msra.mxu0 0.0
        %2925 = vmatprep.subr.mxu0 0.0
        %2926 = vmatpush1.msra.mxu0 0.0
        %2927 = vmatprep.subr.mxu0 0.0
        %2928 = vmatpush1.msra.mxu0 0.0
        %2929 = vmatprep.subr.mxu0 0.0
        %2930 = vmatpush1.msra.mxu0 0.0
        %2931 = vmatprep.subr.mxu0 0.0
        %2932 = vmatpush1.msra.mxu0 0.0
        %2933 = vmatprep.mubr.f32.mxu0 0.0
        %2934 = vmatmul.mubr.f32.gmra.mrb[0].mxu0 %v2796
        %v2935 = vpop.f32.mrb[0].mxu0
        %v2936 = vadd.f32 0.0, %v2935
        %v2937 = vpop.f32.mrb[0].mxu0
        %2938 = vdwg.mxu0
        %v2939 = vadd.f32 %v2776, %v2865
        %v2940 = vadd.f32 %v2777, %v2867
        %v2941 = vadd.f32 %v2778, %v2936
        %s2942 = scalar_lea.vmem %s4, 56
        %v2943 = vld [vmem:[%s2942] sm:$0xff]
        %2944 = vrot.lane.b32.xlu0 %v1817, 91
        %v2945 = vpop.permute.xlu0 %2944
        %2946 = vrot.lane.b32.xlu0 %v1818, 91
        %v2947 = vpop.permute.xlu0 %2946
        %2948 = vrot.lane.b32.xlu0 %v1819, 91
        %v2949 = vpop.permute.xlu0 %2948
        %2950 = vrot.lane.b32.xlu0 %v1820, 91
        %v2951 = vpop.permute.xlu0 %2950
        %v2952 = vsel %vm1439, %v2945, %v2947
        %v2953 = vsel %vm1439, %v2947, %v2949
        %v2954 = vsel %vm1439, %v2949, %v2951
        %v2959 = vsel %vm286, %v2943, 0
        %2961 = vmatprep.subr.mxu0 %v2953
        %2962 = vmatpush1.msra.mxu0 %v2952
        %2963 = vmatprep.subr.mxu0 0.0
        %2964 = vmatpush1.msra.mxu0 0.0
        %2965 = vmatprep.subr.mxu0 0.0
        %2966 = vmatpush1.msra.mxu0 0.0
        %2967 = vmatprep.subr.mxu0 0.0
        %2968 = vmatpush1.msra.mxu0 0.0
        %2969 = vmatprep.subr.mxu0 0.0
        %2970 = vmatpush1.msra.mxu0 0.0
        %2971 = vmatprep.subr.mxu0 0.0
        %2972 = vmatpush1.msra.mxu0 0.0
        %2973 = vmatprep.subr.mxu0 0.0
        %2974 = vmatpush1.msra.mxu0 0.0
        %2975 = vmatprep.subr.mxu0 0.0
        %2976 = vmatpush1.msra.mxu0 0.0
        %2977 = vmatprep.subr.mxu0 0.0
        %2978 = vmatpush1.msra.mxu0 0.0
        %2979 = vmatprep.subr.mxu0 0.0
        %2980 = vmatpush1.msra.mxu0 0.0
        %2981 = vmatprep.subr.mxu0 0.0
        %2982 = vmatpush1.msra.mxu0 0.0
        %2983 = vmatprep.subr.mxu0 0.0
        %2984 = vmatpush1.msra.mxu0 0.0
        %2985 = vmatprep.subr.mxu0 0.0
        %2986 = vmatpush1.msra.mxu0 0.0
        %2987 = vmatprep.subr.mxu0 0.0
        %2988 = vmatpush1.msra.mxu0 0.0
        %2989 = vmatprep.subr.mxu0 0.0
        %2990 = vmatpush1.msra.mxu0 0.0
        %2991 = vmatprep.subr.mxu0 0.0
        %2992 = vmatpush1.msra.mxu0 0.0
        %2993 = vmatprep.subr.mxu0 0.0
        %2994 = vmatpush1.msra.mxu0 0.0
        %2995 = vmatprep.subr.mxu0 0.0
        %2996 = vmatpush1.msra.mxu0 0.0
        %2997 = vmatprep.subr.mxu0 0.0
        %2998 = vmatpush1.msra.mxu0 0.0
        %2999 = vmatprep.subr.mxu0 0.0
        %3000 = vmatpush1.msra.mxu0 0.0
        %3001 = vmatprep.subr.mxu0 0.0
        %3002 = vmatpush1.msra.mxu0 0.0
        %3003 = vmatprep.subr.mxu0 0.0
        %3004 = vmatpush1.msra.mxu0 0.0
        %3005 = vmatprep.subr.mxu0 0.0
        %3006 = vmatpush1.msra.mxu0 0.0
        %3007 = vmatprep.subr.mxu0 0.0
        %3008 = vmatpush1.msra.mxu0 0.0
        %3009 = vmatprep.subr.mxu0 0.0
        %3010 = vmatpush1.msra.mxu0 0.0
        %3011 = vmatprep.subr.mxu0 0.0
        %3012 = vmatpush1.msra.mxu0 0.0
        %3013 = vmatprep.subr.mxu0 0.0
        %3014 = vmatpush1.msra.mxu0 0.0
        %3015 = vmatprep.subr.mxu0 0.0
        %3016 = vmatpush1.msra.mxu0 0.0
        %3017 = vmatprep.subr.mxu0 0.0
        %3018 = vmatpush1.msra.mxu0 0.0
        %3019 = vmatprep.subr.mxu0 0.0
        %3020 = vmatpush1.msra.mxu0 0.0
        %3021 = vmatprep.subr.mxu0 0.0
        %3022 = vmatpush1.msra.mxu0 0.0
        %3023 = vmatprep.subr.mxu0 0.0
        %3024 = vmatpush1.msra.mxu0 0.0
        %3025 = vmatprep.mubr.f32.mxu0 0.0
        %3026 = vmatmul.mubr.f32.gmra.mrb[0].mxu0 %v2959
        %v3027 = vpop.f32.mrb[0].mxu0
        %v3028 = vadd.f32 0.0, %v3027
        %v3029 = vpop.f32.mrb[0].mxu0
        %v3030 = vadd.f32 0.0, %v3029
        %3031 = vdwg.mxu0
        %3032 = vmatprep.subr.mxu0 0.0
        %3033 = vmatpush1.msra.mxu0 %v2954
        %3034 = vmatprep.subr.mxu0 0.0
        %3035 = vmatpush1.msra.mxu0 0.0
        %3036 = vmatprep.subr.mxu0 0.0
        %3037 = vmatpush1.msra.mxu0 0.0
        %3038 = vmatprep.subr.mxu0 0.0
        %3039 = vmatpush1.msra.mxu0 0.0
        %3040 = vmatprep.subr.mxu0 0.0
        %3041 = vmatpush1.msra.mxu0 0.0
        %3042 = vmatprep.subr.mxu0 0.0
        %3043 = vmatpush1.msra.mxu0 0.0
        %3044 = vmatprep.subr.mxu0 0.0
        %3045 = vmatpush1.msra.mxu0 0.0
        %3046 = vmatprep.subr.mxu0 0.0
        %3047 = vmatpush1.msra.mxu0 0.0
        %3048 = vmatprep.subr.mxu0 0.0
        %3049 = vmatpush1.msra.mxu0 0.0
        %3050 = vmatprep.subr.mxu0 0.0
        %3051 = vmatpush1.msra.mxu0 0.0
        %3052 = vmatprep.subr.mxu0 0.0
        %3053 = vmatpush1.msra.mxu0 0.0
        %3054 = vmatprep.subr.mxu0 0.0
        %3055 = vmatpush1.msra.mxu0 0.0
        %3056 = vmatprep.subr.mxu0 0.0
        %3057 = vmatpush1.msra.mxu0 0.0
        %3058 = vmatprep.subr.mxu0 0.0
        %3059 = vmatpush1.msra.mxu0 0.0
        %3060 = vmatprep.subr.mxu0 0.0
        %3061 = vmatpush1.msra.mxu0 0.0
        %3062 = vmatprep.subr.mxu0 0.0
        %3063 = vmatpush1.msra.mxu0 0.0
        %3064 = vmatprep.subr.mxu0 0.0
        %3065 = vmatpush1.msra.mxu0 0.0
        %3066 = vmatprep.subr.mxu0 0.0
        %3067 = vmatpush1.msra.mxu0 0.0
        %3068 = vmatprep.subr.mxu0 0.0
        %3069 = vmatpush1.msra.mxu0 0.0
        %3070 = vmatprep.subr.mxu0 0.0
        %3071 = vmatpush1.msra.mxu0 0.0
        %3072 = vmatprep.subr.mxu0 0.0
        %3073 = vmatpush1.msra.mxu0 0.0
        %3074 = vmatprep.subr.mxu0 0.0
        %3075 = vmatpush1.msra.mxu0 0.0
        %3076 = vmatprep.subr.mxu0 0.0
        %3077 = vmatpush1.msra.mxu0 0.0
        %3078 = vmatprep.subr.mxu0 0.0
        %3079 = vmatpush1.msra.mxu0 0.0
        %3080 = vmatprep.subr.mxu0 0.0
        %3081 = vmatpush1.msra.mxu0 0.0
        %3082 = vmatprep.subr.mxu0 0.0
        %3083 = vmatpush1.msra.mxu0 0.0
        %3084 = vmatprep.subr.mxu0 0.0
        %3085 = vmatpush1.msra.mxu0 0.0
        %3086 = vmatprep.subr.mxu0 0.0
        %3087 = vmatpush1.msra.mxu0 0.0
        %3088 = vmatprep.subr.mxu0 0.0
        %3089 = vmatpush1.msra.mxu0 0.0
        %3090 = vmatprep.subr.mxu0 0.0
        %3091 = vmatpush1.msra.mxu0 0.0
        %3092 = vmatprep.subr.mxu0 0.0
        %3093 = vmatpush1.msra.mxu0 0.0
        %3094 = vmatprep.subr.mxu0 0.0
        %3095 = vmatpush1.msra.mxu0 0.0
        %3096 = vmatprep.mubr.f32.mxu0 0.0
        %3097 = vmatmul.mubr.f32.gmra.mrb[0].mxu0 %v2959
        %v3098 = vpop.f32.mrb[0].mxu0
        %v3099 = vadd.f32 0.0, %v3098
        %v3100 = vpop.f32.mrb[0].mxu0
        %3101 = vdwg.mxu0
        %v3102 = vadd.f32 %v2939, %v3028
        %v3103 = vadd.f32 %v2940, %v3030
        %v3104 = vadd.f32 %v2941, %v3099
        %s3105 = scalar_lea.vmem %s4, 64
        %v3106 = vld [vmem:[%s3105] sm:$0xff]
        %3107 = vrot.lane.b32.xlu0 %v1817, 90
        %v3108 = vpop.permute.xlu0 %3107
        %3109 = vrot.lane.b32.xlu0 %v1818, 90
        %v3110 = vpop.permute.xlu0 %3109
        %3111 = vrot.lane.b32.xlu0 %v1819, 90
        %v3112 = vpop.permute.xlu0 %3111
        %3113 = vrot.lane.b32.xlu0 %v1820, 90
        %v3114 = vpop.permute.xlu0 %3113
        %v3115 = vsel %vm1609, %v3108, %v3110
        %v3116 = vsel %vm1609, %v3110, %v3112
        %v3117 = vsel %vm1609, %v3112, %v3114
        %v3122 = vsel %vm286, %v3106, 0
        %3124 = vmatprep.subr.mxu0 %v3116
        %3125 = vmatpush1.msra.mxu0 %v3115
        %3126 = vmatprep.subr.mxu0 0.0
        %3127 = vmatpush1.msra.mxu0 0.0
        %3128 = vmatprep.subr.mxu0 0.0
        %3129 = vmatpush1.msra.mxu0 0.0
        %3130 = vmatprep.subr.mxu0 0.0
        %3131 = vmatpush1.msra.mxu0 0.0
        %3132 = vmatprep.subr.mxu0 0.0
        %3133 = vmatpush1.msra.mxu0 0.0
        %3134 = vmatprep.subr.mxu0 0.0
        %3135 = vmatpush1.msra.mxu0 0.0
        %3136 = vmatprep.subr.mxu0 0.0
        %3137 = vmatpush1.msra.mxu0 0.0
        %3138 = vmatprep.subr.mxu0 0.0
        %3139 = vmatpush1.msra.mxu0 0.0
        %3140 = vmatprep.subr.mxu0 0.0
        %3141 = vmatpush1.msra.mxu0 0.0
        %3142 = vmatprep.subr.mxu0 0.0
        %3143 = vmatpush1.msra.mxu0 0.0
        %3144 = vmatprep.subr.mxu0 0.0
        %3145 = vmatpush1.msra.mxu0 0.0
        %3146 = vmatprep.subr.mxu0 0.0
        %3147 = vmatpush1.msra.mxu0 0.0
        %3148 = vmatprep.subr.mxu0 0.0
        %3149 = vmatpush1.msra.mxu0 0.0
        %3150 = vmatprep.subr.mxu0 0.0
        %3151 = vmatpush1.msra.mxu0 0.0
        %3152 = vmatprep.subr.mxu0 0.0
        %3153 = vmatpush1.msra.mxu0 0.0
        %3154 = vmatprep.subr.mxu0 0.0
        %3155 = vmatpush1.msra.mxu0 0.0
        %3156 = vmatprep.subr.mxu0 0.0
        %3157 = vmatpush1.msra.mxu0 0.0
        %3158 = vmatprep.subr.mxu0 0.0
        %3159 = vmatpush1.msra.mxu0 0.0
        %3160 = vmatprep.subr.mxu0 0.0
        %3161 = vmatpush1.msra.mxu0 0.0
        %3162 = vmatprep.subr.mxu0 0.0
        %3163 = vmatpush1.msra.mxu0 0.0
        %3164 = vmatprep.subr.mxu0 0.0
        %3165 = vmatpush1.msra.mxu0 0.0
        %3166 = vmatprep.subr.mxu0 0.0
        %3167 = vmatpush1.msra.mxu0 0.0
        %3168 = vmatprep.subr.mxu0 0.0
        %3169 = vmatpush1.msra.mxu0 0.0
        %3170 = vmatprep.subr.mxu0 0.0
        %3171 = vmatpush1.msra.mxu0 0.0
        %3172 = vmatprep.subr.mxu0 0.0
        %3173 = vmatpush1.msra.mxu0 0.0
        %3174 = vmatprep.subr.mxu0 0.0
        %3175 = vmatpush1.msra.mxu0 0.0
        %3176 = vmatprep.subr.mxu0 0.0
        %3177 = vmatpush1.msra.mxu0 0.0
        %3178 = vmatprep.subr.mxu0 0.0
        %3179 = vmatpush1.msra.mxu0 0.0
        %3180 = vmatprep.subr.mxu0 0.0
        %3181 = vmatpush1.msra.mxu0 0.0
        %3182 = vmatprep.subr.mxu0 0.0
        %3183 = vmatpush1.msra.mxu0 0.0
        %3184 = vmatprep.subr.mxu0 0.0
        %3185 = vmatpush1.msra.mxu0 0.0
        %3186 = vmatprep.subr.mxu0 0.0
        %3187 = vmatpush1.msra.mxu0 0.0
        %3188 = vmatprep.mubr.f32.mxu0 0.0
        %3189 = vmatmul.mubr.f32.gmra.mrb[0].mxu0 %v3122
        %v3190 = vpop.f32.mrb[0].mxu0
        %v3191 = vadd.f32 0.0, %v3190
        %v3192 = vpop.f32.mrb[0].mxu0
        %v3193 = vadd.f32 0.0, %v3192
        %3194 = vdwg.mxu0
        %3195 = vmatprep.subr.mxu0 0.0
        %3196 = vmatpush1.msra.mxu0 %v3117
        %3197 = vmatprep.subr.mxu0 0.0
        %3198 = vmatpush1.msra.mxu0 0.0
        %3199 = vmatprep.subr.mxu0 0.0
        %3200 = vmatpush1.msra.mxu0 0.0
        %3201 = vmatprep.subr.mxu0 0.0
        %3202 = vmatpush1.msra.mxu0 0.0
        %3203 = vmatprep.subr.mxu0 0.0
        %3204 = vmatpush1.msra.mxu0 0.0
        %3205 = vmatprep.subr.mxu0 0.0
        %3206 = vmatpush1.msra.mxu0 0.0
        %3207 = vmatprep.subr.mxu0 0.0
        %3208 = vmatpush1.msra.mxu0 0.0
        %3209 = vmatprep.subr.mxu0 0.0
        %3210 = vmatpush1.msra.mxu0 0.0
        %3211 = vmatprep.subr.mxu0 0.0
        %3212 = vmatpush1.msra.mxu0 0.0
        %3213 = vmatprep.subr.mxu0 0.0
        %3214 = vmatpush1.msra.mxu0 0.0
        %3215 = vmatprep.subr.mxu0 0.0
        %3216 = vmatpush1.msra.mxu0 0.0
        %3217 = vmatprep.subr.mxu0 0.0
        %3218 = vmatpush1.msra.mxu0 0.0
        %3219 = vmatprep.subr.mxu0 0.0
        %3220 = vmatpush1.msra.mxu0 0.0
        %3221 = vmatprep.subr.mxu0 0.0
        %3222 = vmatpush1.msra.mxu0 0.0
        %3223 = vmatprep.subr.mxu0 0.0
        %3224 = vmatpush1.msra.mxu0 0.0
        %3225 = vmatprep.subr.mxu0 0.0
        %3226 = vmatpush1.msra.mxu0 0.0
        %3227 = vmatprep.subr.mxu0 0.0
        %3228 = vmatpush1.msra.mxu0 0.0
        %3229 = vmatprep.subr.mxu0 0.0
        %3230 = vmatpush1.msra.mxu0 0.0
        %3231 = vmatprep.subr.mxu0 0.0
        %3232 = vmatpush1.msra.mxu0 0.0
        %3233 = vmatprep.subr.mxu0 0.0
        %3234 = vmatpush1.msra.mxu0 0.0
        %3235 = vmatprep.subr.mxu0 0.0
        %3236 = vmatpush1.msra.mxu0 0.0
        %3237 = vmatprep.subr.mxu0 0.0
        %3238 = vmatpush1.msra.mxu0 0.0
        %3239 = vmatprep.subr.mxu0 0.0
        %3240 = vmatpush1.msra.mxu0 0.0
        %3241 = vmatprep.subr.mxu0 0.0
        %3242 = vmatpush1.msra.mxu0 0.0
        %3243 = vmatprep.subr.mxu0 0.0
        %3244 = vmatpush1.msra.mxu0 0.0
        %3245 = vmatprep.subr.mxu0 0.0
        %3246 = vmatpush1.msra.mxu0 0.0
        %3247 = vmatprep.subr.mxu0 0.0
        %3248 = vmatpush1.msra.mxu0 0.0
        %3249 = vmatprep.subr.mxu0 0.0
        %3250 = vmatpush1.msra.mxu0 0.0
        %3251 = vmatprep.subr.mxu0 0.0
        %3252 = vmatpush1.msra.mxu0 0.0
        %3253 = vmatprep.subr.mxu0 0.0
        %3254 = vmatpush1.msra.mxu0 0.0
        %3255 = vmatprep.subr.mxu0 0.0
        %3256 = vmatpush1.msra.mxu0 0.0
        %3257 = vmatprep.subr.mxu0 0.0
        %3258 = vmatpush1.msra.mxu0 0.0
        %3259 = vmatprep.mubr.f32.mxu0 0.0
        %3260 = vmatmul.mubr.f32.gmra.mrb[0].mxu0 %v3122
        %v3261 = vpop.f32.mrb[0].mxu0
        %v3262 = vadd.f32 0.0, %v3261
        %v3263 = vpop.f32.mrb[0].mxu0
        %3264 = vdwg.mxu0
        %v3265 = vadd.f32 %v3102, %v3191
        %v3266 = vadd.f32 %v3103, %v3193
        %v3267 = vadd.f32 %v3104, %v3262
        %v3268 = vld [vmem:[%s5] sm:$0xff]
        %3270 = vset.pattern.permute.xlu0 0
        %3271 = vperm.xlu0 %3270, %v3268
        %v3272 = vpop.permute.xlu0 %3271
        %v3274 = vadd.f32 %v3265, %v3272
        %v3275 = vadd.f32 %v3266, %v3272
        %v3276 = vadd.f32 %v3267, %v3272
        %v3277 = vmax.f32 %v3274, 0.0
        %v3278 = vmax.f32 %v3275, 0.0
        %v3279 = vmax.f32 %v3276, 0.0
        %3280 = vst [vmem:[%s244] sm:$0xff] %v3277
        %3281 = vst [vmem:[%s244 + $0x8] sm:$0xff] %v3278
        %3282 = vst [vmem:[%s244 + $0x10] sm:$0xff] %v3279
        %s3283 = sand.u32 %s159, 1
        %s3284 = scalar_lea.sflag [#allocation4], %s3283
        %s3285 = sand.u32 %s159, 1
        %s3286 = smul.addr %s3285, 24
        %s3287 = scalar_lea.vmem [#allocation3], %s3286
        // Predicated region
        $region45: #{tpu_custom_call.1} parent=43 // pred_check
          %p3288 = pneg %p169
        $region46: #{tpu_custom_call.1} parent=43 // pred_check_branch
          %3290 = sbr.rel (%p3288) target = $region48
        $region47: #{tpu_custom_call.1} parent=43 // pred_region
          %s3292 = ssub.s32 384, 384
          %3293 = vsyncadd %s3284, %s3292
          %s3294 = smul.addr %s20, 3
          %s3295 = smul.addr %s3294, 128
          %s3296 = scalar_lea.hbm %s6, %s3295
          %s3298 = sshll.u32 %s3287, 4
          %s3299 = int_to_ptr.vmem [resolvable:$true] %s3298
          %3301 = dma.vmem_to_hbm [thread:$0]  %s3299, 384, %s3296, %s3284
        $region48: #{tpu_custom_call.1} parent=43 // pred_fallthru
          _
      $region44: #{tpu_custom_call.1} parent=5 // pred_fallthru
        _
      %p3302 = scmp.le.s32.totalorder 2, %s15
      // Predicated region
      $region49: #{tpu_custom_call.1} parent=5 // pred_check
        %p3303 = pneg %p3302
      $region50: #{tpu_custom_call.1} parent=5 // pred_check_branch
        %3305 = sbr.rel (%p3303) target = $region52
      $region51: #{tpu_custom_call.1} parent=5 // pred_region
        %s3306 = ssub.s32 %s15, 2
        // Predicated region
        $region53: #{tpu_custom_call.1} parent=51 // pred_check
          %p3307 = pneg %p175
        $region54: #{tpu_custom_call.1} parent=51 // pred_check_branch
          %3309 = sbr.rel (%p3307) target = $region56
        $region55: #{tpu_custom_call.1} parent=51 // pred_region
          %s3310 = sand.u32 %s160, 1
          %s3311 = scalar_lea.sflag [#allocation4], %s3310
          %s3312 = sand.u32 %s160, 1
          %s3313 = smul.addr %s3312, 24
          %s3314 = scalar_lea.vmem [#allocation3], %s3313
          %3315 = dma.done %s3311, 384
        $region56: #{tpu_custom_call.1} parent=51 // pred_fallthru
          _
      $region52: #{tpu_custom_call.1} parent=5 // pred_fallthru
        _
    $region6: #{tpu_custom_call.1} parent=1 // loop_footer
      %s19 = sadd.s32 1, %s15
    $region7: #{tpu_custom_call.1} parent=1 // loop_footer_branch
      %14 = sbr.rel target = $region3
    $region8: #{tpu_custom_call.1} parent=1 // loop_exit
      _
    %3316 = vsyncpa [#allocation4], 1
    %s3317 = scalar_lea.sflag [#allocation4], 1
    %3318 = vsyncpa %s3317, 1

</llo_original>
